<compile_context>
chip_gen: v5e
topology: v5e:2x2
jax: 0.10.0
libtpu: 0.0.40
codegen_flags: <defaults>
</compile_context>

<pallas_src>
import functools

import jax
import jax.numpy as jnp
from jax import lax
from jax.experimental import pallas as pl
from jax.experimental.pallas import tpu as pltpu


def _round_up(v, m):
    return (v + m - 1) // m * m


def _make_sig_kernel(T, win_size, C):
    """Fused window gather + depth-2 signature + linear, batch on lanes.

    Refs:
      x_ref  : [T_halo, D, block_r]  replication-padded input; row C (the last
               channel row) is zero and reserved for the time channel.
      w1_ref : [O, D]      level-1 signature weights (transposed).
      w2_ref : [D, O, D]   level-2 weights; w2_ref[a] multiplies s2[a].
      b_ref  : [O, 1]      bias.
      o_ref  : [t_block, O, block_r] output features.
    """
    D = C + 1
    W = win_size
    tvals = [k / (W - 1) for k in range(W)]          # signatory time channel 0..1

    def kernel(x_ref, w1_ref, w2_ref, b_ref, o_ref):
        t_block, _, br = o_ref.shape
        f32 = jnp.float32

        row_ids = lax.broadcasted_iota(jnp.int32, (D, 1), 0)
        time_row = (row_ids == C).astype(f32)                      # [D, 1]
        chan_rows = [(row_ids == a).astype(f32) for a in range(C)]  # one-hots

        base = pl.program_id(1) * t_block
        for lt in range(t_block):
            # clamp: padded tail t positions recompute t = T-1 (sliced off later)
            t = jnp.minimum(base + lt, T - 1)

            prev = jnp.zeros((D, br), f32)
            prev_tv = 0.0
            s2 = [jnp.zeros((D, br), f32) for _ in range(D)]
            for k in range(W):
                tv = tvals[k]
                cur = x_ref[t + k].astype(f32)                     # [D, br]
                if tv != 0.0:
                    cur = cur + tv * time_row                      # add time channel
                inc = cur - prev                                   # zero basepoint
                mid = 0.5 * (cur + prev)
                # depth-2 accumulation, everything kept 2-D:
                #   s2[a] += mid[a] (row-broadcast via one-hot reduce) * inc
                for a in range(C):
                    mid_a = jnp.sum(mid * chan_rows[a], axis=0, keepdims=True)
                    s2[a] = s2[a] + mid_a * inc
                mid_tv = 0.5 * (tv + prev_tv)     # time row of mid is a constant
                if mid_tv != 0.0:
                    s2[C] = s2[C] + mid_tv * inc
                prev = cur
                prev_tv = tv

            # linear layer: level-1 + level-2 as 1 + D lane-wide MXU pushes
            out = jnp.dot(w1_ref[...], prev, preferred_element_type=jnp.float32)
            for a in range(D):
                out = out + jnp.dot(w2_ref[a], s2[a],
                                    preferred_element_type=jnp.float32)
            out = out + b_ref[...]
            o_ref[lt] = out.astype(o_ref.dtype)

    return kernel


def sig_features_pallas(xt, w1_t, w2_t, bias_col, *, T, win_size, t_block, block_r):
    """xt: [T_halo, D, R_pad] -> features [T_out, O, R_pad] (T_out >= T)."""
    T_halo, D, R_pad = xt.shape
    O = w1_t.shape[0]
    n_rb = R_pad // block_r
    n_tb = -(-T // t_block)
    T_out = n_tb * t_block
    kernel = _make_sig_kernel(T, win_size, D - 1)
    return pl.pallas_call(
        kernel,
        out_shape=jax.ShapeDtypeStruct((T_out, O, R_pad), jnp.float32),
        grid_spec=pltpu.PrefetchScalarGridSpec(
            num_scalar_prefetch=0,
            grid=(n_rb, n_tb),
            in_specs=[
                # x halo slab: resident across the (inner) t-block axis
                pl.BlockSpec((T_halo, D, block_r), lambda ri, ti: (0, 0, ri)),
                pl.BlockSpec((O, D), lambda ri, ti: (0, 0)),
                pl.BlockSpec((D, O, D), lambda ri, ti: (0, 0, 0)),
                pl.BlockSpec((O, 1), lambda ri, ti: (0, 0)),
            ],
            out_specs=pl.BlockSpec((t_block, O, block_r),
                                   lambda ri, ti: (ti, 0, ri)),
        ),
        compiler_params=pltpu.CompilerParams(
            dimension_semantics=("parallel", "parallel"),
            vmem_limit_bytes=32 * 1024 * 1024,
        ),
    )(xt, w1_t, w2_t, bias_col)


@functools.partial(jax.jit, static_argnames=("win_size",))
def sig_module_forward(x, w1_t, w2_t, bias_col, *, win_size):
    N, C, J, T = x.shape
    D = C + 1
    O = w1_t.shape[0]
    dt = (win_size - 1) // 2
    T_halo = T + 2 * dt

    # replication pad along T, transpose ONCE to the lane-friendly [T_halo, C, R]
    x_pad = jnp.pad(x, ((0, 0), (0, 0), (0, 0), (dt, dt)), mode="edge")
    xt = x_pad.transpose(3, 1, 0, 2).reshape(T_halo, C, N * J)

    R = N * J
    block_r = min(512, _round_up(R, 128))
    # explicit VMEM budget for the double-buffered x halo block (v7x: 64 MiB chip)
    budget = 12 * 1024 * 1024
    if 2 * T_halo * D * block_r * 4 > budget:
        block_r = max(128, (budget // (2 * T_halo * D * 4)) // 128 * 128)
    R_pad = _round_up(R, block_r)

    t_block = min(8, T)
    # give the grid >= 2 parallel steps when possible (v7x has 2 TensorCores)
    if (R_pad // block_r) * (-(-T // t_block)) < 2 and T >= 2:
        t_block = (T + 1) // 2

    # one zero channel row (time placeholder) + lane padding of the row axis
    xt = jnp.pad(xt, ((0, 0), (0, 1), (0, R_pad - R)))

    feat = sig_features_pallas(xt, w1_t, w2_t, bias_col,
                               T=T, win_size=win_size,
                               t_block=t_block, block_r=block_r)
    feat = feat[:T, :, :R].reshape(T, O, N, J)
    return feat.transpose(2, 1, 3, 0)                    # [N, O, J, T]


class SigModuleParallelPallas:
    """JAX/Pallas port of SigModuleParallel with use_bottleneck=False,
    specific_path=None, spatial_ps=False (=> include_time=True), sig_depth=2."""

    def __init__(self, in_channels, sig_in_channels, out_dimension, sig_depth,
                 win_size=5, key=None):
        assert win_size % 2 == 1
        # TODO(synk): general sig_depth via in-kernel Chen-identity recursion;
        #             depth 2 is implemented in closed form here.
        assert sig_depth == 2
        assert in_channels == sig_in_channels          # bottleneck path disabled
        self.in_channels = in_channels
        self.out_dimension = out_dimension
        self.sig_depth = sig_depth
        self.win_size = win_size
        self.delta_t = (win_size - 1) // 2
        d = sig_in_channels + 1                        # + time channel
        self.sig_dim = d
        sig_channels = d + d * d                       # signature_channels(d, 2)
        key = jax.random.PRNGKey(0) if key is None else key
        kw, kb = jax.random.split(key)
        bound = 1.0 / (sig_channels ** 0.5)
        # synthetic Linear params, stored as [sig_ch, O] (y @ W + b convention)
        self.w_full = jax.random.uniform(kw, (sig_channels, out_dimension),
                                         jnp.float32, -bound, bound)
        self.bias = jax.random.uniform(kb, (out_dimension,),
                                       jnp.float32, -bound, bound)
        # kernel-layout weights (batch-on-lanes => transposed [O, K] factors)
        self.w1_t = jnp.asarray(self.w_full[:d].T)                       # [O, d]
        self.w2_t = jnp.asarray(
            self.w_full[d:].reshape(d, d, out_dimension).transpose(0, 2, 1))  # [d, O, d]
        self.bias_col = self.bias[:, None]                               # [O, 1]

    def __call__(self, x):
        return sig_module_forward(x, self.w1_t, self.w2_t, self.bias_col,
                                  win_size=self.win_size)


def _reference(module, x):
    """Pure-JAX reference (independent signature formula) for validation."""
    n, c, jj, t = x.shape
    dt, w = module.delta_t, module.win_size
    d = c + 1
    x_pad = jnp.pad(x, ((0, 0), (0, 0), (0, 0), (dt, dt)), mode="edge")
    wins = jnp.stack([x_pad[..., k:k + t] for k in range(w)], axis=-1)  # [N,C,J,T,W]
    paths = wins.transpose(0, 2, 3, 4, 1).reshape(n * jj * t, w, c)
    time = jnp.broadcast_to(
        jnp.linspace(0.0, 1.0, w, dtype=jnp.float32)[None, :, None],
        (n * jj * t, w, 1))
    p = jnp.concatenate([paths, time], axis=-1)                         # [B, W, D]
    b = p.shape[0]
    prev = jnp.concatenate([jnp.zeros((b, 1, d), jnp.float32), p[:, :-1]], axis=1)
    v = p - prev                                   # increments (zero basepoint)
    s1 = v.sum(axis=1)
    csum_excl = jnp.cumsum(v, axis=1) - v
    s2 = jnp.einsum("bja,bjc->bac", csum_excl + 0.5 * v, v)
    sig = jnp.concatenate([s1, s2.reshape(b, d * d)], axis=-1)
    feat = sig @ module.w_full + module.bias[None, :]
    return feat.reshape(n, jj, t, module.out_dimension).transpose(0, 3, 1, 2)


if __name__ == "__main__":
    N, C, J, T = 2, 4, 4, 8
    out_dim, sig_depth, win = 8, 2, 5

    key = jax.random.PRNGKey(0)
    kx, kp = jax.random.split(key)
    x = jax.random.normal(kx, (N, C, J, T), jnp.float32)

    mod = SigModuleParallelPallas(C, C, out_dim, sig_depth, win_size=win, key=kp)
    out = jax.block_until_ready(mod(x))
    assert out.shape == (N, out_dim, J, T)

    ref = jax.block_until_ready(_reference(mod, x))
    if not jnp.allclose(out, ref, rtol=1e-2, atol=1e-2):
        raise AssertionError("pallas output mismatch vs reference")
    print("KERNEL_OK")
</pallas_src>

<mosaic_0001>
module attributes {stable_mosaic.version = 11 : i64} {
  func.func @kernel(%arg0: i32, %arg1: i32, %arg2: memref<12x5x128xf32, #tpu.memory_space<vmem>>, %arg3: memref<8x5xf32, #tpu.memory_space<vmem>>, %arg4: memref<5x8x5xf32, #tpu.memory_space<vmem>>, %arg5: memref<8x1xf32, #tpu.memory_space<vmem>>, %arg6: memref<4x8x128xf32, #tpu.memory_space<vmem>>) attributes {dimension_semantics = [#tpu.dimension_semantics<parallel>, #tpu.dimension_semantics<parallel>], iteration_bounds = array<i64: 1, 2>, scalar_prefetch = 0 : i64, scratch_operands = 0 : i64, tpu.core_type = #tpu.core_type<tc>, window_params = [{transform_indices = @transform_0, window_bounds = array<i64: 12, 5, 128>}, {pipeline_mode = #tpu.pipeline_mode<synchronous>, transform_indices = @transform_1, window_bounds = array<i64: 8, 5>}, {pipeline_mode = #tpu.pipeline_mode<synchronous>, transform_indices = @transform_2, window_bounds = array<i64: 5, 8, 5>}, {pipeline_mode = #tpu.pipeline_mode<synchronous>, transform_indices = @transform_3, window_bounds = array<i64: 8, 1>}, {transform_indices = @transform_4, window_bounds = array<i64: 4, 8, 128>}]} {
    %0 = tpu.iota {dimensions = array<i32: 0>} : vector<5x1xi32>
    %c4_i32 = arith.constant 4 : i32
    %1 = vector.broadcast %c4_i32 : i32 to vector<5x1xi32>
    %2 = arith.cmpi eq, %0, %1 : vector<5x1xi32>
    %3 = arith.extui %2 : vector<5x1xi1> to vector<5x1xi32>
    %4 = arith.sitofp %3 : vector<5x1xi32> to vector<5x1xf32>
    %c0_i32 = arith.constant 0 : i32
    %5 = vector.broadcast %c0_i32 : i32 to vector<5x1xi32>
    %6 = arith.cmpi eq, %0, %5 : vector<5x1xi32>
    %7 = arith.extui %6 : vector<5x1xi1> to vector<5x1xi32>
    %8 = arith.sitofp %7 : vector<5x1xi32> to vector<5x1xf32>
    %c1_i32 = arith.constant 1 : i32
    %9 = vector.broadcast %c1_i32 : i32 to vector<5x1xi32>
    %10 = arith.cmpi eq, %0, %9 : vector<5x1xi32>
    %11 = arith.extui %10 : vector<5x1xi1> to vector<5x1xi32>
    %12 = arith.sitofp %11 : vector<5x1xi32> to vector<5x1xf32>
    %c2_i32 = arith.constant 2 : i32
    %13 = vector.broadcast %c2_i32 : i32 to vector<5x1xi32>
    %14 = arith.cmpi eq, %0, %13 : vector<5x1xi32>
    %15 = arith.extui %14 : vector<5x1xi1> to vector<5x1xi32>
    %16 = arith.sitofp %15 : vector<5x1xi32> to vector<5x1xf32>
    %c3_i32 = arith.constant 3 : i32
    %17 = vector.broadcast %c3_i32 : i32 to vector<5x1xi32>
    %18 = arith.cmpi eq, %0, %17 : vector<5x1xi32>
    %19 = arith.extui %18 : vector<5x1xi1> to vector<5x1xi32>
    %20 = arith.sitofp %19 : vector<5x1xi32> to vector<5x1xf32>
    %c4_i32_0 = arith.constant 4 : i32
    %21 = arith.muli %arg1, %c4_i32_0 : i32
    %c0_i32_1 = arith.constant 0 : i32
    %22 = arith.addi %21, %c0_i32_1 : i32
    %c7_i32 = arith.constant 7 : i32
    %23 = arith.minsi %22, %c7_i32 : i32
    %cst = arith.constant 0.000000e+00 : f32
    %24 = vector.broadcast %cst : f32 to vector<5x128xf32>
    %cst_2 = arith.constant 0.000000e+00 : f32
    %25 = vector.broadcast %cst_2 : f32 to vector<5x128xf32>
    %cst_3 = arith.constant 0.000000e+00 : f32
    %26 = vector.broadcast %cst_3 : f32 to vector<5x128xf32>
    %cst_4 = arith.constant 0.000000e+00 : f32
    %27 = vector.broadcast %cst_4 : f32 to vector<5x128xf32>
    %cst_5 = arith.constant 0.000000e+00 : f32
    %28 = vector.broadcast %cst_5 : f32 to vector<5x128xf32>
    %cst_6 = arith.constant 0.000000e+00 : f32
    %29 = vector.broadcast %cst_6 : f32 to vector<5x128xf32>
    %c0_i32_7 = arith.constant 0 : i32
    %30 = arith.addi %23, %c0_i32_7 : i32
    %31 = arith.index_cast %30 : i32 to index
    %c0 = arith.constant 0 : index
    %c0_8 = arith.constant 0 : index
    %32 = vector.load %arg2[%31, %c0, %c0_8] : memref<12x5x128xf32, #tpu.memory_space<vmem>>, vector<1x5x128xf32>
    %33 = vector.shape_cast %32 : vector<1x5x128xf32> to vector<5x128xf32>
    %34 = arith.subf %33, %24 : vector<5x128xf32>
    %35 = arith.addf %33, %24 : vector<5x128xf32>
    %cst_9 = arith.constant 5.000000e-01 : f32
    %36 = vector.broadcast %cst_9 : f32 to vector<5x128xf32>
    %37 = arith.mulf %36, %35 : vector<5x128xf32>
    %38 = vector.broadcast %8 : vector<5x1xf32> to vector<5x128xf32>
    %39 = arith.mulf %37, %38 : vector<5x128xf32>
    %cst_10 = arith.constant dense<0.000000e+00> : vector<128xf32>
    %40 = vector.multi_reduction <add>, %39, %cst_10 [0] : vector<5x128xf32> to vector<128xf32>
    %41 = vector.shape_cast %40 : vector<128xf32> to vector<1x128xf32>
    %42 = vector.broadcast %41 : vector<1x128xf32> to vector<5x128xf32>
    %43 = arith.mulf %42, %34 : vector<5x128xf32>
    %44 = arith.addf %25, %43 : vector<5x128xf32>
    %45 = vector.broadcast %12 : vector<5x1xf32> to vector<5x128xf32>
    %46 = arith.mulf %37, %45 : vector<5x128xf32>
    %cst_11 = arith.constant dense<0.000000e+00> : vector<128xf32>
    %47 = vector.multi_reduction <add>, %46, %cst_11 [0] : vector<5x128xf32> to vector<128xf32>
    %48 = vector.shape_cast %47 : vector<128xf32> to vector<1x128xf32>
    %49 = vector.broadcast %48 : vector<1x128xf32> to vector<5x128xf32>
    %50 = arith.mulf %49, %34 : vector<5x128xf32>
    %51 = arith.addf %26, %50 : vector<5x128xf32>
    %52 = vector.broadcast %16 : vector<5x1xf32> to vector<5x128xf32>
    %53 = arith.mulf %37, %52 : vector<5x128xf32>
    %cst_12 = arith.constant dense<0.000000e+00> : vector<128xf32>
    %54 = vector.multi_reduction <add>, %53, %cst_12 [0] : vector<5x128xf32> to vector<128xf32>
    %55 = vector.shape_cast %54 : vector<128xf32> to vector<1x128xf32>
    %56 = vector.broadcast %55 : vector<1x128xf32> to vector<5x128xf32>
    %57 = arith.mulf %56, %34 : vector<5x128xf32>
    %58 = arith.addf %27, %57 : vector<5x128xf32>
    %59 = vector.broadcast %20 : vector<5x1xf32> to vector<5x128xf32>
    %60 = arith.mulf %37, %59 : vector<5x128xf32>
    %cst_13 = arith.constant dense<0.000000e+00> : vector<128xf32>
    %61 = vector.multi_reduction <add>, %60, %cst_13 [0] : vector<5x128xf32> to vector<128xf32>
    %62 = vector.shape_cast %61 : vector<128xf32> to vector<1x128xf32>
    %63 = vector.broadcast %62 : vector<1x128xf32> to vector<5x128xf32>
    %64 = arith.mulf %63, %34 : vector<5x128xf32>
    %65 = arith.addf %28, %64 : vector<5x128xf32>
    %c1_i32_14 = arith.constant 1 : i32
    %66 = arith.addi %23, %c1_i32_14 : i32
    %67 = arith.index_cast %66 : i32 to index
    %c0_15 = arith.constant 0 : index
    %c0_16 = arith.constant 0 : index
    %68 = vector.load %arg2[%67, %c0_15, %c0_16] : memref<12x5x128xf32, #tpu.memory_space<vmem>>, vector<1x5x128xf32>
    %69 = vector.shape_cast %68 : vector<1x5x128xf32> to vector<5x128xf32>
    %cst_17 = arith.constant 2.500000e-01 : f32
    %70 = vector.broadcast %cst_17 : f32 to vector<5x1xf32>
    %71 = arith.mulf %70, %4 : vector<5x1xf32>
    %72 = vector.broadcast %71 : vector<5x1xf32> to vector<5x128xf32>
    %73 = arith.addf %69, %72 : vector<5x128xf32>
    %74 = arith.subf %73, %33 : vector<5x128xf32>
    %75 = arith.addf %73, %33 : vector<5x128xf32>
    %cst_18 = arith.constant 5.000000e-01 : f32
    %76 = vector.broadcast %cst_18 : f32 to vector<5x128xf32>
    %77 = arith.mulf %76, %75 : vector<5x128xf32>
    %78 = vector.broadcast %8 : vector<5x1xf32> to vector<5x128xf32>
    %79 = arith.mulf %77, %78 : vector<5x128xf32>
    %cst_19 = arith.constant dense<0.000000e+00> : vector<128xf32>
    %80 = vector.multi_reduction <add>, %79, %cst_19 [0] : vector<5x128xf32> to vector<128xf32>
    %81 = vector.shape_cast %80 : vector<128xf32> to vector<1x128xf32>
    %82 = vector.broadcast %81 : vector<1x128xf32> to vector<5x128xf32>
    %83 = arith.mulf %82, %74 : vector<5x128xf32>
    %84 = arith.addf %44, %83 : vector<5x128xf32>
    %85 = vector.broadcast %12 : vector<5x1xf32> to vector<5x128xf32>
    %86 = arith.mulf %77, %85 : vector<5x128xf32>
    %cst_20 = arith.constant dense<0.000000e+00> : vector<128xf32>
    %87 = vector.multi_reduction <add>, %86, %cst_20 [0] : vector<5x128xf32> to vector<128xf32>
    %88 = vector.shape_cast %87 : vector<128xf32> to vector<1x128xf32>
    %89 = vector.broadcast %88 : vector<1x128xf32> to vector<5x128xf32>
    %90 = arith.mulf %89, %74 : vector<5x128xf32>
    %91 = arith.addf %51, %90 : vector<5x128xf32>
    %92 = vector.broadcast %16 : vector<5x1xf32> to vector<5x128xf32>
    %93 = arith.mulf %77, %92 : vector<5x128xf32>
    %cst_21 = arith.constant dense<0.000000e+00> : vector<128xf32>
    %94 = vector.multi_reduction <add>, %93, %cst_21 [0] : vector<5x128xf32> to vector<128xf32>
    %95 = vector.shape_cast %94 : vector<128xf32> to vector<1x128xf32>
    %96 = vector.broadcast %95 : vector<1x128xf32> to vector<5x128xf32>
    %97 = arith.mulf %96, %74 : vector<5x128xf32>
    %98 = arith.addf %58, %97 : vector<5x128xf32>
    %99 = vector.broadcast %20 : vector<5x1xf32> to vector<5x128xf32>
    %100 = arith.mulf %77, %99 : vector<5x128xf32>
    %cst_22 = arith.constant dense<0.000000e+00> : vector<128xf32>
    %101 = vector.multi_reduction <add>, %100, %cst_22 [0] : vector<5x128xf32> to vector<128xf32>
    %102 = vector.shape_cast %101 : vector<128xf32> to vector<1x128xf32>
    %103 = vector.broadcast %102 : vector<1x128xf32> to vector<5x128xf32>
    %104 = arith.mulf %103, %74 : vector<5x128xf32>
    %105 = arith.addf %65, %104 : vector<5x128xf32>
    %cst_23 = arith.constant 1.250000e-01 : f32
    %106 = vector.broadcast %cst_23 : f32 to vector<5x128xf32>
    %107 = arith.mulf %106, %74 : vector<5x128xf32>
    %108 = arith.addf %29, %107 : vector<5x128xf32>
    %c2_i32_24 = arith.constant 2 : i32
    %109 = arith.addi %23, %c2_i32_24 : i32
    %110 = arith.index_cast %109 : i32 to index
    %c0_25 = arith.constant 0 : index
    %c0_26 = arith.constant 0 : index
    %111 = vector.load %arg2[%110, %c0_25, %c0_26] : memref<12x5x128xf32, #tpu.memory_space<vmem>>, vector<1x5x128xf32>
    %112 = vector.shape_cast %111 : vector<1x5x128xf32> to vector<5x128xf32>
    %cst_27 = arith.constant 5.000000e-01 : f32
    %113 = vector.broadcast %cst_27 : f32 to vector<5x1xf32>
    %114 = arith.mulf %113, %4 : vector<5x1xf32>
    %115 = vector.broadcast %114 : vector<5x1xf32> to vector<5x128xf32>
    %116 = arith.addf %112, %115 : vector<5x128xf32>
    %117 = arith.subf %116, %73 : vector<5x128xf32>
    %118 = arith.addf %116, %73 : vector<5x128xf32>
    %cst_28 = arith.constant 5.000000e-01 : f32
    %119 = vector.broadcast %cst_28 : f32 to vector<5x128xf32>
    %120 = arith.mulf %119, %118 : vector<5x128xf32>
    %121 = vector.broadcast %8 : vector<5x1xf32> to vector<5x128xf32>
    %122 = arith.mulf %120, %121 : vector<5x128xf32>
    %cst_29 = arith.constant dense<0.000000e+00> : vector<128xf32>
    %123 = vector.multi_reduction <add>, %122, %cst_29 [0] : vector<5x128xf32> to vector<128xf32>
    %124 = vector.shape_cast %123 : vector<128xf32> to vector<1x128xf32>
    %125 = vector.broadcast %124 : vector<1x128xf32> to vector<5x128xf32>
    %126 = arith.mulf %125, %117 : vector<5x128xf32>
    %127 = arith.addf %84, %126 : vector<5x128xf32>
    %128 = vector.broadcast %12 : vector<5x1xf32> to vector<5x128xf32>
    %129 = arith.mulf %120, %128 : vector<5x128xf32>
    %cst_30 = arith.constant dense<0.000000e+00> : vector<128xf32>
    %130 = vector.multi_reduction <add>, %129, %cst_30 [0] : vector<5x128xf32> to vector<128xf32>
    %131 = vector.shape_cast %130 : vector<128xf32> to vector<1x128xf32>
    %132 = vector.broadcast %131 : vector<1x128xf32> to vector<5x128xf32>
    %133 = arith.mulf %132, %117 : vector<5x128xf32>
    %134 = arith.addf %91, %133 : vector<5x128xf32>
    %135 = vector.broadcast %16 : vector<5x1xf32> to vector<5x128xf32>
    %136 = arith.mulf %120, %135 : vector<5x128xf32>
    %cst_31 = arith.constant dense<0.000000e+00> : vector<128xf32>
    %137 = vector.multi_reduction <add>, %136, %cst_31 [0] : vector<5x128xf32> to vector<128xf32>
    %138 = vector.shape_cast %137 : vector<128xf32> to vector<1x128xf32>
    %139 = vector.broadcast %138 : vector<1x128xf32> to vector<5x128xf32>
    %140 = arith.mulf %139, %117 : vector<5x128xf32>
    %141 = arith.addf %98, %140 : vector<5x128xf32>
    %142 = vector.broadcast %20 : vector<5x1xf32> to vector<5x128xf32>
    %143 = arith.mulf %120, %142 : vector<5x128xf32>
    %cst_32 = arith.constant dense<0.000000e+00> : vector<128xf32>
    %144 = vector.multi_reduction <add>, %143, %cst_32 [0] : vector<5x128xf32> to vector<128xf32>
    %145 = vector.shape_cast %144 : vector<128xf32> to vector<1x128xf32>
    %146 = vector.broadcast %145 : vector<1x128xf32> to vector<5x128xf32>
    %147 = arith.mulf %146, %117 : vector<5x128xf32>
    %148 = arith.addf %105, %147 : vector<5x128xf32>
    %cst_33 = arith.constant 3.750000e-01 : f32
    %149 = vector.broadcast %cst_33 : f32 to vector<5x128xf32>
    %150 = arith.mulf %149, %117 : vector<5x128xf32>
    %151 = arith.addf %108, %150 : vector<5x128xf32>
    %c3_i32_34 = arith.constant 3 : i32
    %152 = arith.addi %23, %c3_i32_34 : i32
    %153 = arith.index_cast %152 : i32 to index
    %c0_35 = arith.constant 0 : index
    %c0_36 = arith.constant 0 : index
    %154 = vector.load %arg2[%153, %c0_35, %c0_36] : memref<12x5x128xf32, #tpu.memory_space<vmem>>, vector<1x5x128xf32>
    %155 = vector.shape_cast %154 : vector<1x5x128xf32> to vector<5x128xf32>
    %cst_37 = arith.constant 7.500000e-01 : f32
    %156 = vector.broadcast %cst_37 : f32 to vector<5x1xf32>
    %157 = arith.mulf %156, %4 : vector<5x1xf32>
    %158 = vector.broadcast %157 : vector<5x1xf32> to vector<5x128xf32>
    %159 = arith.addf %155, %158 : vector<5x128xf32>
    %160 = arith.subf %159, %116 : vector<5x128xf32>
    %161 = arith.addf %159, %116 : vector<5x128xf32>
    %cst_38 = arith.constant 5.000000e-01 : f32
    %162 = vector.broadcast %cst_38 : f32 to vector<5x128xf32>
    %163 = arith.mulf %162, %161 : vector<5x128xf32>
    %164 = vector.broadcast %8 : vector<5x1xf32> to vector<5x128xf32>
    %165 = arith.mulf %163, %164 : vector<5x128xf32>
    %cst_39 = arith.constant dense<0.000000e+00> : vector<128xf32>
    %166 = vector.multi_reduction <add>, %165, %cst_39 [0] : vector<5x128xf32> to vector<128xf32>
    %167 = vector.shape_cast %166 : vector<128xf32> to vector<1x128xf32>
    %168 = vector.broadcast %167 : vector<1x128xf32> to vector<5x128xf32>
    %169 = arith.mulf %168, %160 : vector<5x128xf32>
    %170 = arith.addf %127, %169 : vector<5x128xf32>
    %171 = vector.broadcast %12 : vector<5x1xf32> to vector<5x128xf32>
    %172 = arith.mulf %163, %171 : vector<5x128xf32>
    %cst_40 = arith.constant dense<0.000000e+00> : vector<128xf32>
    %173 = vector.multi_reduction <add>, %172, %cst_40 [0] : vector<5x128xf32> to vector<128xf32>
    %174 = vector.shape_cast %173 : vector<128xf32> to vector<1x128xf32>
    %175 = vector.broadcast %174 : vector<1x128xf32> to vector<5x128xf32>
    %176 = arith.mulf %175, %160 : vector<5x128xf32>
    %177 = arith.addf %134, %176 : vector<5x128xf32>
    %178 = vector.broadcast %16 : vector<5x1xf32> to vector<5x128xf32>
    %179 = arith.mulf %163, %178 : vector<5x128xf32>
    %cst_41 = arith.constant dense<0.000000e+00> : vector<128xf32>
    %180 = vector.multi_reduction <add>, %179, %cst_41 [0] : vector<5x128xf32> to vector<128xf32>
    %181 = vector.shape_cast %180 : vector<128xf32> to vector<1x128xf32>
    %182 = vector.broadcast %181 : vector<1x128xf32> to vector<5x128xf32>
    %183 = arith.mulf %182, %160 : vector<5x128xf32>
    %184 = arith.addf %141, %183 : vector<5x128xf32>
    %185 = vector.broadcast %20 : vector<5x1xf32> to vector<5x128xf32>
    %186 = arith.mulf %163, %185 : vector<5x128xf32>
    %cst_42 = arith.constant dense<0.000000e+00> : vector<128xf32>
    %187 = vector.multi_reduction <add>, %186, %cst_42 [0] : vector<5x128xf32> to vector<128xf32>
    %188 = vector.shape_cast %187 : vector<128xf32> to vector<1x128xf32>
    %189 = vector.broadcast %188 : vector<1x128xf32> to vector<5x128xf32>
    %190 = arith.mulf %189, %160 : vector<5x128xf32>
    %191 = arith.addf %148, %190 : vector<5x128xf32>
    %cst_43 = arith.constant 6.250000e-01 : f32
    %192 = vector.broadcast %cst_43 : f32 to vector<5x128xf32>
    %193 = arith.mulf %192, %160 : vector<5x128xf32>
    %194 = arith.addf %151, %193 : vector<5x128xf32>
    %c4_i32_44 = arith.constant 4 : i32
    %195 = arith.addi %23, %c4_i32_44 : i32
    %196 = arith.index_cast %195 : i32 to index
    %c0_45 = arith.constant 0 : index
    %c0_46 = arith.constant 0 : index
    %197 = vector.load %arg2[%196, %c0_45, %c0_46] : memref<12x5x128xf32, #tpu.memory_space<vmem>>, vector<1x5x128xf32>
    %198 = vector.shape_cast %197 : vector<1x5x128xf32> to vector<5x128xf32>
    %cst_47 = arith.constant 1.000000e+00 : f32
    %199 = vector.broadcast %cst_47 : f32 to vector<5x1xf32>
    %200 = arith.mulf %199, %4 : vector<5x1xf32>
    %201 = vector.broadcast %200 : vector<5x1xf32> to vector<5x128xf32>
    %202 = arith.addf %198, %201 : vector<5x128xf32>
    %203 = arith.subf %202, %159 : vector<5x128xf32>
    %204 = arith.addf %202, %159 : vector<5x128xf32>
    %cst_48 = arith.constant 5.000000e-01 : f32
    %205 = vector.broadcast %cst_48 : f32 to vector<5x128xf32>
    %206 = arith.mulf %205, %204 : vector<5x128xf32>
    %207 = vector.broadcast %8 : vector<5x1xf32> to vector<5x128xf32>
    %208 = arith.mulf %206, %207 : vector<5x128xf32>
    %cst_49 = arith.constant dense<0.000000e+00> : vector<128xf32>
    %209 = vector.multi_reduction <add>, %208, %cst_49 [0] : vector<5x128xf32> to vector<128xf32>
    %210 = vector.shape_cast %209 : vector<128xf32> to vector<1x128xf32>
    %211 = vector.broadcast %210 : vector<1x128xf32> to vector<5x128xf32>
    %212 = arith.mulf %211, %203 : vector<5x128xf32>
    %213 = arith.addf %170, %212 : vector<5x128xf32>
    %214 = vector.broadcast %12 : vector<5x1xf32> to vector<5x128xf32>
    %215 = arith.mulf %206, %214 : vector<5x128xf32>
    %cst_50 = arith.constant dense<0.000000e+00> : vector<128xf32>
    %216 = vector.multi_reduction <add>, %215, %cst_50 [0] : vector<5x128xf32> to vector<128xf32>
    %217 = vector.shape_cast %216 : vector<128xf32> to vector<1x128xf32>
    %218 = vector.broadcast %217 : vector<1x128xf32> to vector<5x128xf32>
    %219 = arith.mulf %218, %203 : vector<5x128xf32>
    %220 = arith.addf %177, %219 : vector<5x128xf32>
    %221 = vector.broadcast %16 : vector<5x1xf32> to vector<5x128xf32>
    %222 = arith.mulf %206, %221 : vector<5x128xf32>
    %cst_51 = arith.constant dense<0.000000e+00> : vector<128xf32>
    %223 = vector.multi_reduction <add>, %222, %cst_51 [0] : vector<5x128xf32> to vector<128xf32>
    %224 = vector.shape_cast %223 : vector<128xf32> to vector<1x128xf32>
    %225 = vector.broadcast %224 : vector<1x128xf32> to vector<5x128xf32>
    %226 = arith.mulf %225, %203 : vector<5x128xf32>
    %227 = arith.addf %184, %226 : vector<5x128xf32>
    %228 = vector.broadcast %20 : vector<5x1xf32> to vector<5x128xf32>
    %229 = arith.mulf %206, %228 : vector<5x128xf32>
    %cst_52 = arith.constant dense<0.000000e+00> : vector<128xf32>
    %230 = vector.multi_reduction <add>, %229, %cst_52 [0] : vector<5x128xf32> to vector<128xf32>
    %231 = vector.shape_cast %230 : vector<128xf32> to vector<1x128xf32>
    %232 = vector.broadcast %231 : vector<1x128xf32> to vector<5x128xf32>
    %233 = arith.mulf %232, %203 : vector<5x128xf32>
    %234 = arith.addf %191, %233 : vector<5x128xf32>
    %cst_53 = arith.constant 8.750000e-01 : f32
    %235 = vector.broadcast %cst_53 : f32 to vector<5x128xf32>
    %236 = arith.mulf %235, %203 : vector<5x128xf32>
    %237 = arith.addf %194, %236 : vector<5x128xf32>
    %c0_54 = arith.constant 0 : index
    %c0_55 = arith.constant 0 : index
    %238 = vector.load %arg3[%c0_54, %c0_55] : memref<8x5xf32, #tpu.memory_space<vmem>>, vector<8x5xf32>
    %cst_56 = arith.constant dense<0.000000e+00> : vector<8x128xf32>
    %239 = tpu.matmul %238, %202, %cst_56 {dimension_numbers = #tpu.dot_dimension_numbers<[1], [0], [0], [1], [0, 0, 1, 1], [], []>} : vector<8x5xf32>, vector<5x128xf32>, vector<8x128xf32> -> vector<8x128xf32>
    %c0_57 = arith.constant 0 : index
    %c0_58 = arith.constant 0 : index
    %c0_59 = arith.constant 0 : index
    %240 = vector.load %arg4[%c0_57, %c0_58, %c0_59] : memref<5x8x5xf32, #tpu.memory_space<vmem>>, vector<1x8x5xf32>
    %241 = vector.shape_cast %240 : vector<1x8x5xf32> to vector<8x5xf32>
    %cst_60 = arith.constant dense<0.000000e+00> : vector<8x128xf32>
    %242 = tpu.matmul %241, %213, %cst_60 {dimension_numbers = #tpu.dot_dimension_numbers<[1], [0], [0], [1], [0, 0, 1, 1], [], []>} : vector<8x5xf32>, vector<5x128xf32>, vector<8x128xf32> -> vector<8x128xf32>
    %243 = arith.addf %239, %242 : vector<8x128xf32>
    %c1 = arith.constant 1 : index
    %c0_61 = arith.constant 0 : index
    %c0_62 = arith.constant 0 : index
    %244 = vector.load %arg4[%c1, %c0_61, %c0_62] : memref<5x8x5xf32, #tpu.memory_space<vmem>>, vector<1x8x5xf32>
    %245 = vector.shape_cast %244 : vector<1x8x5xf32> to vector<8x5xf32>
    %cst_63 = arith.constant dense<0.000000e+00> : vector<8x128xf32>
    %246 = tpu.matmul %245, %220, %cst_63 {dimension_numbers = #tpu.dot_dimension_numbers<[1], [0], [0], [1], [0, 0, 1, 1], [], []>} : vector<8x5xf32>, vector<5x128xf32>, vector<8x128xf32> -> vector<8x128xf32>
    %247 = arith.addf %243, %246 : vector<8x128xf32>
    %c2 = arith.constant 2 : index
    %c0_64 = arith.constant 0 : index
    %c0_65 = arith.constant 0 : index
    %248 = vector.load %arg4[%c2, %c0_64, %c0_65] : memref<5x8x5xf32, #tpu.memory_space<vmem>>, vector<1x8x5xf32>
    %249 = vector.shape_cast %248 : vector<1x8x5xf32> to vector<8x5xf32>
    %cst_66 = arith.constant dense<0.000000e+00> : vector<8x128xf32>
    %250 = tpu.matmul %249, %227, %cst_66 {dimension_numbers = #tpu.dot_dimension_numbers<[1], [0], [0], [1], [0, 0, 1, 1], [], []>} : vector<8x5xf32>, vector<5x128xf32>, vector<8x128xf32> -> vector<8x128xf32>
    %251 = arith.addf %247, %250 : vector<8x128xf32>
    %c3 = arith.constant 3 : index
    %c0_67 = arith.constant 0 : index
    %c0_68 = arith.constant 0 : index
    %252 = vector.load %arg4[%c3, %c0_67, %c0_68] : memref<5x8x5xf32, #tpu.memory_space<vmem>>, vector<1x8x5xf32>
    %253 = vector.shape_cast %252 : vector<1x8x5xf32> to vector<8x5xf32>
    %cst_69 = arith.constant dense<0.000000e+00> : vector<8x128xf32>
    %254 = tpu.matmul %253, %234, %cst_69 {dimension_numbers = #tpu.dot_dimension_numbers<[1], [0], [0], [1], [0, 0, 1, 1], [], []>} : vector<8x5xf32>, vector<5x128xf32>, vector<8x128xf32> -> vector<8x128xf32>
    %255 = arith.addf %251, %254 : vector<8x128xf32>
    %c4 = arith.constant 4 : index
    %c0_70 = arith.constant 0 : index
    %c0_71 = arith.constant 0 : index
    %256 = vector.load %arg4[%c4, %c0_70, %c0_71] : memref<5x8x5xf32, #tpu.memory_space<vmem>>, vector<1x8x5xf32>
    %257 = vector.shape_cast %256 : vector<1x8x5xf32> to vector<8x5xf32>
    %cst_72 = arith.constant dense<0.000000e+00> : vector<8x128xf32>
    %258 = tpu.matmul %257, %237, %cst_72 {dimension_numbers = #tpu.dot_dimension_numbers<[1], [0], [0], [1], [0, 0, 1, 1], [], []>} : vector<8x5xf32>, vector<5x128xf32>, vector<8x128xf32> -> vector<8x128xf32>
    %259 = arith.addf %255, %258 : vector<8x128xf32>
    %c0_73 = arith.constant 0 : index
    %c0_74 = arith.constant 0 : index
    %260 = vector.load %arg5[%c0_73, %c0_74] : memref<8x1xf32, #tpu.memory_space<vmem>>, vector<8x1xf32>
    %261 = vector.broadcast %260 : vector<8x1xf32> to vector<8x128xf32>
    %262 = arith.addf %259, %261 : vector<8x128xf32>
    %c0_75 = arith.constant 0 : index
    %c0_76 = arith.constant 0 : index
    %c0_77 = arith.constant 0 : index
    %263 = vector.load %arg6[%c0_75, %c0_76, %c0_77] : memref<4x8x128xf32, #tpu.memory_space<vmem>>, vector<1x8x128xf32>
    %264 = vector.shape_cast %263 : vector<1x8x128xf32> to vector<8x128xf32>
    %265 = vector.shape_cast %262 : vector<8x128xf32> to vector<1x8x128xf32>
    tpu.vector_store %arg6[%c0_75, %c0_76, %c0_77], %265 {strides = array<i32>} : memref<4x8x128xf32, #tpu.memory_space<vmem>>, vector<1x8x128xf32>,
    %c1_i32_78 = arith.constant 1 : i32
    %266 = arith.addi %21, %c1_i32_78 : i32
    %c7_i32_79 = arith.constant 7 : i32
    %267 = arith.minsi %266, %c7_i32_79 : i32
    %cst_80 = arith.constant 0.000000e+00 : f32
    %268 = vector.broadcast %cst_80 : f32 to vector<5x128xf32>
    %cst_81 = arith.constant 0.000000e+00 : f32
    %269 = vector.broadcast %cst_81 : f32 to vector<5x128xf32>
    %cst_82 = arith.constant 0.000000e+00 : f32
    %270 = vector.broadcast %cst_82 : f32 to vector<5x128xf32>
    %cst_83 = arith.constant 0.000000e+00 : f32
    %271 = vector.broadcast %cst_83 : f32 to vector<5x128xf32>
    %cst_84 = arith.constant 0.000000e+00 : f32
    %272 = vector.broadcast %cst_84 : f32 to vector<5x128xf32>
    %cst_85 = arith.constant 0.000000e+00 : f32
    %273 = vector.broadcast %cst_85 : f32 to vector<5x128xf32>
    %c0_i32_86 = arith.constant 0 : i32
    %274 = arith.addi %267, %c0_i32_86 : i32
    %275 = arith.index_cast %274 : i32 to index
    %c0_87 = arith.constant 0 : index
    %c0_88 = arith.constant 0 : index
    %276 = vector.load %arg2[%275, %c0_87, %c0_88] : memref<12x5x128xf32, #tpu.memory_space<vmem>>, vector<1x5x128xf32>
    %277 = vector.shape_cast %276 : vector<1x5x128xf32> to vector<5x128xf32>
    %278 = arith.subf %277, %268 : vector<5x128xf32>
    %279 = arith.addf %277, %268 : vector<5x128xf32>
    %cst_89 = arith.constant 5.000000e-01 : f32
    %280 = vector.broadcast %cst_89 : f32 to vector<5x128xf32>
    %281 = arith.mulf %280, %279 : vector<5x128xf32>
    %282 = vector.broadcast %8 : vector<5x1xf32> to vector<5x128xf32>
    %283 = arith.mulf %281, %282 : vector<5x128xf32>
    %cst_90 = arith.constant dense<0.000000e+00> : vector<128xf32>
    %284 = vector.multi_reduction <add>, %283, %cst_90 [0] : vector<5x128xf32> to vector<128xf32>
    %285 = vector.shape_cast %284 : vector<128xf32> to vector<1x128xf32>
    %286 = vector.broadcast %285 : vector<1x128xf32> to vector<5x128xf32>
    %287 = arith.mulf %286, %278 : vector<5x128xf32>
    %288 = arith.addf %269, %287 : vector<5x128xf32>
    %289 = vector.broadcast %12 : vector<5x1xf32> to vector<5x128xf32>
    %290 = arith.mulf %281, %289 : vector<5x128xf32>
    %cst_91 = arith.constant dense<0.000000e+00> : vector<128xf32>
    %291 = vector.multi_reduction <add>, %290, %cst_91 [0] : vector<5x128xf32> to vector<128xf32>
    %292 = vector.shape_cast %291 : vector<128xf32> to vector<1x128xf32>
    %293 = vector.broadcast %292 : vector<1x128xf32> to vector<5x128xf32>
    %294 = arith.mulf %293, %278 : vector<5x128xf32>
    %295 = arith.addf %270, %294 : vector<5x128xf32>
    %296 = vector.broadcast %16 : vector<5x1xf32> to vector<5x128xf32>
    %297 = arith.mulf %281, %296 : vector<5x128xf32>
    %cst_92 = arith.constant dense<0.000000e+00> : vector<128xf32>
    %298 = vector.multi_reduction <add>, %297, %cst_92 [0] : vector<5x128xf32> to vector<128xf32>
    %299 = vector.shape_cast %298 : vector<128xf32> to vector<1x128xf32>
    %300 = vector.broadcast %299 : vector<1x128xf32> to vector<5x128xf32>
    %301 = arith.mulf %300, %278 : vector<5x128xf32>
    %302 = arith.addf %271, %301 : vector<5x128xf32>
    %303 = vector.broadcast %20 : vector<5x1xf32> to vector<5x128xf32>
    %304 = arith.mulf %281, %303 : vector<5x128xf32>
    %cst_93 = arith.constant dense<0.000000e+00> : vector<128xf32>
    %305 = vector.multi_reduction <add>, %304, %cst_93 [0] : vector<5x128xf32> to vector<128xf32>
    %306 = vector.shape_cast %305 : vector<128xf32> to vector<1x128xf32>
    %307 = vector.broadcast %306 : vector<1x128xf32> to vector<5x128xf32>
    %308 = arith.mulf %307, %278 : vector<5x128xf32>
    %309 = arith.addf %272, %308 : vector<5x128xf32>
    %c1_i32_94 = arith.constant 1 : i32
    %310 = arith.addi %267, %c1_i32_94 : i32
    %311 = arith.index_cast %310 : i32 to index
    %c0_95 = arith.constant 0 : index
    %c0_96 = arith.constant 0 : index
    %312 = vector.load %arg2[%311, %c0_95, %c0_96] : memref<12x5x128xf32, #tpu.memory_space<vmem>>, vector<1x5x128xf32>
    %313 = vector.shape_cast %312 : vector<1x5x128xf32> to vector<5x128xf32>
    %cst_97 = arith.constant 2.500000e-01 : f32
    %314 = vector.broadcast %cst_97 : f32 to vector<5x1xf32>
    %315 = arith.mulf %314, %4 : vector<5x1xf32>
    %316 = vector.broadcast %315 : vector<5x1xf32> to vector<5x128xf32>
    %317 = arith.addf %313, %316 : vector<5x128xf32>
    %318 = arith.subf %317, %277 : vector<5x128xf32>
    %319 = arith.addf %317, %277 : vector<5x128xf32>
    %cst_98 = arith.constant 5.000000e-01 : f32
    %320 = vector.broadcast %cst_98 : f32 to vector<5x128xf32>
    %321 = arith.mulf %320, %319 : vector<5x128xf32>
    %322 = vector.broadcast %8 : vector<5x1xf32> to vector<5x128xf32>
    %323 = arith.mulf %321, %322 : vector<5x128xf32>
    %cst_99 = arith.constant dense<0.000000e+00> : vector<128xf32>
    %324 = vector.multi_reduction <add>, %323, %cst_99 [0] : vector<5x128xf32> to vector<128xf32>
    %325 = vector.shape_cast %324 : vector<128xf32> to vector<1x128xf32>
    %326 = vector.broadcast %325 : vector<1x128xf32> to vector<5x128xf32>
    %327 = arith.mulf %326, %318 : vector<5x128xf32>
    %328 = arith.addf %288, %327 : vector<5x128xf32>
    %329 = vector.broadcast %12 : vector<5x1xf32> to vector<5x128xf32>
    %330 = arith.mulf %321, %329 : vector<5x128xf32>
    %cst_100 = arith.constant dense<0.000000e+00> : vector<128xf32>
    %331 = vector.multi_reduction <add>, %330, %cst_100 [0] : vector<5x128xf32> to vector<128xf32>
    %332 = vector.shape_cast %331 : vector<128xf32> to vector<1x128xf32>
    %333 = vector.broadcast %332 : vector<1x128xf32> to vector<5x128xf32>
    %334 = arith.mulf %333, %318 : vector<5x128xf32>
    %335 = arith.addf %295, %334 : vector<5x128xf32>
    %336 = vector.broadcast %16 : vector<5x1xf32> to vector<5x128xf32>
    %337 = arith.mulf %321, %336 : vector<5x128xf32>
    %cst_101 = arith.constant dense<0.000000e+00> : vector<128xf32>
    %338 = vector.multi_reduction <add>, %337, %cst_101 [0] : vector<5x128xf32> to vector<128xf32>
    %339 = vector.shape_cast %338 : vector<128xf32> to vector<1x128xf32>
    %340 = vector.broadcast %339 : vector<1x128xf32> to vector<5x128xf32>
    %341 = arith.mulf %340, %318 : vector<5x128xf32>
    %342 = arith.addf %302, %341 : vector<5x128xf32>
    %343 = vector.broadcast %20 : vector<5x1xf32> to vector<5x128xf32>
    %344 = arith.mulf %321, %343 : vector<5x128xf32>
    %cst_102 = arith.constant dense<0.000000e+00> : vector<128xf32>
    %345 = vector.multi_reduction <add>, %344, %cst_102 [0] : vector<5x128xf32> to vector<128xf32>
    %346 = vector.shape_cast %345 : vector<128xf32> to vector<1x128xf32>
    %347 = vector.broadcast %346 : vector<1x128xf32> to vector<5x128xf32>
    %348 = arith.mulf %347, %318 : vector<5x128xf32>
    %349 = arith.addf %309, %348 : vector<5x128xf32>
    %cst_103 = arith.constant 1.250000e-01 : f32
    %350 = vector.broadcast %cst_103 : f32 to vector<5x128xf32>
    %351 = arith.mulf %350, %318 : vector<5x128xf32>
    %352 = arith.addf %273, %351 : vector<5x128xf32>
    %c2_i32_104 = arith.constant 2 : i32
    %353 = arith.addi %267, %c2_i32_104 : i32
    %354 = arith.index_cast %353 : i32 to index
    %c0_105 = arith.constant 0 : index
    %c0_106 = arith.constant 0 : index
    %355 = vector.load %arg2[%354, %c0_105, %c0_106] : memref<12x5x128xf32, #tpu.memory_space<vmem>>, vector<1x5x128xf32>
    %356 = vector.shape_cast %355 : vector<1x5x128xf32> to vector<5x128xf32>
    %cst_107 = arith.constant 5.000000e-01 : f32
    %357 = vector.broadcast %cst_107 : f32 to vector<5x1xf32>
    %358 = arith.mulf %357, %4 : vector<5x1xf32>
    %359 = vector.broadcast %358 : vector<5x1xf32> to vector<5x128xf32>
    %360 = arith.addf %356, %359 : vector<5x128xf32>
    %361 = arith.subf %360, %317 : vector<5x128xf32>
    %362 = arith.addf %360, %317 : vector<5x128xf32>
    %cst_108 = arith.constant 5.000000e-01 : f32
    %363 = vector.broadcast %cst_108 : f32 to vector<5x128xf32>
    %364 = arith.mulf %363, %362 : vector<5x128xf32>
    %365 = vector.broadcast %8 : vector<5x1xf32> to vector<5x128xf32>
    %366 = arith.mulf %364, %365 : vector<5x128xf32>
    %cst_109 = arith.constant dense<0.000000e+00> : vector<128xf32>
    %367 = vector.multi_reduction <add>, %366, %cst_109 [0] : vector<5x128xf32> to vector<128xf32>
    %368 = vector.shape_cast %367 : vector<128xf32> to vector<1x128xf32>
    %369 = vector.broadcast %368 : vector<1x128xf32> to vector<5x128xf32>
    %370 = arith.mulf %369, %361 : vector<5x128xf32>
    %371 = arith.addf %328, %370 : vector<5x128xf32>
    %372 = vector.broadcast %12 : vector<5x1xf32> to vector<5x128xf32>
    %373 = arith.mulf %364, %372 : vector<5x128xf32>
    %cst_110 = arith.constant dense<0.000000e+00> : vector<128xf32>
    %374 = vector.multi_reduction <add>, %373, %cst_110 [0] : vector<5x128xf32> to vector<128xf32>
    %375 = vector.shape_cast %374 : vector<128xf32> to vector<1x128xf32>
    %376 = vector.broadcast %375 : vector<1x128xf32> to vector<5x128xf32>
    %377 = arith.mulf %376, %361 : vector<5x128xf32>
    %378 = arith.addf %335, %377 : vector<5x128xf32>
    %379 = vector.broadcast %16 : vector<5x1xf32> to vector<5x128xf32>
    %380 = arith.mulf %364, %379 : vector<5x128xf32>
    %cst_111 = arith.constant dense<0.000000e+00> : vector<128xf32>
    %381 = vector.multi_reduction <add>, %380, %cst_111 [0] : vector<5x128xf32> to vector<128xf32>
    %382 = vector.shape_cast %381 : vector<128xf32> to vector<1x128xf32>
    %383 = vector.broadcast %382 : vector<1x128xf32> to vector<5x128xf32>
    %384 = arith.mulf %383, %361 : vector<5x128xf32>
    %385 = arith.addf %342, %384 : vector<5x128xf32>
    %386 = vector.broadcast %20 : vector<5x1xf32> to vector<5x128xf32>
    %387 = arith.mulf %364, %386 : vector<5x128xf32>
    %cst_112 = arith.constant dense<0.000000e+00> : vector<128xf32>
    %388 = vector.multi_reduction <add>, %387, %cst_112 [0] : vector<5x128xf32> to vector<128xf32>
    %389 = vector.shape_cast %388 : vector<128xf32> to vector<1x128xf32>
    %390 = vector.broadcast %389 : vector<1x128xf32> to vector<5x128xf32>
    %391 = arith.mulf %390, %361 : vector<5x128xf32>
    %392 = arith.addf %349, %391 : vector<5x128xf32>
    %cst_113 = arith.constant 3.750000e-01 : f32
    %393 = vector.broadcast %cst_113 : f32 to vector<5x128xf32>
    %394 = arith.mulf %393, %361 : vector<5x128xf32>
    %395 = arith.addf %352, %394 : vector<5x128xf32>
    %c3_i32_114 = arith.constant 3 : i32
    %396 = arith.addi %267, %c3_i32_114 : i32
    %397 = arith.index_cast %396 : i32 to index
    %c0_115 = arith.constant 0 : index
    %c0_116 = arith.constant 0 : index
    %398 = vector.load %arg2[%397, %c0_115, %c0_116] : memref<12x5x128xf32, #tpu.memory_space<vmem>>, vector<1x5x128xf32>
    %399 = vector.shape_cast %398 : vector<1x5x128xf32> to vector<5x128xf32>
    %cst_117 = arith.constant 7.500000e-01 : f32
    %400 = vector.broadcast %cst_117 : f32 to vector<5x1xf32>
    %401 = arith.mulf %400, %4 : vector<5x1xf32>
    %402 = vector.broadcast %401 : vector<5x1xf32> to vector<5x128xf32>
    %403 = arith.addf %399, %402 : vector<5x128xf32>
    %404 = arith.subf %403, %360 : vector<5x128xf32>
    %405 = arith.addf %403, %360 : vector<5x128xf32>
    %cst_118 = arith.constant 5.000000e-01 : f32
    %406 = vector.broadcast %cst_118 : f32 to vector<5x128xf32>
    %407 = arith.mulf %406, %405 : vector<5x128xf32>
    %408 = vector.broadcast %8 : vector<5x1xf32> to vector<5x128xf32>
    %409 = arith.mulf %407, %408 : vector<5x128xf32>
    %cst_119 = arith.constant dense<0.000000e+00> : vector<128xf32>
    %410 = vector.multi_reduction <add>, %409, %cst_119 [0] : vector<5x128xf32> to vector<128xf32>
    %411 = vector.shape_cast %410 : vector<128xf32> to vector<1x128xf32>
    %412 = vector.broadcast %411 : vector<1x128xf32> to vector<5x128xf32>
    %413 = arith.mulf %412, %404 : vector<5x128xf32>
    %414 = arith.addf %371, %413 : vector<5x128xf32>
    %415 = vector.broadcast %12 : vector<5x1xf32> to vector<5x128xf32>
    %416 = arith.mulf %407, %415 : vector<5x128xf32>
    %cst_120 = arith.constant dense<0.000000e+00> : vector<128xf32>
    %417 = vector.multi_reduction <add>, %416, %cst_120 [0] : vector<5x128xf32> to vector<128xf32>
    %418 = vector.shape_cast %417 : vector<128xf32> to vector<1x128xf32>
    %419 = vector.broadcast %418 : vector<1x128xf32> to vector<5x128xf32>
    %420 = arith.mulf %419, %404 : vector<5x128xf32>
    %421 = arith.addf %378, %420 : vector<5x128xf32>
    %422 = vector.broadcast %16 : vector<5x1xf32> to vector<5x128xf32>
    %423 = arith.mulf %407, %422 : vector<5x128xf32>
    %cst_121 = arith.constant dense<0.000000e+00> : vector<128xf32>
    %424 = vector.multi_reduction <add>, %423, %cst_121 [0] : vector<5x128xf32> to vector<128xf32>
    %425 = vector.shape_cast %424 : vector<128xf32> to vector<1x128xf32>
    %426 = vector.broadcast %425 : vector<1x128xf32> to vector<5x128xf32>
    %427 = arith.mulf %426, %404 : vector<5x128xf32>
    %428 = arith.addf %385, %427 : vector<5x128xf32>
    %429 = vector.broadcast %20 : vector<5x1xf32> to vector<5x128xf32>
    %430 = arith.mulf %407, %429 : vector<5x128xf32>
    %cst_122 = arith.constant dense<0.000000e+00> : vector<128xf32>
    %431 = vector.multi_reduction <add>, %430, %cst_122 [0] : vector<5x128xf32> to vector<128xf32>
    %432 = vector.shape_cast %431 : vector<128xf32> to vector<1x128xf32>
    %433 = vector.broadcast %432 : vector<1x128xf32> to vector<5x128xf32>
    %434 = arith.mulf %433, %404 : vector<5x128xf32>
    %435 = arith.addf %392, %434 : vector<5x128xf32>
    %cst_123 = arith.constant 6.250000e-01 : f32
    %436 = vector.broadcast %cst_123 : f32 to vector<5x128xf32>
    %437 = arith.mulf %436, %404 : vector<5x128xf32>
    %438 = arith.addf %395, %437 : vector<5x128xf32>
    %c4_i32_124 = arith.constant 4 : i32
    %439 = arith.addi %267, %c4_i32_124 : i32
    %440 = arith.index_cast %439 : i32 to index
    %c0_125 = arith.constant 0 : index
    %c0_126 = arith.constant 0 : index
    %441 = vector.load %arg2[%440, %c0_125, %c0_126] : memref<12x5x128xf32, #tpu.memory_space<vmem>>, vector<1x5x128xf32>
    %442 = vector.shape_cast %441 : vector<1x5x128xf32> to vector<5x128xf32>
    %cst_127 = arith.constant 1.000000e+00 : f32
    %443 = vector.broadcast %cst_127 : f32 to vector<5x1xf32>
    %444 = arith.mulf %443, %4 : vector<5x1xf32>
    %445 = vector.broadcast %444 : vector<5x1xf32> to vector<5x128xf32>
    %446 = arith.addf %442, %445 : vector<5x128xf32>
    %447 = arith.subf %446, %403 : vector<5x128xf32>
    %448 = arith.addf %446, %403 : vector<5x128xf32>
    %cst_128 = arith.constant 5.000000e-01 : f32
    %449 = vector.broadcast %cst_128 : f32 to vector<5x128xf32>
    %450 = arith.mulf %449, %448 : vector<5x128xf32>
    %451 = vector.broadcast %8 : vector<5x1xf32> to vector<5x128xf32>
    %452 = arith.mulf %450, %451 : vector<5x128xf32>
    %cst_129 = arith.constant dense<0.000000e+00> : vector<128xf32>
    %453 = vector.multi_reduction <add>, %452, %cst_129 [0] : vector<5x128xf32> to vector<128xf32>
    %454 = vector.shape_cast %453 : vector<128xf32> to vector<1x128xf32>
    %455 = vector.broadcast %454 : vector<1x128xf32> to vector<5x128xf32>
    %456 = arith.mulf %455, %447 : vector<5x128xf32>
    %457 = arith.addf %414, %456 : vector<5x128xf32>
    %458 = vector.broadcast %12 : vector<5x1xf32> to vector<5x128xf32>
    %459 = arith.mulf %450, %458 : vector<5x128xf32>
    %cst_130 = arith.constant dense<0.000000e+00> : vector<128xf32>
    %460 = vector.multi_reduction <add>, %459, %cst_130 [0] : vector<5x128xf32> to vector<128xf32>
    %461 = vector.shape_cast %460 : vector<128xf32> to vector<1x128xf32>
    %462 = vector.broadcast %461 : vector<1x128xf32> to vector<5x128xf32>
    %463 = arith.mulf %462, %447 : vector<5x128xf32>
    %464 = arith.addf %421, %463 : vector<5x128xf32>
    %465 = vector.broadcast %16 : vector<5x1xf32> to vector<5x128xf32>
    %466 = arith.mulf %450, %465 : vector<5x128xf32>
    %cst_131 = arith.constant dense<0.000000e+00> : vector<128xf32>
    %467 = vector.multi_reduction <add>, %466, %cst_131 [0] : vector<5x128xf32> to vector<128xf32>
    %468 = vector.shape_cast %467 : vector<128xf32> to vector<1x128xf32>
    %469 = vector.broadcast %468 : vector<1x128xf32> to vector<5x128xf32>
    %470 = arith.mulf %469, %447 : vector<5x128xf32>
    %471 = arith.addf %428, %470 : vector<5x128xf32>
    %472 = vector.broadcast %20 : vector<5x1xf32> to vector<5x128xf32>
    %473 = arith.mulf %450, %472 : vector<5x128xf32>
    %cst_132 = arith.constant dense<0.000000e+00> : vector<128xf32>
    %474 = vector.multi_reduction <add>, %473, %cst_132 [0] : vector<5x128xf32> to vector<128xf32>
    %475 = vector.shape_cast %474 : vector<128xf32> to vector<1x128xf32>
    %476 = vector.broadcast %475 : vector<1x128xf32> to vector<5x128xf32>
    %477 = arith.mulf %476, %447 : vector<5x128xf32>
    %478 = arith.addf %435, %477 : vector<5x128xf32>
    %cst_133 = arith.constant 8.750000e-01 : f32
    %479 = vector.broadcast %cst_133 : f32 to vector<5x128xf32>
    %480 = arith.mulf %479, %447 : vector<5x128xf32>
    %481 = arith.addf %438, %480 : vector<5x128xf32>
    %c0_134 = arith.constant 0 : index
    %c0_135 = arith.constant 0 : index
    %482 = vector.load %arg3[%c0_134, %c0_135] : memref<8x5xf32, #tpu.memory_space<vmem>>, vector<8x5xf32>
    %cst_136 = arith.constant dense<0.000000e+00> : vector<8x128xf32>
    %483 = tpu.matmul %482, %446, %cst_136 {dimension_numbers = #tpu.dot_dimension_numbers<[1], [0], [0], [1], [0, 0, 1, 1], [], []>} : vector<8x5xf32>, vector<5x128xf32>, vector<8x128xf32> -> vector<8x128xf32>
    %c0_137 = arith.constant 0 : index
    %c0_138 = arith.constant 0 : index
    %c0_139 = arith.constant 0 : index
    %484 = vector.load %arg4[%c0_137, %c0_138, %c0_139] : memref<5x8x5xf32, #tpu.memory_space<vmem>>, vector<1x8x5xf32>
    %485 = vector.shape_cast %484 : vector<1x8x5xf32> to vector<8x5xf32>
    %cst_140 = arith.constant dense<0.000000e+00> : vector<8x128xf32>
    %486 = tpu.matmul %485, %457, %cst_140 {dimension_numbers = #tpu.dot_dimension_numbers<[1], [0], [0], [1], [0, 0, 1, 1], [], []>} : vector<8x5xf32>, vector<5x128xf32>, vector<8x128xf32> -> vector<8x128xf32>
    %487 = arith.addf %483, %486 : vector<8x128xf32>
    %c1_141 = arith.constant 1 : index
    %c0_142 = arith.constant 0 : index
    %c0_143 = arith.constant 0 : index
    %488 = vector.load %arg4[%c1_141, %c0_142, %c0_143] : memref<5x8x5xf32, #tpu.memory_space<vmem>>, vector<1x8x5xf32>
    %489 = vector.shape_cast %488 : vector<1x8x5xf32> to vector<8x5xf32>
    %cst_144 = arith.constant dense<0.000000e+00> : vector<8x128xf32>
    %490 = tpu.matmul %489, %464, %cst_144 {dimension_numbers = #tpu.dot_dimension_numbers<[1], [0], [0], [1], [0, 0, 1, 1], [], []>} : vector<8x5xf32>, vector<5x128xf32>, vector<8x128xf32> -> vector<8x128xf32>
    %491 = arith.addf %487, %490 : vector<8x128xf32>
    %c2_145 = arith.constant 2 : index
    %c0_146 = arith.constant 0 : index
    %c0_147 = arith.constant 0 : index
    %492 = vector.load %arg4[%c2_145, %c0_146, %c0_147] : memref<5x8x5xf32, #tpu.memory_space<vmem>>, vector<1x8x5xf32>
    %493 = vector.shape_cast %492 : vector<1x8x5xf32> to vector<8x5xf32>
    %cst_148 = arith.constant dense<0.000000e+00> : vector<8x128xf32>
    %494 = tpu.matmul %493, %471, %cst_148 {dimension_numbers = #tpu.dot_dimension_numbers<[1], [0], [0], [1], [0, 0, 1, 1], [], []>} : vector<8x5xf32>, vector<5x128xf32>, vector<8x128xf32> -> vector<8x128xf32>
    %495 = arith.addf %491, %494 : vector<8x128xf32>
    %c3_149 = arith.constant 3 : index
    %c0_150 = arith.constant 0 : index
    %c0_151 = arith.constant 0 : index
    %496 = vector.load %arg4[%c3_149, %c0_150, %c0_151] : memref<5x8x5xf32, #tpu.memory_space<vmem>>, vector<1x8x5xf32>
    %497 = vector.shape_cast %496 : vector<1x8x5xf32> to vector<8x5xf32>
    %cst_152 = arith.constant dense<0.000000e+00> : vector<8x128xf32>
    %498 = tpu.matmul %497, %478, %cst_152 {dimension_numbers = #tpu.dot_dimension_numbers<[1], [0], [0], [1], [0, 0, 1, 1], [], []>} : vector<8x5xf32>, vector<5x128xf32>, vector<8x128xf32> -> vector<8x128xf32>
    %499 = arith.addf %495, %498 : vector<8x128xf32>
    %c4_153 = arith.constant 4 : index
    %c0_154 = arith.constant 0 : index
    %c0_155 = arith.constant 0 : index
    %500 = vector.load %arg4[%c4_153, %c0_154, %c0_155] : memref<5x8x5xf32, #tpu.memory_space<vmem>>, vector<1x8x5xf32>
    %501 = vector.shape_cast %500 : vector<1x8x5xf32> to vector<8x5xf32>
    %cst_156 = arith.constant dense<0.000000e+00> : vector<8x128xf32>
    %502 = tpu.matmul %501, %481, %cst_156 {dimension_numbers = #tpu.dot_dimension_numbers<[1], [0], [0], [1], [0, 0, 1, 1], [], []>} : vector<8x5xf32>, vector<5x128xf32>, vector<8x128xf32> -> vector<8x128xf32>
    %503 = arith.addf %499, %502 : vector<8x128xf32>
    %c0_157 = arith.constant 0 : index
    %c0_158 = arith.constant 0 : index
    %504 = vector.load %arg5[%c0_157, %c0_158] : memref<8x1xf32, #tpu.memory_space<vmem>>, vector<8x1xf32>
    %505 = vector.broadcast %504 : vector<8x1xf32> to vector<8x128xf32>
    %506 = arith.addf %503, %505 : vector<8x128xf32>
    %c1_159 = arith.constant 1 : index
    %c0_160 = arith.constant 0 : index
    %c0_161 = arith.constant 0 : index
    %507 = vector.load %arg6[%c1_159, %c0_160, %c0_161] : memref<4x8x128xf32, #tpu.memory_space<vmem>>, vector<1x8x128xf32>
    %508 = vector.shape_cast %507 : vector<1x8x128xf32> to vector<8x128xf32>
    %509 = vector.shape_cast %506 : vector<8x128xf32> to vector<1x8x128xf32>
    tpu.vector_store %arg6[%c1_159, %c0_160, %c0_161], %509 {strides = array<i32>} : memref<4x8x128xf32, #tpu.memory_space<vmem>>, vector<1x8x128xf32>,
    %c2_i32_162 = arith.constant 2 : i32
    %510 = arith.addi %21, %c2_i32_162 : i32
    %c7_i32_163 = arith.constant 7 : i32
    %511 = arith.minsi %510, %c7_i32_163 : i32
    %cst_164 = arith.constant 0.000000e+00 : f32
    %512 = vector.broadcast %cst_164 : f32 to vector<5x128xf32>
    %cst_165 = arith.constant 0.000000e+00 : f32
    %513 = vector.broadcast %cst_165 : f32 to vector<5x128xf32>
    %cst_166 = arith.constant 0.000000e+00 : f32
    %514 = vector.broadcast %cst_166 : f32 to vector<5x128xf32>
    %cst_167 = arith.constant 0.000000e+00 : f32
    %515 = vector.broadcast %cst_167 : f32 to vector<5x128xf32>
    %cst_168 = arith.constant 0.000000e+00 : f32
    %516 = vector.broadcast %cst_168 : f32 to vector<5x128xf32>
    %cst_169 = arith.constant 0.000000e+00 : f32
    %517 = vector.broadcast %cst_169 : f32 to vector<5x128xf32>
    %c0_i32_170 = arith.constant 0 : i32
    %518 = arith.addi %511, %c0_i32_170 : i32
    %519 = arith.index_cast %518 : i32 to index
    %c0_171 = arith.constant 0 : index
    %c0_172 = arith.constant 0 : index
    %520 = vector.load %arg2[%519, %c0_171, %c0_172] : memref<12x5x128xf32, #tpu.memory_space<vmem>>, vector<1x5x128xf32>
    %521 = vector.shape_cast %520 : vector<1x5x128xf32> to vector<5x128xf32>
    %522 = arith.subf %521, %512 : vector<5x128xf32>
    %523 = arith.addf %521, %512 : vector<5x128xf32>
    %cst_173 = arith.constant 5.000000e-01 : f32
    %524 = vector.broadcast %cst_173 : f32 to vector<5x128xf32>
    %525 = arith.mulf %524, %523 : vector<5x128xf32>
    %526 = vector.broadcast %8 : vector<5x1xf32> to vector<5x128xf32>
    %527 = arith.mulf %525, %526 : vector<5x128xf32>
    %cst_174 = arith.constant dense<0.000000e+00> : vector<128xf32>
    %528 = vector.multi_reduction <add>, %527, %cst_174 [0] : vector<5x128xf32> to vector<128xf32>
    %529 = vector.shape_cast %528 : vector<128xf32> to vector<1x128xf32>
    %530 = vector.broadcast %529 : vector<1x128xf32> to vector<5x128xf32>
    %531 = arith.mulf %530, %522 : vector<5x128xf32>
    %532 = arith.addf %513, %531 : vector<5x128xf32>
    %533 = vector.broadcast %12 : vector<5x1xf32> to vector<5x128xf32>
    %534 = arith.mulf %525, %533 : vector<5x128xf32>
    %cst_175 = arith.constant dense<0.000000e+00> : vector<128xf32>
    %535 = vector.multi_reduction <add>, %534, %cst_175 [0] : vector<5x128xf32> to vector<128xf32>
    %536 = vector.shape_cast %535 : vector<128xf32> to vector<1x128xf32>
    %537 = vector.broadcast %536 : vector<1x128xf32> to vector<5x128xf32>
    %538 = arith.mulf %537, %522 : vector<5x128xf32>
    %539 = arith.addf %514, %538 : vector<5x128xf32>
    %540 = vector.broadcast %16 : vector<5x1xf32> to vector<5x128xf32>
    %541 = arith.mulf %525, %540 : vector<5x128xf32>
    %cst_176 = arith.constant dense<0.000000e+00> : vector<128xf32>
    %542 = vector.multi_reduction <add>, %541, %cst_176 [0] : vector<5x128xf32> to vector<128xf32>
    %543 = vector.shape_cast %542 : vector<128xf32> to vector<1x128xf32>
    %544 = vector.broadcast %543 : vector<1x128xf32> to vector<5x128xf32>
    %545 = arith.mulf %544, %522 : vector<5x128xf32>
    %546 = arith.addf %515, %545 : vector<5x128xf32>
    %547 = vector.broadcast %20 : vector<5x1xf32> to vector<5x128xf32>
    %548 = arith.mulf %525, %547 : vector<5x128xf32>
    %cst_177 = arith.constant dense<0.000000e+00> : vector<128xf32>
    %549 = vector.multi_reduction <add>, %548, %cst_177 [0] : vector<5x128xf32> to vector<128xf32>
    %550 = vector.shape_cast %549 : vector<128xf32> to vector<1x128xf32>
    %551 = vector.broadcast %550 : vector<1x128xf32> to vector<5x128xf32>
    %552 = arith.mulf %551, %522 : vector<5x128xf32>
    %553 = arith.addf %516, %552 : vector<5x128xf32>
    %c1_i32_178 = arith.constant 1 : i32
    %554 = arith.addi %511, %c1_i32_178 : i32
    %555 = arith.index_cast %554 : i32 to index
    %c0_179 = arith.constant 0 : index
    %c0_180 = arith.constant 0 : index
    %556 = vector.load %arg2[%555, %c0_179, %c0_180] : memref<12x5x128xf32, #tpu.memory_space<vmem>>, vector<1x5x128xf32>
    %557 = vector.shape_cast %556 : vector<1x5x128xf32> to vector<5x128xf32>
    %cst_181 = arith.constant 2.500000e-01 : f32
    %558 = vector.broadcast %cst_181 : f32 to vector<5x1xf32>
    %559 = arith.mulf %558, %4 : vector<5x1xf32>
    %560 = vector.broadcast %559 : vector<5x1xf32> to vector<5x128xf32>
    %561 = arith.addf %557, %560 : vector<5x128xf32>
    %562 = arith.subf %561, %521 : vector<5x128xf32>
    %563 = arith.addf %561, %521 : vector<5x128xf32>
    %cst_182 = arith.constant 5.000000e-01 : f32
    %564 = vector.broadcast %cst_182 : f32 to vector<5x128xf32>
    %565 = arith.mulf %564, %563 : vector<5x128xf32>
    %566 = vector.broadcast %8 : vector<5x1xf32> to vector<5x128xf32>
    %567 = arith.mulf %565, %566 : vector<5x128xf32>
    %cst_183 = arith.constant dense<0.000000e+00> : vector<128xf32>
    %568 = vector.multi_reduction <add>, %567, %cst_183 [0] : vector<5x128xf32> to vector<128xf32>
    %569 = vector.shape_cast %568 : vector<128xf32> to vector<1x128xf32>
    %570 = vector.broadcast %569 : vector<1x128xf32> to vector<5x128xf32>
    %571 = arith.mulf %570, %562 : vector<5x128xf32>
    %572 = arith.addf %532, %571 : vector<5x128xf32>
    %573 = vector.broadcast %12 : vector<5x1xf32> to vector<5x128xf32>
    %574 = arith.mulf %565, %573 : vector<5x128xf32>
    %cst_184 = arith.constant dense<0.000000e+00> : vector<128xf32>
    %575 = vector.multi_reduction <add>, %574, %cst_184 [0] : vector<5x128xf32> to vector<128xf32>
    %576 = vector.shape_cast %575 : vector<128xf32> to vector<1x128xf32>
    %577 = vector.broadcast %576 : vector<1x128xf32> to vector<5x128xf32>
    %578 = arith.mulf %577, %562 : vector<5x128xf32>
    %579 = arith.addf %539, %578 : vector<5x128xf32>
    %580 = vector.broadcast %16 : vector<5x1xf32> to vector<5x128xf32>
    %581 = arith.mulf %565, %580 : vector<5x128xf32>
    %cst_185 = arith.constant dense<0.000000e+00> : vector<128xf32>
    %582 = vector.multi_reduction <add>, %581, %cst_185 [0] : vector<5x128xf32> to vector<128xf32>
    %583 = vector.shape_cast %582 : vector<128xf32> to vector<1x128xf32>
    %584 = vector.broadcast %583 : vector<1x128xf32> to vector<5x128xf32>
    %585 = arith.mulf %584, %562 : vector<5x128xf32>
    %586 = arith.addf %546, %585 : vector<5x128xf32>
    %587 = vector.broadcast %20 : vector<5x1xf32> to vector<5x128xf32>
    %588 = arith.mulf %565, %587 : vector<5x128xf32>
    %cst_186 = arith.constant dense<0.000000e+00> : vector<128xf32>
    %589 = vector.multi_reduction <add>, %588, %cst_186 [0] : vector<5x128xf32> to vector<128xf32>
    %590 = vector.shape_cast %589 : vector<128xf32> to vector<1x128xf32>
    %591 = vector.broadcast %590 : vector<1x128xf32> to vector<5x128xf32>
    %592 = arith.mulf %591, %562 : vector<5x128xf32>
    %593 = arith.addf %553, %592 : vector<5x128xf32>
    %cst_187 = arith.constant 1.250000e-01 : f32
    %594 = vector.broadcast %cst_187 : f32 to vector<5x128xf32>
    %595 = arith.mulf %594, %562 : vector<5x128xf32>
    %596 = arith.addf %517, %595 : vector<5x128xf32>
    %c2_i32_188 = arith.constant 2 : i32
    %597 = arith.addi %511, %c2_i32_188 : i32
    %598 = arith.index_cast %597 : i32 to index
    %c0_189 = arith.constant 0 : index
    %c0_190 = arith.constant 0 : index
    %599 = vector.load %arg2[%598, %c0_189, %c0_190] : memref<12x5x128xf32, #tpu.memory_space<vmem>>, vector<1x5x128xf32>
    %600 = vector.shape_cast %599 : vector<1x5x128xf32> to vector<5x128xf32>
    %cst_191 = arith.constant 5.000000e-01 : f32
    %601 = vector.broadcast %cst_191 : f32 to vector<5x1xf32>
    %602 = arith.mulf %601, %4 : vector<5x1xf32>
    %603 = vector.broadcast %602 : vector<5x1xf32> to vector<5x128xf32>
    %604 = arith.addf %600, %603 : vector<5x128xf32>
    %605 = arith.subf %604, %561 : vector<5x128xf32>
    %606 = arith.addf %604, %561 : vector<5x128xf32>
    %cst_192 = arith.constant 5.000000e-01 : f32
    %607 = vector.broadcast %cst_192 : f32 to vector<5x128xf32>
    %608 = arith.mulf %607, %606 : vector<5x128xf32>
    %609 = vector.broadcast %8 : vector<5x1xf32> to vector<5x128xf32>
    %610 = arith.mulf %608, %609 : vector<5x128xf32>
    %cst_193 = arith.constant dense<0.000000e+00> : vector<128xf32>
    %611 = vector.multi_reduction <add>, %610, %cst_193 [0] : vector<5x128xf32> to vector<128xf32>
    %612 = vector.shape_cast %611 : vector<128xf32> to vector<1x128xf32>
    %613 = vector.broadcast %612 : vector<1x128xf32> to vector<5x128xf32>
    %614 = arith.mulf %613, %605 : vector<5x128xf32>
    %615 = arith.addf %572, %614 : vector<5x128xf32>
    %616 = vector.broadcast %12 : vector<5x1xf32> to vector<5x128xf32>
    %617 = arith.mulf %608, %616 : vector<5x128xf32>
    %cst_194 = arith.constant dense<0.000000e+00> : vector<128xf32>
    %618 = vector.multi_reduction <add>, %617, %cst_194 [0] : vector<5x128xf32> to vector<128xf32>
    %619 = vector.shape_cast %618 : vector<128xf32> to vector<1x128xf32>
    %620 = vector.broadcast %619 : vector<1x128xf32> to vector<5x128xf32>
    %621 = arith.mulf %620, %605 : vector<5x128xf32>
    %622 = arith.addf %579, %621 : vector<5x128xf32>
    %623 = vector.broadcast %16 : vector<5x1xf32> to vector<5x128xf32>
    %624 = arith.mulf %608, %623 : vector<5x128xf32>
    %cst_195 = arith.constant dense<0.000000e+00> : vector<128xf32>
    %625 = vector.multi_reduction <add>, %624, %cst_195 [0] : vector<5x128xf32> to vector<128xf32>
    %626 = vector.shape_cast %625 : vector<128xf32> to vector<1x128xf32>
    %627 = vector.broadcast %626 : vector<1x128xf32> to vector<5x128xf32>
    %628 = arith.mulf %627, %605 : vector<5x128xf32>
    %629 = arith.addf %586, %628 : vector<5x128xf32>
    %630 = vector.broadcast %20 : vector<5x1xf32> to vector<5x128xf32>
    %631 = arith.mulf %608, %630 : vector<5x128xf32>
    %cst_196 = arith.constant dense<0.000000e+00> : vector<128xf32>
    %632 = vector.multi_reduction <add>, %631, %cst_196 [0] : vector<5x128xf32> to vector<128xf32>
    %633 = vector.shape_cast %632 : vector<128xf32> to vector<1x128xf32>
    %634 = vector.broadcast %633 : vector<1x128xf32> to vector<5x128xf32>
    %635 = arith.mulf %634, %605 : vector<5x128xf32>
    %636 = arith.addf %593, %635 : vector<5x128xf32>
    %cst_197 = arith.constant 3.750000e-01 : f32
    %637 = vector.broadcast %cst_197 : f32 to vector<5x128xf32>
    %638 = arith.mulf %637, %605 : vector<5x128xf32>
    %639 = arith.addf %596, %638 : vector<5x128xf32>
    %c3_i32_198 = arith.constant 3 : i32
    %640 = arith.addi %511, %c3_i32_198 : i32
    %641 = arith.index_cast %640 : i32 to index
    %c0_199 = arith.constant 0 : index
    %c0_200 = arith.constant 0 : index
    %642 = vector.load %arg2[%641, %c0_199, %c0_200] : memref<12x5x128xf32, #tpu.memory_space<vmem>>, vector<1x5x128xf32>
    %643 = vector.shape_cast %642 : vector<1x5x128xf32> to vector<5x128xf32>
    %cst_201 = arith.constant 7.500000e-01 : f32
    %644 = vector.broadcast %cst_201 : f32 to vector<5x1xf32>
    %645 = arith.mulf %644, %4 : vector<5x1xf32>
    %646 = vector.broadcast %645 : vector<5x1xf32> to vector<5x128xf32>
    %647 = arith.addf %643, %646 : vector<5x128xf32>
    %648 = arith.subf %647, %604 : vector<5x128xf32>
    %649 = arith.addf %647, %604 : vector<5x128xf32>
    %cst_202 = arith.constant 5.000000e-01 : f32
    %650 = vector.broadcast %cst_202 : f32 to vector<5x128xf32>
    %651 = arith.mulf %650, %649 : vector<5x128xf32>
    %652 = vector.broadcast %8 : vector<5x1xf32> to vector<5x128xf32>
    %653 = arith.mulf %651, %652 : vector<5x128xf32>
    %cst_203 = arith.constant dense<0.000000e+00> : vector<128xf32>
    %654 = vector.multi_reduction <add>, %653, %cst_203 [0] : vector<5x128xf32> to vector<128xf32>
    %655 = vector.shape_cast %654 : vector<128xf32> to vector<1x128xf32>
    %656 = vector.broadcast %655 : vector<1x128xf32> to vector<5x128xf32>
    %657 = arith.mulf %656, %648 : vector<5x128xf32>
    %658 = arith.addf %615, %657 : vector<5x128xf32>
    %659 = vector.broadcast %12 : vector<5x1xf32> to vector<5x128xf32>
    %660 = arith.mulf %651, %659 : vector<5x128xf32>
    %cst_204 = arith.constant dense<0.000000e+00> : vector<128xf32>
    %661 = vector.multi_reduction <add>, %660, %cst_204 [0] : vector<5x128xf32> to vector<128xf32>
    %662 = vector.shape_cast %661 : vector<128xf32> to vector<1x128xf32>
    %663 = vector.broadcast %662 : vector<1x128xf32> to vector<5x128xf32>
    %664 = arith.mulf %663, %648 : vector<5x128xf32>
    %665 = arith.addf %622, %664 : vector<5x128xf32>
    %666 = vector.broadcast %16 : vector<5x1xf32> to vector<5x128xf32>
    %667 = arith.mulf %651, %666 : vector<5x128xf32>
    %cst_205 = arith.constant dense<0.000000e+00> : vector<128xf32>
    %668 = vector.multi_reduction <add>, %667, %cst_205 [0] : vector<5x128xf32> to vector<128xf32>
    %669 = vector.shape_cast %668 : vector<128xf32> to vector<1x128xf32>
    %670 = vector.broadcast %669 : vector<1x128xf32> to vector<5x128xf32>
    %671 = arith.mulf %670, %648 : vector<5x128xf32>
    %672 = arith.addf %629, %671 : vector<5x128xf32>
    %673 = vector.broadcast %20 : vector<5x1xf32> to vector<5x128xf32>
    %674 = arith.mulf %651, %673 : vector<5x128xf32>
    %cst_206 = arith.constant dense<0.000000e+00> : vector<128xf32>
    %675 = vector.multi_reduction <add>, %674, %cst_206 [0] : vector<5x128xf32> to vector<128xf32>
    %676 = vector.shape_cast %675 : vector<128xf32> to vector<1x128xf32>
    %677 = vector.broadcast %676 : vector<1x128xf32> to vector<5x128xf32>
    %678 = arith.mulf %677, %648 : vector<5x128xf32>
    %679 = arith.addf %636, %678 : vector<5x128xf32>
    %cst_207 = arith.constant 6.250000e-01 : f32
    %680 = vector.broadcast %cst_207 : f32 to vector<5x128xf32>
    %681 = arith.mulf %680, %648 : vector<5x128xf32>
    %682 = arith.addf %639, %681 : vector<5x128xf32>
    %c4_i32_208 = arith.constant 4 : i32
    %683 = arith.addi %511, %c4_i32_208 : i32
    %684 = arith.index_cast %683 : i32 to index
    %c0_209 = arith.constant 0 : index
    %c0_210 = arith.constant 0 : index
    %685 = vector.load %arg2[%684, %c0_209, %c0_210] : memref<12x5x128xf32, #tpu.memory_space<vmem>>, vector<1x5x128xf32>
    %686 = vector.shape_cast %685 : vector<1x5x128xf32> to vector<5x128xf32>
    %cst_211 = arith.constant 1.000000e+00 : f32
    %687 = vector.broadcast %cst_211 : f32 to vector<5x1xf32>
    %688 = arith.mulf %687, %4 : vector<5x1xf32>
    %689 = vector.broadcast %688 : vector<5x1xf32> to vector<5x128xf32>
    %690 = arith.addf %686, %689 : vector<5x128xf32>
    %691 = arith.subf %690, %647 : vector<5x128xf32>
    %692 = arith.addf %690, %647 : vector<5x128xf32>
    %cst_212 = arith.constant 5.000000e-01 : f32
    %693 = vector.broadcast %cst_212 : f32 to vector<5x128xf32>
    %694 = arith.mulf %693, %692 : vector<5x128xf32>
    %695 = vector.broadcast %8 : vector<5x1xf32> to vector<5x128xf32>
    %696 = arith.mulf %694, %695 : vector<5x128xf32>
    %cst_213 = arith.constant dense<0.000000e+00> : vector<128xf32>
    %697 = vector.multi_reduction <add>, %696, %cst_213 [0] : vector<5x128xf32> to vector<128xf32>
    %698 = vector.shape_cast %697 : vector<128xf32> to vector<1x128xf32>
    %699 = vector.broadcast %698 : vector<1x128xf32> to vector<5x128xf32>
    %700 = arith.mulf %699, %691 : vector<5x128xf32>
    %701 = arith.addf %658, %700 : vector<5x128xf32>
    %702 = vector.broadcast %12 : vector<5x1xf32> to vector<5x128xf32>
    %703 = arith.mulf %694, %702 : vector<5x128xf32>
    %cst_214 = arith.constant dense<0.000000e+00> : vector<128xf32>
    %704 = vector.multi_reduction <add>, %703, %cst_214 [0] : vector<5x128xf32> to vector<128xf32>
    %705 = vector.shape_cast %704 : vector<128xf32> to vector<1x128xf32>
    %706 = vector.broadcast %705 : vector<1x128xf32> to vector<5x128xf32>
    %707 = arith.mulf %706, %691 : vector<5x128xf32>
    %708 = arith.addf %665, %707 : vector<5x128xf32>
    %709 = vector.broadcast %16 : vector<5x1xf32> to vector<5x128xf32>
    %710 = arith.mulf %694, %709 : vector<5x128xf32>
    %cst_215 = arith.constant dense<0.000000e+00> : vector<128xf32>
    %711 = vector.multi_reduction <add>, %710, %cst_215 [0] : vector<5x128xf32> to vector<128xf32>
    %712 = vector.shape_cast %711 : vector<128xf32> to vector<1x128xf32>
    %713 = vector.broadcast %712 : vector<1x128xf32> to vector<5x128xf32>
    %714 = arith.mulf %713, %691 : vector<5x128xf32>
    %715 = arith.addf %672, %714 : vector<5x128xf32>
    %716 = vector.broadcast %20 : vector<5x1xf32> to vector<5x128xf32>
    %717 = arith.mulf %694, %716 : vector<5x128xf32>
    %cst_216 = arith.constant dense<0.000000e+00> : vector<128xf32>
    %718 = vector.multi_reduction <add>, %717, %cst_216 [0] : vector<5x128xf32> to vector<128xf32>
    %719 = vector.shape_cast %718 : vector<128xf32> to vector<1x128xf32>
    %720 = vector.broadcast %719 : vector<1x128xf32> to vector<5x128xf32>
    %721 = arith.mulf %720, %691 : vector<5x128xf32>
    %722 = arith.addf %679, %721 : vector<5x128xf32>
    %cst_217 = arith.constant 8.750000e-01 : f32
    %723 = vector.broadcast %cst_217 : f32 to vector<5x128xf32>
    %724 = arith.mulf %723, %691 : vector<5x128xf32>
    %725 = arith.addf %682, %724 : vector<5x128xf32>
    %c0_218 = arith.constant 0 : index
    %c0_219 = arith.constant 0 : index
    %726 = vector.load %arg3[%c0_218, %c0_219] : memref<8x5xf32, #tpu.memory_space<vmem>>, vector<8x5xf32>
    %cst_220 = arith.constant dense<0.000000e+00> : vector<8x128xf32>
    %727 = tpu.matmul %726, %690, %cst_220 {dimension_numbers = #tpu.dot_dimension_numbers<[1], [0], [0], [1], [0, 0, 1, 1], [], []>} : vector<8x5xf32>, vector<5x128xf32>, vector<8x128xf32> -> vector<8x128xf32>
    %c0_221 = arith.constant 0 : index
    %c0_222 = arith.constant 0 : index
    %c0_223 = arith.constant 0 : index
    %728 = vector.load %arg4[%c0_221, %c0_222, %c0_223] : memref<5x8x5xf32, #tpu.memory_space<vmem>>, vector<1x8x5xf32>
    %729 = vector.shape_cast %728 : vector<1x8x5xf32> to vector<8x5xf32>
    %cst_224 = arith.constant dense<0.000000e+00> : vector<8x128xf32>
    %730 = tpu.matmul %729, %701, %cst_224 {dimension_numbers = #tpu.dot_dimension_numbers<[1], [0], [0], [1], [0, 0, 1, 1], [], []>} : vector<8x5xf32>, vector<5x128xf32>, vector<8x128xf32> -> vector<8x128xf32>
    %731 = arith.addf %727, %730 : vector<8x128xf32>
    %c1_225 = arith.constant 1 : index
    %c0_226 = arith.constant 0 : index
    %c0_227 = arith.constant 0 : index
    %732 = vector.load %arg4[%c1_225, %c0_226, %c0_227] : memref<5x8x5xf32, #tpu.memory_space<vmem>>, vector<1x8x5xf32>
    %733 = vector.shape_cast %732 : vector<1x8x5xf32> to vector<8x5xf32>
    %cst_228 = arith.constant dense<0.000000e+00> : vector<8x128xf32>
    %734 = tpu.matmul %733, %708, %cst_228 {dimension_numbers = #tpu.dot_dimension_numbers<[1], [0], [0], [1], [0, 0, 1, 1], [], []>} : vector<8x5xf32>, vector<5x128xf32>, vector<8x128xf32> -> vector<8x128xf32>
    %735 = arith.addf %731, %734 : vector<8x128xf32>
    %c2_229 = arith.constant 2 : index
    %c0_230 = arith.constant 0 : index
    %c0_231 = arith.constant 0 : index
    %736 = vector.load %arg4[%c2_229, %c0_230, %c0_231] : memref<5x8x5xf32, #tpu.memory_space<vmem>>, vector<1x8x5xf32>
    %737 = vector.shape_cast %736 : vector<1x8x5xf32> to vector<8x5xf32>
    %cst_232 = arith.constant dense<0.000000e+00> : vector<8x128xf32>
    %738 = tpu.matmul %737, %715, %cst_232 {dimension_numbers = #tpu.dot_dimension_numbers<[1], [0], [0], [1], [0, 0, 1, 1], [], []>} : vector<8x5xf32>, vector<5x128xf32>, vector<8x128xf32> -> vector<8x128xf32>
    %739 = arith.addf %735, %738 : vector<8x128xf32>
    %c3_233 = arith.constant 3 : index
    %c0_234 = arith.constant 0 : index
    %c0_235 = arith.constant 0 : index
    %740 = vector.load %arg4[%c3_233, %c0_234, %c0_235] : memref<5x8x5xf32, #tpu.memory_space<vmem>>, vector<1x8x5xf32>
    %741 = vector.shape_cast %740 : vector<1x8x5xf32> to vector<8x5xf32>
    %cst_236 = arith.constant dense<0.000000e+00> : vector<8x128xf32>
    %742 = tpu.matmul %741, %722, %cst_236 {dimension_numbers = #tpu.dot_dimension_numbers<[1], [0], [0], [1], [0, 0, 1, 1], [], []>} : vector<8x5xf32>, vector<5x128xf32>, vector<8x128xf32> -> vector<8x128xf32>
    %743 = arith.addf %739, %742 : vector<8x128xf32>
    %c4_237 = arith.constant 4 : index
    %c0_238 = arith.constant 0 : index
    %c0_239 = arith.constant 0 : index
    %744 = vector.load %arg4[%c4_237, %c0_238, %c0_239] : memref<5x8x5xf32, #tpu.memory_space<vmem>>, vector<1x8x5xf32>
    %745 = vector.shape_cast %744 : vector<1x8x5xf32> to vector<8x5xf32>
    %cst_240 = arith.constant dense<0.000000e+00> : vector<8x128xf32>
    %746 = tpu.matmul %745, %725, %cst_240 {dimension_numbers = #tpu.dot_dimension_numbers<[1], [0], [0], [1], [0, 0, 1, 1], [], []>} : vector<8x5xf32>, vector<5x128xf32>, vector<8x128xf32> -> vector<8x128xf32>
    %747 = arith.addf %743, %746 : vector<8x128xf32>
    %c0_241 = arith.constant 0 : index
    %c0_242 = arith.constant 0 : index
    %748 = vector.load %arg5[%c0_241, %c0_242] : memref<8x1xf32, #tpu.memory_space<vmem>>, vector<8x1xf32>
    %749 = vector.broadcast %748 : vector<8x1xf32> to vector<8x128xf32>
    %750 = arith.addf %747, %749 : vector<8x128xf32>
    %c2_243 = arith.constant 2 : index
    %c0_244 = arith.constant 0 : index
    %c0_245 = arith.constant 0 : index
    %751 = vector.load %arg6[%c2_243, %c0_244, %c0_245] : memref<4x8x128xf32, #tpu.memory_space<vmem>>, vector<1x8x128xf32>
    %752 = vector.shape_cast %751 : vector<1x8x128xf32> to vector<8x128xf32>
    %753 = vector.shape_cast %750 : vector<8x128xf32> to vector<1x8x128xf32>
    tpu.vector_store %arg6[%c2_243, %c0_244, %c0_245], %753 {strides = array<i32>} : memref<4x8x128xf32, #tpu.memory_space<vmem>>, vector<1x8x128xf32>,
    %c3_i32_246 = arith.constant 3 : i32
    %754 = arith.addi %21, %c3_i32_246 : i32
    %c7_i32_247 = arith.constant 7 : i32
    %755 = arith.minsi %754, %c7_i32_247 : i32
    %cst_248 = arith.constant 0.000000e+00 : f32
    %756 = vector.broadcast %cst_248 : f32 to vector<5x128xf32>
    %cst_249 = arith.constant 0.000000e+00 : f32
    %757 = vector.broadcast %cst_249 : f32 to vector<5x128xf32>
    %cst_250 = arith.constant 0.000000e+00 : f32
    %758 = vector.broadcast %cst_250 : f32 to vector<5x128xf32>
    %cst_251 = arith.constant 0.000000e+00 : f32
    %759 = vector.broadcast %cst_251 : f32 to vector<5x128xf32>
    %cst_252 = arith.constant 0.000000e+00 : f32
    %760 = vector.broadcast %cst_252 : f32 to vector<5x128xf32>
    %cst_253 = arith.constant 0.000000e+00 : f32
    %761 = vector.broadcast %cst_253 : f32 to vector<5x128xf32>
    %c0_i32_254 = arith.constant 0 : i32
    %762 = arith.addi %755, %c0_i32_254 : i32
    %763 = arith.index_cast %762 : i32 to index
    %c0_255 = arith.constant 0 : index
    %c0_256 = arith.constant 0 : index
    %764 = vector.load %arg2[%763, %c0_255, %c0_256] : memref<12x5x128xf32, #tpu.memory_space<vmem>>, vector<1x5x128xf32>
    %765 = vector.shape_cast %764 : vector<1x5x128xf32> to vector<5x128xf32>
    %766 = arith.subf %765, %756 : vector<5x128xf32>
    %767 = arith.addf %765, %756 : vector<5x128xf32>
    %cst_257 = arith.constant 5.000000e-01 : f32
    %768 = vector.broadcast %cst_257 : f32 to vector<5x128xf32>
    %769 = arith.mulf %768, %767 : vector<5x128xf32>
    %770 = vector.broadcast %8 : vector<5x1xf32> to vector<5x128xf32>
    %771 = arith.mulf %769, %770 : vector<5x128xf32>
    %cst_258 = arith.constant dense<0.000000e+00> : vector<128xf32>
    %772 = vector.multi_reduction <add>, %771, %cst_258 [0] : vector<5x128xf32> to vector<128xf32>
    %773 = vector.shape_cast %772 : vector<128xf32> to vector<1x128xf32>
    %774 = vector.broadcast %773 : vector<1x128xf32> to vector<5x128xf32>
    %775 = arith.mulf %774, %766 : vector<5x128xf32>
    %776 = arith.addf %757, %775 : vector<5x128xf32>
    %777 = vector.broadcast %12 : vector<5x1xf32> to vector<5x128xf32>
    %778 = arith.mulf %769, %777 : vector<5x128xf32>
    %cst_259 = arith.constant dense<0.000000e+00> : vector<128xf32>
    %779 = vector.multi_reduction <add>, %778, %cst_259 [0] : vector<5x128xf32> to vector<128xf32>
    %780 = vector.shape_cast %779 : vector<128xf32> to vector<1x128xf32>
    %781 = vector.broadcast %780 : vector<1x128xf32> to vector<5x128xf32>
    %782 = arith.mulf %781, %766 : vector<5x128xf32>
    %783 = arith.addf %758, %782 : vector<5x128xf32>
    %784 = vector.broadcast %16 : vector<5x1xf32> to vector<5x128xf32>
    %785 = arith.mulf %769, %784 : vector<5x128xf32>
    %cst_260 = arith.constant dense<0.000000e+00> : vector<128xf32>
    %786 = vector.multi_reduction <add>, %785, %cst_260 [0] : vector<5x128xf32> to vector<128xf32>
    %787 = vector.shape_cast %786 : vector<128xf32> to vector<1x128xf32>
    %788 = vector.broadcast %787 : vector<1x128xf32> to vector<5x128xf32>
    %789 = arith.mulf %788, %766 : vector<5x128xf32>
    %790 = arith.addf %759, %789 : vector<5x128xf32>
    %791 = vector.broadcast %20 : vector<5x1xf32> to vector<5x128xf32>
    %792 = arith.mulf %769, %791 : vector<5x128xf32>
    %cst_261 = arith.constant dense<0.000000e+00> : vector<128xf32>
    %793 = vector.multi_reduction <add>, %792, %cst_261 [0] : vector<5x128xf32> to vector<128xf32>
    %794 = vector.shape_cast %793 : vector<128xf32> to vector<1x128xf32>
    %795 = vector.broadcast %794 : vector<1x128xf32> to vector<5x128xf32>
    %796 = arith.mulf %795, %766 : vector<5x128xf32>
    %797 = arith.addf %760, %796 : vector<5x128xf32>
    %c1_i32_262 = arith.constant 1 : i32
    %798 = arith.addi %755, %c1_i32_262 : i32
    %799 = arith.index_cast %798 : i32 to index
    %c0_263 = arith.constant 0 : index
    %c0_264 = arith.constant 0 : index
    %800 = vector.load %arg2[%799, %c0_263, %c0_264] : memref<12x5x128xf32, #tpu.memory_space<vmem>>, vector<1x5x128xf32>
    %801 = vector.shape_cast %800 : vector<1x5x128xf32> to vector<5x128xf32>
    %cst_265 = arith.constant 2.500000e-01 : f32
    %802 = vector.broadcast %cst_265 : f32 to vector<5x1xf32>
    %803 = arith.mulf %802, %4 : vector<5x1xf32>
    %804 = vector.broadcast %803 : vector<5x1xf32> to vector<5x128xf32>
    %805 = arith.addf %801, %804 : vector<5x128xf32>
    %806 = arith.subf %805, %765 : vector<5x128xf32>
    %807 = arith.addf %805, %765 : vector<5x128xf32>
    %cst_266 = arith.constant 5.000000e-01 : f32
    %808 = vector.broadcast %cst_266 : f32 to vector<5x128xf32>
    %809 = arith.mulf %808, %807 : vector<5x128xf32>
    %810 = vector.broadcast %8 : vector<5x1xf32> to vector<5x128xf32>
    %811 = arith.mulf %809, %810 : vector<5x128xf32>
    %cst_267 = arith.constant dense<0.000000e+00> : vector<128xf32>
    %812 = vector.multi_reduction <add>, %811, %cst_267 [0] : vector<5x128xf32> to vector<128xf32>
    %813 = vector.shape_cast %812 : vector<128xf32> to vector<1x128xf32>
    %814 = vector.broadcast %813 : vector<1x128xf32> to vector<5x128xf32>
    %815 = arith.mulf %814, %806 : vector<5x128xf32>
    %816 = arith.addf %776, %815 : vector<5x128xf32>
    %817 = vector.broadcast %12 : vector<5x1xf32> to vector<5x128xf32>
    %818 = arith.mulf %809, %817 : vector<5x128xf32>
    %cst_268 = arith.constant dense<0.000000e+00> : vector<128xf32>
    %819 = vector.multi_reduction <add>, %818, %cst_268 [0] : vector<5x128xf32> to vector<128xf32>
    %820 = vector.shape_cast %819 : vector<128xf32> to vector<1x128xf32>
    %821 = vector.broadcast %820 : vector<1x128xf32> to vector<5x128xf32>
    %822 = arith.mulf %821, %806 : vector<5x128xf32>
    %823 = arith.addf %783, %822 : vector<5x128xf32>
    %824 = vector.broadcast %16 : vector<5x1xf32> to vector<5x128xf32>
    %825 = arith.mulf %809, %824 : vector<5x128xf32>
    %cst_269 = arith.constant dense<0.000000e+00> : vector<128xf32>
    %826 = vector.multi_reduction <add>, %825, %cst_269 [0] : vector<5x128xf32> to vector<128xf32>
    %827 = vector.shape_cast %826 : vector<128xf32> to vector<1x128xf32>
    %828 = vector.broadcast %827 : vector<1x128xf32> to vector<5x128xf32>
    %829 = arith.mulf %828, %806 : vector<5x128xf32>
    %830 = arith.addf %790, %829 : vector<5x128xf32>
    %831 = vector.broadcast %20 : vector<5x1xf32> to vector<5x128xf32>
    %832 = arith.mulf %809, %831 : vector<5x128xf32>
    %cst_270 = arith.constant dense<0.000000e+00> : vector<128xf32>
    %833 = vector.multi_reduction <add>, %832, %cst_270 [0] : vector<5x128xf32> to vector<128xf32>
    %834 = vector.shape_cast %833 : vector<128xf32> to vector<1x128xf32>
    %835 = vector.broadcast %834 : vector<1x128xf32> to vector<5x128xf32>
    %836 = arith.mulf %835, %806 : vector<5x128xf32>
    %837 = arith.addf %797, %836 : vector<5x128xf32>
    %cst_271 = arith.constant 1.250000e-01 : f32
    %838 = vector.broadcast %cst_271 : f32 to vector<5x128xf32>
    %839 = arith.mulf %838, %806 : vector<5x128xf32>
    %840 = arith.addf %761, %839 : vector<5x128xf32>
    %c2_i32_272 = arith.constant 2 : i32
    %841 = arith.addi %755, %c2_i32_272 : i32
    %842 = arith.index_cast %841 : i32 to index
    %c0_273 = arith.constant 0 : index
    %c0_274 = arith.constant 0 : index
    %843 = vector.load %arg2[%842, %c0_273, %c0_274] : memref<12x5x128xf32, #tpu.memory_space<vmem>>, vector<1x5x128xf32>
    %844 = vector.shape_cast %843 : vector<1x5x128xf32> to vector<5x128xf32>
    %cst_275 = arith.constant 5.000000e-01 : f32
    %845 = vector.broadcast %cst_275 : f32 to vector<5x1xf32>
    %846 = arith.mulf %845, %4 : vector<5x1xf32>
    %847 = vector.broadcast %846 : vector<5x1xf32> to vector<5x128xf32>
    %848 = arith.addf %844, %847 : vector<5x128xf32>
    %849 = arith.subf %848, %805 : vector<5x128xf32>
    %850 = arith.addf %848, %805 : vector<5x128xf32>
    %cst_276 = arith.constant 5.000000e-01 : f32
    %851 = vector.broadcast %cst_276 : f32 to vector<5x128xf32>
    %852 = arith.mulf %851, %850 : vector<5x128xf32>
    %853 = vector.broadcast %8 : vector<5x1xf32> to vector<5x128xf32>
    %854 = arith.mulf %852, %853 : vector<5x128xf32>
    %cst_277 = arith.constant dense<0.000000e+00> : vector<128xf32>
    %855 = vector.multi_reduction <add>, %854, %cst_277 [0] : vector<5x128xf32> to vector<128xf32>
    %856 = vector.shape_cast %855 : vector<128xf32> to vector<1x128xf32>
    %857 = vector.broadcast %856 : vector<1x128xf32> to vector<5x128xf32>
    %858 = arith.mulf %857, %849 : vector<5x128xf32>
    %859 = arith.addf %816, %858 : vector<5x128xf32>
    %860 = vector.broadcast %12 : vector<5x1xf32> to vector<5x128xf32>
    %861 = arith.mulf %852, %860 : vector<5x128xf32>
    %cst_278 = arith.constant dense<0.000000e+00> : vector<128xf32>
    %862 = vector.multi_reduction <add>, %861, %cst_278 [0] : vector<5x128xf32> to vector<128xf32>
    %863 = vector.shape_cast %862 : vector<128xf32> to vector<1x128xf32>
    %864 = vector.broadcast %863 : vector<1x128xf32> to vector<5x128xf32>
    %865 = arith.mulf %864, %849 : vector<5x128xf32>
    %866 = arith.addf %823, %865 : vector<5x128xf32>
    %867 = vector.broadcast %16 : vector<5x1xf32> to vector<5x128xf32>
    %868 = arith.mulf %852, %867 : vector<5x128xf32>
    %cst_279 = arith.constant dense<0.000000e+00> : vector<128xf32>
    %869 = vector.multi_reduction <add>, %868, %cst_279 [0] : vector<5x128xf32> to vector<128xf32>
    %870 = vector.shape_cast %869 : vector<128xf32> to vector<1x128xf32>
    %871 = vector.broadcast %870 : vector<1x128xf32> to vector<5x128xf32>
    %872 = arith.mulf %871, %849 : vector<5x128xf32>
    %873 = arith.addf %830, %872 : vector<5x128xf32>
    %874 = vector.broadcast %20 : vector<5x1xf32> to vector<5x128xf32>
    %875 = arith.mulf %852, %874 : vector<5x128xf32>
    %cst_280 = arith.constant dense<0.000000e+00> : vector<128xf32>
    %876 = vector.multi_reduction <add>, %875, %cst_280 [0] : vector<5x128xf32> to vector<128xf32>
    %877 = vector.shape_cast %876 : vector<128xf32> to vector<1x128xf32>
    %878 = vector.broadcast %877 : vector<1x128xf32> to vector<5x128xf32>
    %879 = arith.mulf %878, %849 : vector<5x128xf32>
    %880 = arith.addf %837, %879 : vector<5x128xf32>
    %cst_281 = arith.constant 3.750000e-01 : f32
    %881 = vector.broadcast %cst_281 : f32 to vector<5x128xf32>
    %882 = arith.mulf %881, %849 : vector<5x128xf32>
    %883 = arith.addf %840, %882 : vector<5x128xf32>
    %c3_i32_282 = arith.constant 3 : i32
    %884 = arith.addi %755, %c3_i32_282 : i32
    %885 = arith.index_cast %884 : i32 to index
    %c0_283 = arith.constant 0 : index
    %c0_284 = arith.constant 0 : index
    %886 = vector.load %arg2[%885, %c0_283, %c0_284] : memref<12x5x128xf32, #tpu.memory_space<vmem>>, vector<1x5x128xf32>
    %887 = vector.shape_cast %886 : vector<1x5x128xf32> to vector<5x128xf32>
    %cst_285 = arith.constant 7.500000e-01 : f32
    %888 = vector.broadcast %cst_285 : f32 to vector<5x1xf32>
    %889 = arith.mulf %888, %4 : vector<5x1xf32>
    %890 = vector.broadcast %889 : vector<5x1xf32> to vector<5x128xf32>
    %891 = arith.addf %887, %890 : vector<5x128xf32>
    %892 = arith.subf %891, %848 : vector<5x128xf32>
    %893 = arith.addf %891, %848 : vector<5x128xf32>
    %cst_286 = arith.constant 5.000000e-01 : f32
    %894 = vector.broadcast %cst_286 : f32 to vector<5x128xf32>
    %895 = arith.mulf %894, %893 : vector<5x128xf32>
    %896 = vector.broadcast %8 : vector<5x1xf32> to vector<5x128xf32>
    %897 = arith.mulf %895, %896 : vector<5x128xf32>
    %cst_287 = arith.constant dense<0.000000e+00> : vector<128xf32>
    %898 = vector.multi_reduction <add>, %897, %cst_287 [0] : vector<5x128xf32> to vector<128xf32>
    %899 = vector.shape_cast %898 : vector<128xf32> to vector<1x128xf32>
    %900 = vector.broadcast %899 : vector<1x128xf32> to vector<5x128xf32>
    %901 = arith.mulf %900, %892 : vector<5x128xf32>
    %902 = arith.addf %859, %901 : vector<5x128xf32>
    %903 = vector.broadcast %12 : vector<5x1xf32> to vector<5x128xf32>
    %904 = arith.mulf %895, %903 : vector<5x128xf32>
    %cst_288 = arith.constant dense<0.000000e+00> : vector<128xf32>
    %905 = vector.multi_reduction <add>, %904, %cst_288 [0] : vector<5x128xf32> to vector<128xf32>
    %906 = vector.shape_cast %905 : vector<128xf32> to vector<1x128xf32>
    %907 = vector.broadcast %906 : vector<1x128xf32> to vector<5x128xf32>
    %908 = arith.mulf %907, %892 : vector<5x128xf32>
    %909 = arith.addf %866, %908 : vector<5x128xf32>
    %910 = vector.broadcast %16 : vector<5x1xf32> to vector<5x128xf32>
    %911 = arith.mulf %895, %910 : vector<5x128xf32>
    %cst_289 = arith.constant dense<0.000000e+00> : vector<128xf32>
    %912 = vector.multi_reduction <add>, %911, %cst_289 [0] : vector<5x128xf32> to vector<128xf32>
    %913 = vector.shape_cast %912 : vector<128xf32> to vector<1x128xf32>
    %914 = vector.broadcast %913 : vector<1x128xf32> to vector<5x128xf32>
    %915 = arith.mulf %914, %892 : vector<5x128xf32>
    %916 = arith.addf %873, %915 : vector<5x128xf32>
    %917 = vector.broadcast %20 : vector<5x1xf32> to vector<5x128xf32>
    %918 = arith.mulf %895, %917 : vector<5x128xf32>
    %cst_290 = arith.constant dense<0.000000e+00> : vector<128xf32>
    %919 = vector.multi_reduction <add>, %918, %cst_290 [0] : vector<5x128xf32> to vector<128xf32>
    %920 = vector.shape_cast %919 : vector<128xf32> to vector<1x128xf32>
    %921 = vector.broadcast %920 : vector<1x128xf32> to vector<5x128xf32>
    %922 = arith.mulf %921, %892 : vector<5x128xf32>
    %923 = arith.addf %880, %922 : vector<5x128xf32>
    %cst_291 = arith.constant 6.250000e-01 : f32
    %924 = vector.broadcast %cst_291 : f32 to vector<5x128xf32>
    %925 = arith.mulf %924, %892 : vector<5x128xf32>
    %926 = arith.addf %883, %925 : vector<5x128xf32>
    %c4_i32_292 = arith.constant 4 : i32
    %927 = arith.addi %755, %c4_i32_292 : i32
    %928 = arith.index_cast %927 : i32 to index
    %c0_293 = arith.constant 0 : index
    %c0_294 = arith.constant 0 : index
    %929 = vector.load %arg2[%928, %c0_293, %c0_294] : memref<12x5x128xf32, #tpu.memory_space<vmem>>, vector<1x5x128xf32>
    %930 = vector.shape_cast %929 : vector<1x5x128xf32> to vector<5x128xf32>
    %cst_295 = arith.constant 1.000000e+00 : f32
    %931 = vector.broadcast %cst_295 : f32 to vector<5x1xf32>
    %932 = arith.mulf %931, %4 : vector<5x1xf32>
    %933 = vector.broadcast %932 : vector<5x1xf32> to vector<5x128xf32>
    %934 = arith.addf %930, %933 : vector<5x128xf32>
    %935 = arith.subf %934, %891 : vector<5x128xf32>
    %936 = arith.addf %934, %891 : vector<5x128xf32>
    %cst_296 = arith.constant 5.000000e-01 : f32
    %937 = vector.broadcast %cst_296 : f32 to vector<5x128xf32>
    %938 = arith.mulf %937, %936 : vector<5x128xf32>
    %939 = vector.broadcast %8 : vector<5x1xf32> to vector<5x128xf32>
    %940 = arith.mulf %938, %939 : vector<5x128xf32>
    %cst_297 = arith.constant dense<0.000000e+00> : vector<128xf32>
    %941 = vector.multi_reduction <add>, %940, %cst_297 [0] : vector<5x128xf32> to vector<128xf32>
    %942 = vector.shape_cast %941 : vector<128xf32> to vector<1x128xf32>
    %943 = vector.broadcast %942 : vector<1x128xf32> to vector<5x128xf32>
    %944 = arith.mulf %943, %935 : vector<5x128xf32>
    %945 = arith.addf %902, %944 : vector<5x128xf32>
    %946 = vector.broadcast %12 : vector<5x1xf32> to vector<5x128xf32>
    %947 = arith.mulf %938, %946 : vector<5x128xf32>
    %cst_298 = arith.constant dense<0.000000e+00> : vector<128xf32>
    %948 = vector.multi_reduction <add>, %947, %cst_298 [0] : vector<5x128xf32> to vector<128xf32>
    %949 = vector.shape_cast %948 : vector<128xf32> to vector<1x128xf32>
    %950 = vector.broadcast %949 : vector<1x128xf32> to vector<5x128xf32>
    %951 = arith.mulf %950, %935 : vector<5x128xf32>
    %952 = arith.addf %909, %951 : vector<5x128xf32>
    %953 = vector.broadcast %16 : vector<5x1xf32> to vector<5x128xf32>
    %954 = arith.mulf %938, %953 : vector<5x128xf32>
    %cst_299 = arith.constant dense<0.000000e+00> : vector<128xf32>
    %955 = vector.multi_reduction <add>, %954, %cst_299 [0] : vector<5x128xf32> to vector<128xf32>
    %956 = vector.shape_cast %955 : vector<128xf32> to vector<1x128xf32>
    %957 = vector.broadcast %956 : vector<1x128xf32> to vector<5x128xf32>
    %958 = arith.mulf %957, %935 : vector<5x128xf32>
    %959 = arith.addf %916, %958 : vector<5x128xf32>
    %960 = vector.broadcast %20 : vector<5x1xf32> to vector<5x128xf32>
    %961 = arith.mulf %938, %960 : vector<5x128xf32>
    %cst_300 = arith.constant dense<0.000000e+00> : vector<128xf32>
    %962 = vector.multi_reduction <add>, %961, %cst_300 [0] : vector<5x128xf32> to vector<128xf32>
    %963 = vector.shape_cast %962 : vector<128xf32> to vector<1x128xf32>
    %964 = vector.broadcast %963 : vector<1x128xf32> to vector<5x128xf32>
    %965 = arith.mulf %964, %935 : vector<5x128xf32>
    %966 = arith.addf %923, %965 : vector<5x128xf32>
    %cst_301 = arith.constant 8.750000e-01 : f32
    %967 = vector.broadcast %cst_301 : f32 to vector<5x128xf32>
    %968 = arith.mulf %967, %935 : vector<5x128xf32>
    %969 = arith.addf %926, %968 : vector<5x128xf32>
    %c0_302 = arith.constant 0 : index
    %c0_303 = arith.constant 0 : index
    %970 = vector.load %arg3[%c0_302, %c0_303] : memref<8x5xf32, #tpu.memory_space<vmem>>, vector<8x5xf32>
    %cst_304 = arith.constant dense<0.000000e+00> : vector<8x128xf32>
    %971 = tpu.matmul %970, %934, %cst_304 {dimension_numbers = #tpu.dot_dimension_numbers<[1], [0], [0], [1], [0, 0, 1, 1], [], []>} : vector<8x5xf32>, vector<5x128xf32>, vector<8x128xf32> -> vector<8x128xf32>
    %c0_305 = arith.constant 0 : index
    %c0_306 = arith.constant 0 : index
    %c0_307 = arith.constant 0 : index
    %972 = vector.load %arg4[%c0_305, %c0_306, %c0_307] : memref<5x8x5xf32, #tpu.memory_space<vmem>>, vector<1x8x5xf32>
    %973 = vector.shape_cast %972 : vector<1x8x5xf32> to vector<8x5xf32>
    %cst_308 = arith.constant dense<0.000000e+00> : vector<8x128xf32>
    %974 = tpu.matmul %973, %945, %cst_308 {dimension_numbers = #tpu.dot_dimension_numbers<[1], [0], [0], [1], [0, 0, 1, 1], [], []>} : vector<8x5xf32>, vector<5x128xf32>, vector<8x128xf32> -> vector<8x128xf32>
    %975 = arith.addf %971, %974 : vector<8x128xf32>
    %c1_309 = arith.constant 1 : index
    %c0_310 = arith.constant 0 : index
    %c0_311 = arith.constant 0 : index
    %976 = vector.load %arg4[%c1_309, %c0_310, %c0_311] : memref<5x8x5xf32, #tpu.memory_space<vmem>>, vector<1x8x5xf32>
    %977 = vector.shape_cast %976 : vector<1x8x5xf32> to vector<8x5xf32>
    %cst_312 = arith.constant dense<0.000000e+00> : vector<8x128xf32>
    %978 = tpu.matmul %977, %952, %cst_312 {dimension_numbers = #tpu.dot_dimension_numbers<[1], [0], [0], [1], [0, 0, 1, 1], [], []>} : vector<8x5xf32>, vector<5x128xf32>, vector<8x128xf32> -> vector<8x128xf32>
    %979 = arith.addf %975, %978 : vector<8x128xf32>
    %c2_313 = arith.constant 2 : index
    %c0_314 = arith.constant 0 : index
    %c0_315 = arith.constant 0 : index
    %980 = vector.load %arg4[%c2_313, %c0_314, %c0_315] : memref<5x8x5xf32, #tpu.memory_space<vmem>>, vector<1x8x5xf32>
    %981 = vector.shape_cast %980 : vector<1x8x5xf32> to vector<8x5xf32>
    %cst_316 = arith.constant dense<0.000000e+00> : vector<8x128xf32>
    %982 = tpu.matmul %981, %959, %cst_316 {dimension_numbers = #tpu.dot_dimension_numbers<[1], [0], [0], [1], [0, 0, 1, 1], [], []>} : vector<8x5xf32>, vector<5x128xf32>, vector<8x128xf32> -> vector<8x128xf32>
    %983 = arith.addf %979, %982 : vector<8x128xf32>
    %c3_317 = arith.constant 3 : index
    %c0_318 = arith.constant 0 : index
    %c0_319 = arith.constant 0 : index
    %984 = vector.load %arg4[%c3_317, %c0_318, %c0_319] : memref<5x8x5xf32, #tpu.memory_space<vmem>>, vector<1x8x5xf32>
    %985 = vector.shape_cast %984 : vector<1x8x5xf32> to vector<8x5xf32>
    %cst_320 = arith.constant dense<0.000000e+00> : vector<8x128xf32>
    %986 = tpu.matmul %985, %966, %cst_320 {dimension_numbers = #tpu.dot_dimension_numbers<[1], [0], [0], [1], [0, 0, 1, 1], [], []>} : vector<8x5xf32>, vector<5x128xf32>, vector<8x128xf32> -> vector<8x128xf32>
    %987 = arith.addf %983, %986 : vector<8x128xf32>
    %c4_321 = arith.constant 4 : index
    %c0_322 = arith.constant 0 : index
    %c0_323 = arith.constant 0 : index
    %988 = vector.load %arg4[%c4_321, %c0_322, %c0_323] : memref<5x8x5xf32, #tpu.memory_space<vmem>>, vector<1x8x5xf32>
    %989 = vector.shape_cast %988 : vector<1x8x5xf32> to vector<8x5xf32>
    %cst_324 = arith.constant dense<0.000000e+00> : vector<8x128xf32>
    %990 = tpu.matmul %989, %969, %cst_324 {dimension_numbers = #tpu.dot_dimension_numbers<[1], [0], [0], [1], [0, 0, 1, 1], [], []>} : vector<8x5xf32>, vector<5x128xf32>, vector<8x128xf32> -> vector<8x128xf32>
    %991 = arith.addf %987, %990 : vector<8x128xf32>
    %c0_325 = arith.constant 0 : index
    %c0_326 = arith.constant 0 : index
    %992 = vector.load %arg5[%c0_325, %c0_326] : memref<8x1xf32, #tpu.memory_space<vmem>>, vector<8x1xf32>
    %993 = vector.broadcast %992 : vector<8x1xf32> to vector<8x128xf32>
    %994 = arith.addf %991, %993 : vector<8x128xf32>
    %c3_327 = arith.constant 3 : index
    %c0_328 = arith.constant 0 : index
    %c0_329 = arith.constant 0 : index
    %995 = vector.load %arg6[%c3_327, %c0_328, %c0_329] : memref<4x8x128xf32, #tpu.memory_space<vmem>>, vector<1x8x128xf32>
    %996 = vector.shape_cast %995 : vector<1x8x128xf32> to vector<8x128xf32>
    %997 = vector.shape_cast %994 : vector<8x128xf32> to vector<1x8x128xf32>
    tpu.vector_store %arg6[%c3_327, %c0_328, %c0_329], %997 {strides = array<i32>} : memref<4x8x128xf32, #tpu.memory_space<vmem>>, vector<1x8x128xf32>,
    return
  }
  func.func @transform_0(%arg0: i32, %arg1: i32) -> (i32, i32, i32) {
    %c0_i32 = arith.constant 0 : i32
    %c0_i32_0 = arith.constant 0 : i32
    %c0_i32_1 = arith.constant 0 : i32
    return %c0_i32, %c0_i32_0, %arg0 : i32, i32, i32
  }
  func.func @transform_1(%arg0: i32, %arg1: i32) -> (i32, i32) {
    %c0_i32 = arith.constant 0 : i32
    %c0_i32_0 = arith.constant 0 : i32
    %c0_i32_1 = arith.constant 0 : i32
    return %c0_i32, %c0_i32_0 : i32, i32
  }
  func.func @transform_2(%arg0: i32, %arg1: i32) -> (i32, i32, i32) {
    %c0_i32 = arith.constant 0 : i32
    %c0_i32_0 = arith.constant 0 : i32
    %c0_i32_1 = arith.constant 0 : i32
    %c0_i32_2 = arith.constant 0 : i32
    return %c0_i32, %c0_i32_0, %c0_i32_1 : i32, i32, i32
  }
  func.func @transform_3(%arg0: i32, %arg1: i32) -> (i32, i32) {
    %c0_i32 = arith.constant 0 : i32
    %c0_i32_0 = arith.constant 0 : i32
    %c0_i32_1 = arith.constant 0 : i32
    return %c0_i32, %c0_i32_0 : i32, i32
  }
  func.func @transform_4(%arg0: i32, %arg1: i32) -> (i32, i32, i32) {
    %c0_i32 = arith.constant 0 : i32
    %c0_i32_0 = arith.constant 0 : i32
    return %arg1, %c0_i32, %arg0 : i32, i32, i32
  }
}

</mosaic_0001>

<llo_original>
// kernel: sig_module_forward.1
$region0: #{sig_module_forward.1}
  #allocation0 [shape = 'u32[]', space=smem, size = 0x4, offset = 0x4, fixed_abs, tag = 'smem constant byte address 0x4 - core index']
  #allocation1 [shape = 'u32[72,128]{1,0:T(1,128)}', space=vmem, size = 0x9000, scoped, tag = 'internal scratch']
  %s0 = inlined_call_operand.vmem [shape: f32[12,5,128], index: 0, kind: input, shape index: {}]
  %s1 = inlined_call_operand.vmem [shape: f32[8,5], index: 1, kind: input, shape index: {}]
  %s2 = inlined_call_operand.vmem [shape: f32[5,8,5], index: 2, kind: input, shape index: {}]
  %s3 = inlined_call_operand.vmem [shape: f32[8,1], index: 3, kind: input, shape index: {}]
  %s4 = inlined_call_operand.vmem [shape: f32[8,8,128], index: 4, kind: output, shape index: {}]
  %s5 = sld [smem:[#allocation0]]
  $region49: #{sig_module_forward.1} parent=0
    _
  %s7 = ssub.s32 1, %s5
  %s8 = scalar_select 0, %s7, %s5
  loop: start=0, step=1, limit=4
  $region2: #{sig_module_forward.1} parent=0 // loop_pre_header
    _
  $region3: #{sig_module_forward.1} parent=0 // loop_header
    %s10 = sphi 0, %s14
    %p11 = scmp.ge.s32.totalorder %s10, 4
    %s17 = sphi 0, %s29
    %s18 = sphi 0, %s25
    %s19 = sphi 0, %s17
    %s20 = sphi 0, %s18
    %s21 = sphi 0, %s19
    %s22 = sphi 0, %s20
    %s32 = sphi 0, %s34
    %s35 = sphi 0, %s32
    %s36 = sphi 0, %s35
    %s52 = sphi 0, %s36
    %s56 = sphi 0, %s56
    %s58 = sphi 0, %s56
    %s59 = sphi 0, %s58
    %s73 = sphi 0, %s59
    %s77 = sphi 0, %s77
    %s79 = sphi 0, %s77
    %s80 = sphi 0, %s79
    %s94 = sphi 0, %s80
    %s98 = sphi 0, %s98
    %s100 = sphi 0, %s98
    %s101 = sphi 0, %s100
    %s115 = sphi 0, %s101
    %s123 = sphi 0, %s125
    %s126 = sphi 0, %s123
    %s127 = sphi 0, %s126
    %s143 = sphi 0, %s127
  $region4: #{sig_module_forward.1} parent=0 // loop_header_branch
    %13 = sbr.rel (%p11) target = $region8
  $region5: #{sig_module_forward.1} parent=0 // loop_body
    %s15 = ssub.s32 %s10, 1
    %s16 = ssub.s32 %s10, 2
    %s23 = sadd.s32 1, %s18
    %p24 = scmp.ge.s32.totalorder %s23, 2
    %s25 = scalar_select %p24, 0, %s23
    %s26 = sadd.s32 1, %s17
    %s27 = scalar_select %p24, %s26, %s17
    %p28 = scmp.ge.s32.totalorder %s27, 1
    %s29 = scalar_select %p28, 0, %s27
    %s30 = ssub.s32 %s17, %s29
    %p31 = scmp.eq.s32.totalorder %s30, 0
    %s33 = sadd.s32 %s32, 1
    %s34 = scalar_select %p31, %s32, %s33
    %p37 = pneg %p31
    %p38 = scmp.eq.s32.totalorder %s10, 1
    %p39 = por %p37, %p38
    %p40 = scmp.ne.s32.totalorder %s32, %s35
    %p41 = scmp.eq.s32.totalorder %s10, 0
    %p42 = por %p40, %p41
    %p43 = scmp.ne.s32.totalorder %s32, %s35
    %p44 = scmp.eq.s32.totalorder %s15, 1
    %p45 = por %p43, %p44
    %p46 = scmp.ne.s32.totalorder %s35, %s36
    %p47 = scmp.eq.s32.totalorder %s15, 0
    %p48 = por %p46, %p47
    %p49 = scmp.ne.s32.totalorder %s35, %s36
    %p50 = scmp.eq.s32.totalorder %s16, 1
    %p51 = por %p49, %p50
    %p53 = scmp.ne.s32.totalorder %s36, %s52
    %p54 = scmp.eq.s32.totalorder %s16, 0
    %p55 = por %p53, %p54
    %s57 = sadd.s32 %s56, 1
    %p60 = scmp.eq.s32.totalorder %s10, 1
    %p61 = scmp.ne.s32.totalorder %s56, %s58
    %p62 = scmp.eq.s32.totalorder %s10, 0
    %p63 = por %p61, %p62
    %p64 = scmp.ne.s32.totalorder %s56, %s58
    %p65 = scmp.eq.s32.totalorder %s15, 1
    %p66 = por %p64, %p65
    %p67 = scmp.ne.s32.totalorder %s58, %s59
    %p68 = scmp.eq.s32.totalorder %s15, 0
    %p69 = por %p67, %p68
    %p70 = scmp.ne.s32.totalorder %s58, %s59
    %p71 = scmp.eq.s32.totalorder %s16, 1
    %p72 = por %p70, %p71
    %p74 = scmp.ne.s32.totalorder %s59, %s73
    %p75 = scmp.eq.s32.totalorder %s16, 0
    %p76 = por %p74, %p75
    %s78 = sadd.s32 %s77, 1
    %p81 = scmp.eq.s32.totalorder %s10, 1
    %p82 = scmp.ne.s32.totalorder %s77, %s79
    %p83 = scmp.eq.s32.totalorder %s10, 0
    %p84 = por %p82, %p83
    %p85 = scmp.ne.s32.totalorder %s77, %s79
    %p86 = scmp.eq.s32.totalorder %s15, 1
    %p87 = por %p85, %p86
    %p88 = scmp.ne.s32.totalorder %s79, %s80
    %p89 = scmp.eq.s32.totalorder %s15, 0
    %p90 = por %p88, %p89
    %p91 = scmp.ne.s32.totalorder %s79, %s80
    %p92 = scmp.eq.s32.totalorder %s16, 1
    %p93 = por %p91, %p92
    %p95 = scmp.ne.s32.totalorder %s80, %s94
    %p96 = scmp.eq.s32.totalorder %s16, 0
    %p97 = por %p95, %p96
    %s99 = sadd.s32 %s98, 1
    %p102 = scmp.eq.s32.totalorder %s10, 1
    %p103 = scmp.ne.s32.totalorder %s98, %s100
    %p104 = scmp.eq.s32.totalorder %s10, 0
    %p105 = por %p103, %p104
    %p106 = scmp.ne.s32.totalorder %s98, %s100
    %p107 = scmp.eq.s32.totalorder %s15, 1
    %p108 = por %p106, %p107
    %p109 = scmp.ne.s32.totalorder %s100, %s101
    %p110 = scmp.eq.s32.totalorder %s15, 0
    %p111 = por %p109, %p110
    %p112 = scmp.ne.s32.totalorder %s100, %s101
    %p113 = scmp.eq.s32.totalorder %s16, 1
    %p114 = por %p112, %p113
    %p116 = scmp.ne.s32.totalorder %s101, %s115
    %p117 = scmp.eq.s32.totalorder %s16, 0
    %p118 = por %p116, %p117
    %s119 = ssub.s32 %s18, %s25
    %s120 = ssub.s32 %s17, %s29
    %s121 = sor.u32 %s119, %s120
    %p122 = scmp.eq.s32.totalorder %s121, 0
    %s124 = sadd.s32 %s123, 1
    %s125 = scalar_select %p122, %s123, %s124
    %p128 = pneg %p122
    %p129 = scmp.eq.s32.totalorder %s10, 1
    %p130 = por %p128, %p129
    %p131 = scmp.ne.s32.totalorder %s123, %s126
    %p132 = scmp.eq.s32.totalorder %s10, 0
    %p133 = por %p131, %p132
    %p134 = scmp.ne.s32.totalorder %s123, %s126
    %p135 = scmp.eq.s32.totalorder %s15, 1
    %p136 = por %p134, %p135
    %p137 = scmp.ne.s32.totalorder %s126, %s127
    %p138 = scmp.eq.s32.totalorder %s15, 0
    %p139 = por %p137, %p138
    %p140 = scmp.ne.s32.totalorder %s126, %s127
    %p141 = scmp.eq.s32.totalorder %s16, 1
    %p142 = por %p140, %p141
    %p144 = scmp.ne.s32.totalorder %s127, %s143
    %p145 = scmp.eq.s32.totalorder %s16, 0
    %p146 = por %p144, %p145
    %p147 = scmp.le.s32.totalorder 1, %s10
    %p148 = scmp.lt.s32.totalorder %s10, 3
    %p149 = pnand %p147, %p148
    %p150 = pneg %p149
    // Predicated region
    $region9: #{sig_module_forward.1} parent=5 // pred_check
      _
    $region10: #{sig_module_forward.1} parent=5 // pred_check_branch
      %152 = sbr.rel (%p149) target = $region12
    $region11: #{sig_module_forward.1} parent=5 // pred_region
      %s153 = ssub.s32 %s10, 1
      // Predicated region
      $region13: #{sig_module_forward.1} parent=11 // pred_check
        %p154 = pneg %p48
      $region14: #{sig_module_forward.1} parent=11 // pred_check_branch
        %156 = sbr.rel (%p154) target = $region16
      $region15: #{sig_module_forward.1} parent=11 // pred_region
        %p157 = scmp.lt.s32.totalorder %s19, 0
        %s158 = scalar_select %p157, %s19, 0
        %s159 = smul.addr %s158, 8
        %s160 = scalar_lea.vmem %s0, %s159
      $region16: #{sig_module_forward.1} parent=11 // pred_fallthru
        _
      // Predicated region
      $region17: #{sig_module_forward.1} parent=11 // pred_check
        %p161 = pneg %p69
      $region18: #{sig_module_forward.1} parent=11 // pred_check_branch
        %163 = sbr.rel (%p161) target = $region20
      $region19: #{sig_module_forward.1} parent=11 // pred_region
        _
      $region20: #{sig_module_forward.1} parent=11 // pred_fallthru
        _
      // Predicated region
      $region21: #{sig_module_forward.1} parent=11 // pred_check
        %p164 = pneg %p90
      $region22: #{sig_module_forward.1} parent=11 // pred_check_branch
        %166 = sbr.rel (%p164) target = $region24
      $region23: #{sig_module_forward.1} parent=11 // pred_region
        _
      $region24: #{sig_module_forward.1} parent=11 // pred_fallthru
        _
      // Predicated region
      $region25: #{sig_module_forward.1} parent=11 // pred_check
        %p167 = pneg %p111
      $region26: #{sig_module_forward.1} parent=11 // pred_check_branch
        %169 = sbr.rel (%p167) target = $region28
      $region27: #{sig_module_forward.1} parent=11 // pred_region
        _
      $region28: #{sig_module_forward.1} parent=11 // pred_fallthru
        _
    $region12: #{sig_module_forward.1} parent=5 // pred_fallthru
      _
    %p170 = scmp.lt.s32.totalorder %s10, 2
    // Predicated region
    $region29: #{sig_module_forward.1} parent=5 // pred_check
      %p171 = pneg %p170
    $region30: #{sig_module_forward.1} parent=5 // pred_check_branch
      %173 = sbr.rel (%p171) target = $region32
    $region31: #{sig_module_forward.1} parent=5 // pred_region
      _
    $region32: #{sig_module_forward.1} parent=5 // pred_fallthru
      _
    %p174 = scmp.le.s32.totalorder 1, %s10
    %p175 = scmp.lt.s32.totalorder %s10, 3
    %p176 = pnand %p174, %p175
    %p177 = pneg %p176
    // Predicated region
    $region33: #{sig_module_forward.1} parent=5 // pred_check
      _
    $region34: #{sig_module_forward.1} parent=5 // pred_check_branch
      %179 = sbr.rel (%p176) target = $region36
    $region35: #{sig_module_forward.1} parent=5 // pred_region
      %s180 = ssub.s32 %s10, 1
      %p181 = scmp.lt.s32.totalorder %s19, 0
      %s182 = scalar_select %p181, %s19, 0
      %s183 = smul.addr %s182, 8
      %s184 = scalar_lea.vmem %s0, %s183
      %p185 = pneg %p48
      %p186 = pneg %p45
      %p187 = pneg %p69
      %p188 = pneg %p66
      %p189 = pneg %p90
      %p190 = pneg %p87
      %p191 = pneg %p111
      %p192 = pneg %p108
      %p193 = pneg %p139
      %p194 = pneg %p136
      %s195 = smul.u32 4, %s20
      %p196 = scmp.lt.s32.totalorder %s195, 7
      %s197 = scalar_select %p196, %s195, 7
      %p198 = scmp.lt.s32.totalorder %s19, 0
      %s199 = scalar_select %p198, %s19, 0
      %s200 = sadd.s32 %s199, %s197
      %s201 = smul.addr %s200, 8
      %s202 = scalar_lea.vmem %s4, %s201
      %p203 = scmp.lt.s32.totalorder %s19, 0
      %s204 = scalar_select %p203, %s19, 0
      %s205 = smul.addr %s204, 8
      %s206 = scalar_lea.vmem %s0, %s205
      %s207 = smul.u32 4, %s20
      %p208 = scmp.lt.s32.totalorder %s207, 7
      %s209 = scalar_select %p208, %s207, 7
      %p210 = scmp.lt.s32.totalorder %s19, 0
      %s211 = scalar_select %p210, %s19, 0
      %s212 = sadd.s32 %s211, %s209
      %s213 = smul.addr %s212, 8
      %s214 = scalar_lea.vmem %s4, %s213
      %s215 = smul.u32 4, %s20
      %v216 = vlaneseq
      %v217 = vshrl.u32 %v216, 7
      %vm218 = vcmp.eq.s32.totalorder %v217, 4
      %v219 = vsel %vm218, 1, 0
      %v220 = vcvt.s32.f32 %v219
      %vm221 = vcmp.eq.s32.totalorder %v217, 0
      %v222 = vsel %vm221, 1, 0
      %v223 = vcvt.s32.f32 %v222
      %vm224 = vcmp.eq.s32.totalorder %v217, 1
      %v225 = vsel %vm224, 1, 0
      %v226 = vcvt.s32.f32 %v225
      %vm227 = vcmp.eq.s32.totalorder %v217, 2
      %v228 = vsel %vm227, 1, 0
      %v229 = vcvt.s32.f32 %v228
      %vm230 = vcmp.eq.s32.totalorder %v217, 3
      %v231 = vsel %vm230, 1, 0
      %v232 = vcvt.s32.f32 %v231
      %s233 = smul.u32 %s20, 4
      %p234 = scmp.lt.s32.totalorder %s233, 7
      %s235 = scalar_select %p234, %s233, 7
      %s236 = smul.u32 %s235, 8
      %s237 = scalar_lea.vmem %s206, %s236
      %v238 = vld [vmem:[%s237] sm:$0x1f]
      %v239 = vadd.f32 %v238, 0.0
      %v240 = vmul.f32 %v239, 0.5
      %v241 = vmul.f32 %v240, %v223
      %vm242 = vcmask 1044480
      %v243 = vsel %vm242, %v241, 0.0
      %v244 = vrot.slane %v243, 4
      %v245 = vadd.f32 %v243, %v244
      %v246 = vrot.slane %v245, 2
      %v247 = vadd.f32 %v245, %v246
      %v248 = vrot.slane %v247, 1
      %v249 = vadd.f32 %v247, %v248
      %v250 = vmul.f32 %v249, %v238
      %v251 = vadd.f32 %v250, 0.0
      %v252 = vmul.f32 %v240, %v226
      %v253 = vsel %vm242, %v252, 0.0
      %v254 = vrot.slane %v253, 4
      %v255 = vadd.f32 %v253, %v254
      %v256 = vrot.slane %v255, 2
      %v257 = vadd.f32 %v255, %v256
      %v258 = vrot.slane %v257, 1
      %v259 = vadd.f32 %v257, %v258
      %v260 = vmul.f32 %v259, %v238
      %v261 = vadd.f32 %v260, 0.0
      %v262 = vmul.f32 %v240, %v229
      %v263 = vsel %vm242, %v262, 0.0
      %v264 = vrot.slane %v263, 4
      %v265 = vadd.f32 %v263, %v264
      %v266 = vrot.slane %v265, 2
      %v267 = vadd.f32 %v265, %v266
      %v268 = vrot.slane %v267, 1
      %v269 = vadd.f32 %v267, %v268
      %v270 = vmul.f32 %v269, %v238
      %v271 = vadd.f32 %v270, 0.0
      %v272 = vmul.f32 %v240, %v232
      %v273 = vsel %vm242, %v272, 0.0
      %v274 = vrot.slane %v273, 4
      %v275 = vadd.f32 %v273, %v274
      %v276 = vrot.slane %v275, 2
      %v277 = vadd.f32 %v275, %v276
      %v278 = vrot.slane %v277, 1
      %v279 = vadd.f32 %v277, %v278
      %v280 = vmul.f32 %v279, %v238
      %v281 = vadd.f32 %v280, 0.0
      %s282 = sadd.s32 %s235, 1
      %s283 = smul.u32 %s282, 8
      %s284 = scalar_lea.vmem %s206, %s283
      %v285 = vld [vmem:[%s284] sm:$0x1f]
      %v286 = vmul.f32 %v220, 0.25
      %v287 = vadd.f32 %v285, %v286
      %v288 = vsub.f32 %v287, %v238
      %v289 = vadd.f32 %v287, %v238
      %v290 = vmul.f32 %v289, 0.5
      %v291 = vmul.f32 %v290, %v223
      %v292 = vsel %vm242, %v291, 0.0
      %v293 = vrot.slane %v292, 4
      %v294 = vadd.f32 %v292, %v293
      %v295 = vrot.slane %v294, 2
      %v296 = vadd.f32 %v294, %v295
      %v297 = vrot.slane %v296, 1
      %v298 = vadd.f32 %v296, %v297
      %v299 = vmul.f32 %v298, %v288
      %v300 = vadd.f32 %v251, %v299
      %v301 = vmul.f32 %v290, %v226
      %v302 = vsel %vm242, %v301, 0.0
      %v303 = vrot.slane %v302, 4
      %v304 = vadd.f32 %v302, %v303
      %v305 = vrot.slane %v304, 2
      %v306 = vadd.f32 %v304, %v305
      %v307 = vrot.slane %v306, 1
      %v308 = vadd.f32 %v306, %v307
      %v309 = vmul.f32 %v308, %v288
      %v310 = vadd.f32 %v261, %v309
      %v311 = vmul.f32 %v290, %v229
      %v312 = vsel %vm242, %v311, 0.0
      %v313 = vrot.slane %v312, 4
      %v314 = vadd.f32 %v312, %v313
      %v315 = vrot.slane %v314, 2
      %v316 = vadd.f32 %v314, %v315
      %v317 = vrot.slane %v316, 1
      %v318 = vadd.f32 %v316, %v317
      %v319 = vmul.f32 %v318, %v288
      %v320 = vadd.f32 %v271, %v319
      %v321 = vmul.f32 %v290, %v232
      %v322 = vsel %vm242, %v321, 0.0
      %v323 = vrot.slane %v322, 4
      %v324 = vadd.f32 %v322, %v323
      %v325 = vrot.slane %v324, 2
      %v326 = vadd.f32 %v324, %v325
      %v327 = vrot.slane %v326, 1
      %v328 = vadd.f32 %v326, %v327
      %v329 = vmul.f32 %v328, %v288
      %v330 = vadd.f32 %v281, %v329
      %v331 = vmul.f32 %v288, 0.125
      %v332 = vadd.f32 %v331, 0.0
      %s333 = sadd.s32 %s235, 2
      %s334 = smul.u32 %s333, 8
      %s335 = scalar_lea.vmem %s206, %s334
      %v336 = vld [vmem:[%s335] sm:$0x1f]
      %v337 = vmul.f32 %v220, 0.5
      %v338 = vadd.f32 %v336, %v337
      %v339 = vsub.f32 %v338, %v287
      %v340 = vadd.f32 %v338, %v287
      %v341 = vmul.f32 %v340, 0.5
      %v342 = vmul.f32 %v341, %v223
      %v343 = vsel %vm242, %v342, 0.0
      %v344 = vrot.slane %v343, 4
      %v345 = vadd.f32 %v343, %v344
      %v346 = vrot.slane %v345, 2
      %v347 = vadd.f32 %v345, %v346
      %v348 = vrot.slane %v347, 1
      %v349 = vadd.f32 %v347, %v348
      %v350 = vmul.f32 %v349, %v339
      %v351 = vadd.f32 %v300, %v350
      %v352 = vmul.f32 %v341, %v226
      %v353 = vsel %vm242, %v352, 0.0
      %v354 = vrot.slane %v353, 4
      %v355 = vadd.f32 %v353, %v354
      %v356 = vrot.slane %v355, 2
      %v357 = vadd.f32 %v355, %v356
      %v358 = vrot.slane %v357, 1
      %v359 = vadd.f32 %v357, %v358
      %v360 = vmul.f32 %v359, %v339
      %v361 = vadd.f32 %v310, %v360
      %v362 = vmul.f32 %v341, %v229
      %v363 = vsel %vm242, %v362, 0.0
      %v364 = vrot.slane %v363, 4
      %v365 = vadd.f32 %v363, %v364
      %v366 = vrot.slane %v365, 2
      %v367 = vadd.f32 %v365, %v366
      %v368 = vrot.slane %v367, 1
      %v369 = vadd.f32 %v367, %v368
      %v370 = vmul.f32 %v369, %v339
      %v371 = vadd.f32 %v320, %v370
      %v372 = vmul.f32 %v341, %v232
      %v373 = vsel %vm242, %v372, 0.0
      %v374 = vrot.slane %v373, 4
      %v375 = vadd.f32 %v373, %v374
      %v376 = vrot.slane %v375, 2
      %v377 = vadd.f32 %v375, %v376
      %v378 = vrot.slane %v377, 1
      %v379 = vadd.f32 %v377, %v378
      %v380 = vmul.f32 %v379, %v339
      %v381 = vadd.f32 %v330, %v380
      %v382 = vmul.f32 %v339, 0.375
      %v383 = vadd.f32 %v332, %v382
      %s384 = sadd.s32 %s235, 3
      %s385 = smul.u32 %s384, 8
      %s386 = scalar_lea.vmem %s206, %s385
      %v387 = vld [vmem:[%s386] sm:$0x1f]
      %v388 = vmul.f32 %v220, 0.75
      %v389 = vadd.f32 %v387, %v388
      %v390 = vsub.f32 %v389, %v338
      %v391 = vadd.f32 %v389, %v338
      %v392 = vmul.f32 %v391, 0.5
      %v393 = vmul.f32 %v392, %v223
      %v394 = vsel %vm242, %v393, 0.0
      %v395 = vrot.slane %v394, 4
      %v396 = vadd.f32 %v394, %v395
      %v397 = vrot.slane %v396, 2
      %v398 = vadd.f32 %v396, %v397
      %v399 = vrot.slane %v398, 1
      %v400 = vadd.f32 %v398, %v399
      %v401 = vmul.f32 %v400, %v390
      %v402 = vadd.f32 %v351, %v401
      %v403 = vmul.f32 %v392, %v226
      %v404 = vsel %vm242, %v403, 0.0
      %v405 = vrot.slane %v404, 4
      %v406 = vadd.f32 %v404, %v405
      %v407 = vrot.slane %v406, 2
      %v408 = vadd.f32 %v406, %v407
      %v409 = vrot.slane %v408, 1
      %v410 = vadd.f32 %v408, %v409
      %v411 = vmul.f32 %v410, %v390
      %v412 = vadd.f32 %v361, %v411
      %v413 = vmul.f32 %v392, %v229
      %v414 = vsel %vm242, %v413, 0.0
      %v415 = vrot.slane %v414, 4
      %v416 = vadd.f32 %v414, %v415
      %v417 = vrot.slane %v416, 2
      %v418 = vadd.f32 %v416, %v417
      %v419 = vrot.slane %v418, 1
      %v420 = vadd.f32 %v418, %v419
      %v421 = vmul.f32 %v420, %v390
      %v422 = vadd.f32 %v371, %v421
      %v423 = vmul.f32 %v392, %v232
      %v424 = vsel %vm242, %v423, 0.0
      %v425 = vrot.slane %v424, 4
      %v426 = vadd.f32 %v424, %v425
      %v427 = vrot.slane %v426, 2
      %v428 = vadd.f32 %v426, %v427
      %v429 = vrot.slane %v428, 1
      %v430 = vadd.f32 %v428, %v429
      %v431 = vmul.f32 %v430, %v390
      %v432 = vadd.f32 %v381, %v431
      %v433 = vmul.f32 %v390, 0.625
      %v434 = vadd.f32 %v383, %v433
      %s435 = sadd.s32 %s235, 4
      %s436 = smul.u32 %s435, 8
      %s437 = scalar_lea.vmem %s206, %s436
      %v438 = vld [vmem:[%s437] sm:$0x1f]
      %v439 = vadd.f32 %v438, %v220
      %v440 = vsub.f32 %v439, %v389
      %v441 = vadd.f32 %v439, %v389
      %v442 = vmul.f32 %v441, 0.5
      %v443 = vmul.f32 %v442, %v223
      %v444 = vsel %vm242, %v443, 0.0
      %v445 = vrot.slane %v444, 4
      %v446 = vadd.f32 %v444, %v445
      %v447 = vrot.slane %v446, 2
      %v448 = vadd.f32 %v446, %v447
      %v449 = vrot.slane %v448, 1
      %v450 = vadd.f32 %v448, %v449
      %v451 = vmul.f32 %v450, %v440
      %v452 = vadd.f32 %v402, %v451
      %v453 = vmul.f32 %v442, %v226
      %v454 = vsel %vm242, %v453, 0.0
      %v455 = vrot.slane %v454, 4
      %v456 = vadd.f32 %v454, %v455
      %v457 = vrot.slane %v456, 2
      %v458 = vadd.f32 %v456, %v457
      %v459 = vrot.slane %v458, 1
      %v460 = vadd.f32 %v458, %v459
      %v461 = vmul.f32 %v460, %v440
      %v462 = vadd.f32 %v412, %v461
      %v463 = vmul.f32 %v442, %v229
      %v464 = vsel %vm242, %v463, 0.0
      %v465 = vrot.slane %v464, 4
      %v466 = vadd.f32 %v464, %v465
      %v467 = vrot.slane %v466, 2
      %v468 = vadd.f32 %v466, %v467
      %v469 = vrot.slane %v468, 1
      %v470 = vadd.f32 %v468, %v469
      %v471 = vmul.f32 %v470, %v440
      %v472 = vadd.f32 %v422, %v471
      %v473 = vmul.f32 %v442, %v232
      %v474 = vsel %vm242, %v473, 0.0
      %v475 = vrot.slane %v474, 4
      %v476 = vadd.f32 %v474, %v475
      %v477 = vrot.slane %v476, 2
      %v478 = vadd.f32 %v476, %v477
      %v479 = vrot.slane %v478, 1
      %v480 = vadd.f32 %v478, %v479
      %v481 = vmul.f32 %v480, %v440
      %v482 = vadd.f32 %v432, %v481
      %v483 = vmul.f32 %v440, 0.875
      %v484 = vadd.f32 %v434, %v483
      %v485 = vld [vmem:[%s1] sm:$0xff]
      %v486 = vld [vmem:[%s2] sm:$0xff]
      %vm487 = vcmask 39936
      %v489 = vsel %vm487, %v486, 0
      %v492 = vsel %vm242, %v452, 0
      %494 = vmatpush.msra.mxu0 0.0
      %495 = vmatpush.msra.mxu0 0.0
      %496 = vmatpush.msra.mxu0 0.0
      %497 = vmatpush.msra.mxu0 0.0
      %498 = vmatpush.msra.mxu0 0.0
      %499 = vmatpush.msra.mxu0 0.0
      %500 = vmatpush.msra.mxu0 0.0
      %501 = vmatpush.msra.mxu0 0.0
      %502 = vmatpush.msra.mxu0 0.0
      %503 = vmatpush.msra.mxu0 0.0
      %504 = vmatpush.msra.mxu0 0.0
      %505 = vmatpush.msra.mxu0 0.0
      %506 = vmatpush.msra.mxu0 0.0
      %507 = vmatpush.msra.mxu0 0.0
      %508 = vmatpush.msra.mxu0 0.0
      %509 = vmatpush.msra.mxu0 %v492
      %510 = vmatmul.f32.gmra.mxu0 %v489
      %v511 = vpop.f32.mrf.mxu0
      %v512 = vadd.f32 0.0, %v511
      %513 = vdwg.mxu0
      %v515 = vsel %vm487, %v485, 0
      %v518 = vsel %vm242, %v439, 0
      %520 = vmatpush.msra.mxu0 0.0
      %521 = vmatpush.msra.mxu0 0.0
      %522 = vmatpush.msra.mxu0 0.0
      %523 = vmatpush.msra.mxu0 0.0
      %524 = vmatpush.msra.mxu0 0.0
      %525 = vmatpush.msra.mxu0 0.0
      %526 = vmatpush.msra.mxu0 0.0
      %527 = vmatpush.msra.mxu0 0.0
      %528 = vmatpush.msra.mxu0 0.0
      %529 = vmatpush.msra.mxu0 0.0
      %530 = vmatpush.msra.mxu0 0.0
      %531 = vmatpush.msra.mxu0 0.0
      %532 = vmatpush.msra.mxu0 0.0
      %533 = vmatpush.msra.mxu0 0.0
      %534 = vmatpush.msra.mxu0 0.0
      %535 = vmatpush.msra.mxu0 %v518
      %536 = vmatmul.f32.gmra.mxu0 %v515
      %v537 = vpop.f32.mrf.mxu0
      %v538 = vadd.f32 %v512, %v537
      %539 = vdwg.mxu0
      %s540 = scalar_lea.vmem %s2, 8
      %v541 = vld [vmem:[%s540] sm:$0xff]
      %v543 = vsel %vm487, %v541, 0
      %v546 = vsel %vm242, %v462, 0
      %548 = vmatpush.msra.mxu0 0.0
      %549 = vmatpush.msra.mxu0 0.0
      %550 = vmatpush.msra.mxu0 0.0
      %551 = vmatpush.msra.mxu0 0.0
      %552 = vmatpush.msra.mxu0 0.0
      %553 = vmatpush.msra.mxu0 0.0
      %554 = vmatpush.msra.mxu0 0.0
      %555 = vmatpush.msra.mxu0 0.0
      %556 = vmatpush.msra.mxu0 0.0
      %557 = vmatpush.msra.mxu0 0.0
      %558 = vmatpush.msra.mxu0 0.0
      %559 = vmatpush.msra.mxu0 0.0
      %560 = vmatpush.msra.mxu0 0.0
      %561 = vmatpush.msra.mxu0 0.0
      %562 = vmatpush.msra.mxu0 0.0
      %563 = vmatpush.msra.mxu0 %v546
      %564 = vmatmul.f32.gmra.mxu0 %v543
      %v565 = vpop.f32.mrf.mxu0
      %v566 = vadd.f32 0.0, %v565
      %567 = vdwg.mxu0
      %v568 = vadd.f32 %v538, %v566
      %s569 = scalar_lea.vmem %s2, 16
      %v570 = vld [vmem:[%s569] sm:$0xff]
      %v572 = vsel %vm487, %v570, 0
      %v575 = vsel %vm242, %v472, 0
      %577 = vmatpush.msra.mxu0 0.0
      %578 = vmatpush.msra.mxu0 0.0
      %579 = vmatpush.msra.mxu0 0.0
      %580 = vmatpush.msra.mxu0 0.0
      %581 = vmatpush.msra.mxu0 0.0
      %582 = vmatpush.msra.mxu0 0.0
      %583 = vmatpush.msra.mxu0 0.0
      %584 = vmatpush.msra.mxu0 0.0
      %585 = vmatpush.msra.mxu0 0.0
      %586 = vmatpush.msra.mxu0 0.0
      %587 = vmatpush.msra.mxu0 0.0
      %588 = vmatpush.msra.mxu0 0.0
      %589 = vmatpush.msra.mxu0 0.0
      %590 = vmatpush.msra.mxu0 0.0
      %591 = vmatpush.msra.mxu0 0.0
      %592 = vmatpush.msra.mxu0 %v575
      %593 = vmatmul.f32.gmra.mxu0 %v572
      %v594 = vpop.f32.mrf.mxu0
      %v595 = vadd.f32 0.0, %v594
      %596 = vdwg.mxu0
      %v597 = vadd.f32 %v568, %v595
      %s598 = scalar_lea.vmem %s2, 24
      %v599 = vld [vmem:[%s598] sm:$0xff]
      %v601 = vsel %vm487, %v599, 0
      %v604 = vsel %vm242, %v482, 0
      %606 = vmatpush.msra.mxu0 0.0
      %607 = vmatpush.msra.mxu0 0.0
      %608 = vmatpush.msra.mxu0 0.0
      %609 = vmatpush.msra.mxu0 0.0
      %610 = vmatpush.msra.mxu0 0.0
      %611 = vmatpush.msra.mxu0 0.0
      %612 = vmatpush.msra.mxu0 0.0
      %613 = vmatpush.msra.mxu0 0.0
      %614 = vmatpush.msra.mxu0 0.0
      %615 = vmatpush.msra.mxu0 0.0
      %616 = vmatpush.msra.mxu0 0.0
      %617 = vmatpush.msra.mxu0 0.0
      %618 = vmatpush.msra.mxu0 0.0
      %619 = vmatpush.msra.mxu0 0.0
      %620 = vmatpush.msra.mxu0 0.0
      %621 = vmatpush.msra.mxu0 %v604
      %622 = vmatmul.f32.gmra.mxu0 %v601
      %v623 = vpop.f32.mrf.mxu0
      %v624 = vadd.f32 0.0, %v623
      %625 = vdwg.mxu0
      %v626 = vadd.f32 %v597, %v624
      %s627 = scalar_lea.vmem %s2, 32
      %v628 = vld [vmem:[%s627] sm:$0xff]
      %v630 = vsel %vm487, %v628, 0
      %v633 = vsel %vm242, %v484, 0
      %635 = vmatpush.msra.mxu0 0.0
      %636 = vmatpush.msra.mxu0 0.0
      %637 = vmatpush.msra.mxu0 0.0
      %638 = vmatpush.msra.mxu0 0.0
      %639 = vmatpush.msra.mxu0 0.0
      %640 = vmatpush.msra.mxu0 0.0
      %641 = vmatpush.msra.mxu0 0.0
      %642 = vmatpush.msra.mxu0 0.0
      %643 = vmatpush.msra.mxu0 0.0
      %644 = vmatpush.msra.mxu0 0.0
      %645 = vmatpush.msra.mxu0 0.0
      %646 = vmatpush.msra.mxu0 0.0
      %647 = vmatpush.msra.mxu0 0.0
      %648 = vmatpush.msra.mxu0 0.0
      %649 = vmatpush.msra.mxu0 0.0
      %650 = vmatpush.msra.mxu0 %v633
      %651 = vmatmul.f32.gmra.mxu0 %v630
      %v652 = vpop.f32.mrf.mxu0
      %v653 = vadd.f32 0.0, %v652
      %654 = vdwg.mxu0
      %v655 = vadd.f32 %v626, %v653
      %v656 = vld [vmem:[%s3] sm:$0xff]
      %658 = vset.pattern.permute.xlu0 0
      %659 = vperm.xlu0 %658, %v656
      %v660 = vpop.permute.xlu0 %659
      %v662 = vadd.f32 %v655, %v660
      %663 = vst [vmem:[%s214] sm:$0xff] %v662
      %s664 = sadd.s32 %s233, 1
      %p665 = scmp.lt.s32.totalorder %s664, 7
      %s666 = scalar_select %p665, %s664, 7
      %s667 = smul.u32 %s666, 8
      %s668 = scalar_lea.vmem %s206, %s667
      %v669 = vld [vmem:[%s668] sm:$0x1f]
      %v670 = vadd.f32 %v669, 0.0
      %v671 = vmul.f32 %v670, 0.5
      %v672 = vmul.f32 %v671, %v223
      %v673 = vsel %vm242, %v672, 0.0
      %v674 = vrot.slane %v673, 4
      %v675 = vadd.f32 %v673, %v674
      %v676 = vrot.slane %v675, 2
      %v677 = vadd.f32 %v675, %v676
      %v678 = vrot.slane %v677, 1
      %v679 = vadd.f32 %v677, %v678
      %v680 = vmul.f32 %v679, %v669
      %v681 = vadd.f32 %v680, 0.0
      %v682 = vmul.f32 %v671, %v226
      %v683 = vsel %vm242, %v682, 0.0
      %v684 = vrot.slane %v683, 4
      %v685 = vadd.f32 %v683, %v684
      %v686 = vrot.slane %v685, 2
      %v687 = vadd.f32 %v685, %v686
      %v688 = vrot.slane %v687, 1
      %v689 = vadd.f32 %v687, %v688
      %v690 = vmul.f32 %v689, %v669
      %v691 = vadd.f32 %v690, 0.0
      %v692 = vmul.f32 %v671, %v229
      %v693 = vsel %vm242, %v692, 0.0
      %v694 = vrot.slane %v693, 4
      %v695 = vadd.f32 %v693, %v694
      %v696 = vrot.slane %v695, 2
      %v697 = vadd.f32 %v695, %v696
      %v698 = vrot.slane %v697, 1
      %v699 = vadd.f32 %v697, %v698
      %v700 = vmul.f32 %v699, %v669
      %v701 = vadd.f32 %v700, 0.0
      %v702 = vmul.f32 %v671, %v232
      %v703 = vsel %vm242, %v702, 0.0
      %v704 = vrot.slane %v703, 4
      %v705 = vadd.f32 %v703, %v704
      %v706 = vrot.slane %v705, 2
      %v707 = vadd.f32 %v705, %v706
      %v708 = vrot.slane %v707, 1
      %v709 = vadd.f32 %v707, %v708
      %v710 = vmul.f32 %v709, %v669
      %v711 = vadd.f32 %v710, 0.0
      %s712 = sadd.s32 %s666, 1
      %s713 = smul.u32 %s712, 8
      %s714 = scalar_lea.vmem %s206, %s713
      %v715 = vld [vmem:[%s714] sm:$0x1f]
      %v716 = vadd.f32 %v715, %v286
      %v717 = vsub.f32 %v716, %v669
      %v718 = vadd.f32 %v716, %v669
      %v719 = vmul.f32 %v718, 0.5
      %v720 = vmul.f32 %v719, %v223
      %v721 = vsel %vm242, %v720, 0.0
      %v722 = vrot.slane %v721, 4
      %v723 = vadd.f32 %v721, %v722
      %v724 = vrot.slane %v723, 2
      %v725 = vadd.f32 %v723, %v724
      %v726 = vrot.slane %v725, 1
      %v727 = vadd.f32 %v725, %v726
      %v728 = vmul.f32 %v727, %v717
      %v729 = vadd.f32 %v681, %v728
      %v730 = vmul.f32 %v719, %v226
      %v731 = vsel %vm242, %v730, 0.0
      %v732 = vrot.slane %v731, 4
      %v733 = vadd.f32 %v731, %v732
      %v734 = vrot.slane %v733, 2
      %v735 = vadd.f32 %v733, %v734
      %v736 = vrot.slane %v735, 1
      %v737 = vadd.f32 %v735, %v736
      %v738 = vmul.f32 %v737, %v717
      %v739 = vadd.f32 %v691, %v738
      %v740 = vmul.f32 %v719, %v229
      %v741 = vsel %vm242, %v740, 0.0
      %v742 = vrot.slane %v741, 4
      %v743 = vadd.f32 %v741, %v742
      %v744 = vrot.slane %v743, 2
      %v745 = vadd.f32 %v743, %v744
      %v746 = vrot.slane %v745, 1
      %v747 = vadd.f32 %v745, %v746
      %v748 = vmul.f32 %v747, %v717
      %v749 = vadd.f32 %v701, %v748
      %v750 = vmul.f32 %v719, %v232
      %v751 = vsel %vm242, %v750, 0.0
      %v752 = vrot.slane %v751, 4
      %v753 = vadd.f32 %v751, %v752
      %v754 = vrot.slane %v753, 2
      %v755 = vadd.f32 %v753, %v754
      %v756 = vrot.slane %v755, 1
      %v757 = vadd.f32 %v755, %v756
      %v758 = vmul.f32 %v757, %v717
      %v759 = vadd.f32 %v711, %v758
      %v760 = vmul.f32 %v717, 0.125
      %v761 = vadd.f32 %v760, 0.0
      %s762 = sadd.s32 %s666, 2
      %s763 = smul.u32 %s762, 8
      %s764 = scalar_lea.vmem %s206, %s763
      %v765 = vld [vmem:[%s764] sm:$0x1f]
      %v766 = vadd.f32 %v765, %v337
      %v767 = vsub.f32 %v766, %v716
      %v768 = vadd.f32 %v766, %v716
      %v769 = vmul.f32 %v768, 0.5
      %v770 = vmul.f32 %v769, %v223
      %v771 = vsel %vm242, %v770, 0.0
      %v772 = vrot.slane %v771, 4
      %v773 = vadd.f32 %v771, %v772
      %v774 = vrot.slane %v773, 2
      %v775 = vadd.f32 %v773, %v774
      %v776 = vrot.slane %v775, 1
      %v777 = vadd.f32 %v775, %v776
      %v778 = vmul.f32 %v777, %v767
      %v779 = vadd.f32 %v729, %v778
      %v780 = vmul.f32 %v769, %v226
      %v781 = vsel %vm242, %v780, 0.0
      %v782 = vrot.slane %v781, 4
      %v783 = vadd.f32 %v781, %v782
      %v784 = vrot.slane %v783, 2
      %v785 = vadd.f32 %v783, %v784
      %v786 = vrot.slane %v785, 1
      %v787 = vadd.f32 %v785, %v786
      %v788 = vmul.f32 %v787, %v767
      %v789 = vadd.f32 %v739, %v788
      %v790 = vmul.f32 %v769, %v229
      %v791 = vsel %vm242, %v790, 0.0
      %v792 = vrot.slane %v791, 4
      %v793 = vadd.f32 %v791, %v792
      %v794 = vrot.slane %v793, 2
      %v795 = vadd.f32 %v793, %v794
      %v796 = vrot.slane %v795, 1
      %v797 = vadd.f32 %v795, %v796
      %v798 = vmul.f32 %v797, %v767
      %v799 = vadd.f32 %v749, %v798
      %v800 = vmul.f32 %v769, %v232
      %v801 = vsel %vm242, %v800, 0.0
      %v802 = vrot.slane %v801, 4
      %v803 = vadd.f32 %v801, %v802
      %v804 = vrot.slane %v803, 2
      %v805 = vadd.f32 %v803, %v804
      %v806 = vrot.slane %v805, 1
      %v807 = vadd.f32 %v805, %v806
      %v808 = vmul.f32 %v807, %v767
      %v809 = vadd.f32 %v759, %v808
      %v810 = vmul.f32 %v767, 0.375
      %v811 = vadd.f32 %v761, %v810
      %s812 = sadd.s32 %s666, 3
      %s813 = smul.u32 %s812, 8
      %s814 = scalar_lea.vmem %s206, %s813
      %v815 = vld [vmem:[%s814] sm:$0x1f]
      %v816 = vadd.f32 %v815, %v388
      %v817 = vsub.f32 %v816, %v766
      %v818 = vadd.f32 %v816, %v766
      %v819 = vmul.f32 %v818, 0.5
      %v820 = vmul.f32 %v819, %v223
      %v821 = vsel %vm242, %v820, 0.0
      %v822 = vrot.slane %v821, 4
      %v823 = vadd.f32 %v821, %v822
      %v824 = vrot.slane %v823, 2
      %v825 = vadd.f32 %v823, %v824
      %v826 = vrot.slane %v825, 1
      %v827 = vadd.f32 %v825, %v826
      %v828 = vmul.f32 %v827, %v817
      %v829 = vadd.f32 %v779, %v828
      %v830 = vmul.f32 %v819, %v226
      %v831 = vsel %vm242, %v830, 0.0
      %v832 = vrot.slane %v831, 4
      %v833 = vadd.f32 %v831, %v832
      %v834 = vrot.slane %v833, 2
      %v835 = vadd.f32 %v833, %v834
      %v836 = vrot.slane %v835, 1
      %v837 = vadd.f32 %v835, %v836
      %v838 = vmul.f32 %v837, %v817
      %v839 = vadd.f32 %v789, %v838
      %v840 = vmul.f32 %v819, %v229
      %v841 = vsel %vm242, %v840, 0.0
      %v842 = vrot.slane %v841, 4
      %v843 = vadd.f32 %v841, %v842
      %v844 = vrot.slane %v843, 2
      %v845 = vadd.f32 %v843, %v844
      %v846 = vrot.slane %v845, 1
      %v847 = vadd.f32 %v845, %v846
      %v848 = vmul.f32 %v847, %v817
      %v849 = vadd.f32 %v799, %v848
      %v850 = vmul.f32 %v819, %v232
      %v851 = vsel %vm242, %v850, 0.0
      %v852 = vrot.slane %v851, 4
      %v853 = vadd.f32 %v851, %v852
      %v854 = vrot.slane %v853, 2
      %v855 = vadd.f32 %v853, %v854
      %v856 = vrot.slane %v855, 1
      %v857 = vadd.f32 %v855, %v856
      %v858 = vmul.f32 %v857, %v817
      %v859 = vadd.f32 %v809, %v858
      %v860 = vmul.f32 %v817, 0.625
      %v861 = vadd.f32 %v811, %v860
      %s862 = sadd.s32 %s666, 4
      %s863 = smul.u32 %s862, 8
      %s864 = scalar_lea.vmem %s206, %s863
      %v865 = vld [vmem:[%s864] sm:$0x1f]
      %v866 = vadd.f32 %v865, %v220
      %v867 = vsub.f32 %v866, %v816
      %v868 = vadd.f32 %v866, %v816
      %v869 = vmul.f32 %v868, 0.5
      %v870 = vmul.f32 %v869, %v223
      %v871 = vsel %vm242, %v870, 0.0
      %v872 = vrot.slane %v871, 4
      %v873 = vadd.f32 %v871, %v872
      %v874 = vrot.slane %v873, 2
      %v875 = vadd.f32 %v873, %v874
      %v876 = vrot.slane %v875, 1
      %v877 = vadd.f32 %v875, %v876
      %v878 = vmul.f32 %v877, %v867
      %v879 = vadd.f32 %v829, %v878
      %v880 = vmul.f32 %v869, %v226
      %v881 = vsel %vm242, %v880, 0.0
      %v882 = vrot.slane %v881, 4
      %v883 = vadd.f32 %v881, %v882
      %v884 = vrot.slane %v883, 2
      %v885 = vadd.f32 %v883, %v884
      %v886 = vrot.slane %v885, 1
      %v887 = vadd.f32 %v885, %v886
      %v888 = vmul.f32 %v887, %v867
      %v889 = vadd.f32 %v839, %v888
      %v890 = vmul.f32 %v869, %v229
      %v891 = vsel %vm242, %v890, 0.0
      %v892 = vrot.slane %v891, 4
      %v893 = vadd.f32 %v891, %v892
      %v894 = vrot.slane %v893, 2
      %v895 = vadd.f32 %v893, %v894
      %v896 = vrot.slane %v895, 1
      %v897 = vadd.f32 %v895, %v896
      %v898 = vmul.f32 %v897, %v867
      %v899 = vadd.f32 %v849, %v898
      %v900 = vmul.f32 %v869, %v232
      %v901 = vsel %vm242, %v900, 0.0
      %v902 = vrot.slane %v901, 4
      %v903 = vadd.f32 %v901, %v902
      %v904 = vrot.slane %v903, 2
      %v905 = vadd.f32 %v903, %v904
      %v906 = vrot.slane %v905, 1
      %v907 = vadd.f32 %v905, %v906
      %v908 = vmul.f32 %v907, %v867
      %v909 = vadd.f32 %v859, %v908
      %v910 = vmul.f32 %v867, 0.875
      %v911 = vadd.f32 %v861, %v910
      %v912 = vld [vmem:[%s1] sm:$0xff]
      %v913 = vld [vmem:[%s2] sm:$0xff]
      %v915 = vsel %vm487, %v913, 0
      %v918 = vsel %vm242, %v879, 0
      %920 = vmatpush.msra.mxu0 0.0
      %921 = vmatpush.msra.mxu0 0.0
      %922 = vmatpush.msra.mxu0 0.0
      %923 = vmatpush.msra.mxu0 0.0
      %924 = vmatpush.msra.mxu0 0.0
      %925 = vmatpush.msra.mxu0 0.0
      %926 = vmatpush.msra.mxu0 0.0
      %927 = vmatpush.msra.mxu0 0.0
      %928 = vmatpush.msra.mxu0 0.0
      %929 = vmatpush.msra.mxu0 0.0
      %930 = vmatpush.msra.mxu0 0.0
      %931 = vmatpush.msra.mxu0 0.0
      %932 = vmatpush.msra.mxu0 0.0
      %933 = vmatpush.msra.mxu0 0.0
      %934 = vmatpush.msra.mxu0 0.0
      %935 = vmatpush.msra.mxu0 %v918
      %936 = vmatmul.f32.gmra.mxu0 %v915
      %v937 = vpop.f32.mrf.mxu0
      %v938 = vadd.f32 0.0, %v937
      %939 = vdwg.mxu0
      %v941 = vsel %vm487, %v912, 0
      %v944 = vsel %vm242, %v866, 0
      %946 = vmatpush.msra.mxu0 0.0
      %947 = vmatpush.msra.mxu0 0.0
      %948 = vmatpush.msra.mxu0 0.0
      %949 = vmatpush.msra.mxu0 0.0
      %950 = vmatpush.msra.mxu0 0.0
      %951 = vmatpush.msra.mxu0 0.0
      %952 = vmatpush.msra.mxu0 0.0
      %953 = vmatpush.msra.mxu0 0.0
      %954 = vmatpush.msra.mxu0 0.0
      %955 = vmatpush.msra.mxu0 0.0
      %956 = vmatpush.msra.mxu0 0.0
      %957 = vmatpush.msra.mxu0 0.0
      %958 = vmatpush.msra.mxu0 0.0
      %959 = vmatpush.msra.mxu0 0.0
      %960 = vmatpush.msra.mxu0 0.0
      %961 = vmatpush.msra.mxu0 %v944
      %962 = vmatmul.f32.gmra.mxu0 %v941
      %v963 = vpop.f32.mrf.mxu0
      %v964 = vadd.f32 %v938, %v963
      %965 = vdwg.mxu0
      %v966 = vld [vmem:[%s540] sm:$0xff]
      %v968 = vsel %vm487, %v966, 0
      %v971 = vsel %vm242, %v889, 0
      %973 = vmatpush.msra.mxu0 0.0
      %974 = vmatpush.msra.mxu0 0.0
      %975 = vmatpush.msra.mxu0 0.0
      %976 = vmatpush.msra.mxu0 0.0
      %977 = vmatpush.msra.mxu0 0.0
      %978 = vmatpush.msra.mxu0 0.0
      %979 = vmatpush.msra.mxu0 0.0
      %980 = vmatpush.msra.mxu0 0.0
      %981 = vmatpush.msra.mxu0 0.0
      %982 = vmatpush.msra.mxu0 0.0
      %983 = vmatpush.msra.mxu0 0.0
      %984 = vmatpush.msra.mxu0 0.0
      %985 = vmatpush.msra.mxu0 0.0
      %986 = vmatpush.msra.mxu0 0.0
      %987 = vmatpush.msra.mxu0 0.0
      %988 = vmatpush.msra.mxu0 %v971
      %989 = vmatmul.f32.gmra.mxu0 %v968
      %v990 = vpop.f32.mrf.mxu0
      %v991 = vadd.f32 0.0, %v990
      %992 = vdwg.mxu0
      %v993 = vadd.f32 %v964, %v991
      %v994 = vld [vmem:[%s569] sm:$0xff]
      %v996 = vsel %vm487, %v994, 0
      %v999 = vsel %vm242, %v899, 0
      %1001 = vmatpush.msra.mxu0 0.0
      %1002 = vmatpush.msra.mxu0 0.0
      %1003 = vmatpush.msra.mxu0 0.0
      %1004 = vmatpush.msra.mxu0 0.0
      %1005 = vmatpush.msra.mxu0 0.0
      %1006 = vmatpush.msra.mxu0 0.0
      %1007 = vmatpush.msra.mxu0 0.0
      %1008 = vmatpush.msra.mxu0 0.0
      %1009 = vmatpush.msra.mxu0 0.0
      %1010 = vmatpush.msra.mxu0 0.0
      %1011 = vmatpush.msra.mxu0 0.0
      %1012 = vmatpush.msra.mxu0 0.0
      %1013 = vmatpush.msra.mxu0 0.0
      %1014 = vmatpush.msra.mxu0 0.0
      %1015 = vmatpush.msra.mxu0 0.0
      %1016 = vmatpush.msra.mxu0 %v999
      %1017 = vmatmul.f32.gmra.mxu0 %v996
      %v1018 = vpop.f32.mrf.mxu0
      %v1019 = vadd.f32 0.0, %v1018
      %1020 = vdwg.mxu0
      %v1021 = vadd.f32 %v993, %v1019
      %v1022 = vld [vmem:[%s598] sm:$0xff]
      %v1024 = vsel %vm487, %v1022, 0
      %v1027 = vsel %vm242, %v909, 0
      %1029 = vmatpush.msra.mxu0 0.0
      %1030 = vmatpush.msra.mxu0 0.0
      %1031 = vmatpush.msra.mxu0 0.0
      %1032 = vmatpush.msra.mxu0 0.0
      %1033 = vmatpush.msra.mxu0 0.0
      %1034 = vmatpush.msra.mxu0 0.0
      %1035 = vmatpush.msra.mxu0 0.0
      %1036 = vmatpush.msra.mxu0 0.0
      %1037 = vmatpush.msra.mxu0 0.0
      %1038 = vmatpush.msra.mxu0 0.0
      %1039 = vmatpush.msra.mxu0 0.0
      %1040 = vmatpush.msra.mxu0 0.0
      %1041 = vmatpush.msra.mxu0 0.0
      %1042 = vmatpush.msra.mxu0 0.0
      %1043 = vmatpush.msra.mxu0 0.0
      %1044 = vmatpush.msra.mxu0 %v1027
      %1045 = vmatmul.f32.gmra.mxu0 %v1024
      %v1046 = vpop.f32.mrf.mxu0
      %v1047 = vadd.f32 0.0, %v1046
      %1048 = vdwg.mxu0
      %v1049 = vadd.f32 %v1021, %v1047
      %v1050 = vld [vmem:[%s627] sm:$0xff]
      %v1052 = vsel %vm487, %v1050, 0
      %v1055 = vsel %vm242, %v911, 0
      %1057 = vmatpush.msra.mxu0 0.0
      %1058 = vmatpush.msra.mxu0 0.0
      %1059 = vmatpush.msra.mxu0 0.0
      %1060 = vmatpush.msra.mxu0 0.0
      %1061 = vmatpush.msra.mxu0 0.0
      %1062 = vmatpush.msra.mxu0 0.0
      %1063 = vmatpush.msra.mxu0 0.0
      %1064 = vmatpush.msra.mxu0 0.0
      %1065 = vmatpush.msra.mxu0 0.0
      %1066 = vmatpush.msra.mxu0 0.0
      %1067 = vmatpush.msra.mxu0 0.0
      %1068 = vmatpush.msra.mxu0 0.0
      %1069 = vmatpush.msra.mxu0 0.0
      %1070 = vmatpush.msra.mxu0 0.0
      %1071 = vmatpush.msra.mxu0 0.0
      %1072 = vmatpush.msra.mxu0 %v1055
      %1073 = vmatmul.f32.gmra.mxu0 %v1052
      %v1074 = vpop.f32.mrf.mxu0
      %v1075 = vadd.f32 0.0, %v1074
      %1076 = vdwg.mxu0
      %v1077 = vadd.f32 %v1049, %v1075
      %v1078 = vld [vmem:[%s3] sm:$0xff]
      %1080 = vset.pattern.permute.xlu0 0
      %1081 = vperm.xlu0 %1080, %v1078
      %v1082 = vpop.permute.xlu0 %1081
      %v1084 = vadd.f32 %v1077, %v1082
      %s1085 = scalar_lea.vmem %s214, 8
      %1086 = vst [vmem:[%s1085] sm:$0xff] %v1084
      %s1087 = sadd.s32 %s233, 2
      %p1088 = scmp.lt.s32.totalorder %s1087, 7
      %s1089 = scalar_select %p1088, %s1087, 7
      %s1090 = smul.u32 %s1089, 8
      %s1091 = scalar_lea.vmem %s206, %s1090
      %v1092 = vld [vmem:[%s1091] sm:$0x1f]
      %v1093 = vadd.f32 %v1092, 0.0
      %v1094 = vmul.f32 %v1093, 0.5
      %v1095 = vmul.f32 %v1094, %v223
      %v1096 = vsel %vm242, %v1095, 0.0
      %v1097 = vrot.slane %v1096, 4
      %v1098 = vadd.f32 %v1096, %v1097
      %v1099 = vrot.slane %v1098, 2
      %v1100 = vadd.f32 %v1098, %v1099
      %v1101 = vrot.slane %v1100, 1
      %v1102 = vadd.f32 %v1100, %v1101
      %v1103 = vmul.f32 %v1102, %v1092
      %v1104 = vadd.f32 %v1103, 0.0
      %v1105 = vmul.f32 %v1094, %v226
      %v1106 = vsel %vm242, %v1105, 0.0
      %v1107 = vrot.slane %v1106, 4
      %v1108 = vadd.f32 %v1106, %v1107
      %v1109 = vrot.slane %v1108, 2
      %v1110 = vadd.f32 %v1108, %v1109
      %v1111 = vrot.slane %v1110, 1
      %v1112 = vadd.f32 %v1110, %v1111
      %v1113 = vmul.f32 %v1112, %v1092
      %v1114 = vadd.f32 %v1113, 0.0
      %v1115 = vmul.f32 %v1094, %v229
      %v1116 = vsel %vm242, %v1115, 0.0
      %v1117 = vrot.slane %v1116, 4
      %v1118 = vadd.f32 %v1116, %v1117
      %v1119 = vrot.slane %v1118, 2
      %v1120 = vadd.f32 %v1118, %v1119
      %v1121 = vrot.slane %v1120, 1
      %v1122 = vadd.f32 %v1120, %v1121
      %v1123 = vmul.f32 %v1122, %v1092
      %v1124 = vadd.f32 %v1123, 0.0
      %v1125 = vmul.f32 %v1094, %v232
      %v1126 = vsel %vm242, %v1125, 0.0
      %v1127 = vrot.slane %v1126, 4
      %v1128 = vadd.f32 %v1126, %v1127
      %v1129 = vrot.slane %v1128, 2
      %v1130 = vadd.f32 %v1128, %v1129
      %v1131 = vrot.slane %v1130, 1
      %v1132 = vadd.f32 %v1130, %v1131
      %v1133 = vmul.f32 %v1132, %v1092
      %v1134 = vadd.f32 %v1133, 0.0
      %s1135 = sadd.s32 %s1089, 1
      %s1136 = smul.u32 %s1135, 8
      %s1137 = scalar_lea.vmem %s206, %s1136
      %v1138 = vld [vmem:[%s1137] sm:$0x1f]
      %v1139 = vadd.f32 %v1138, %v286
      %v1140 = vsub.f32 %v1139, %v1092
      %v1141 = vadd.f32 %v1139, %v1092
      %v1142 = vmul.f32 %v1141, 0.5
      %v1143 = vmul.f32 %v1142, %v223
      %v1144 = vsel %vm242, %v1143, 0.0
      %v1145 = vrot.slane %v1144, 4
      %v1146 = vadd.f32 %v1144, %v1145
      %v1147 = vrot.slane %v1146, 2
      %v1148 = vadd.f32 %v1146, %v1147
      %v1149 = vrot.slane %v1148, 1
      %v1150 = vadd.f32 %v1148, %v1149
      %v1151 = vmul.f32 %v1150, %v1140
      %v1152 = vadd.f32 %v1104, %v1151
      %v1153 = vmul.f32 %v1142, %v226
      %v1154 = vsel %vm242, %v1153, 0.0
      %v1155 = vrot.slane %v1154, 4
      %v1156 = vadd.f32 %v1154, %v1155
      %v1157 = vrot.slane %v1156, 2
      %v1158 = vadd.f32 %v1156, %v1157
      %v1159 = vrot.slane %v1158, 1
      %v1160 = vadd.f32 %v1158, %v1159
      %v1161 = vmul.f32 %v1160, %v1140
      %v1162 = vadd.f32 %v1114, %v1161
      %v1163 = vmul.f32 %v1142, %v229
      %v1164 = vsel %vm242, %v1163, 0.0
      %v1165 = vrot.slane %v1164, 4
      %v1166 = vadd.f32 %v1164, %v1165
      %v1167 = vrot.slane %v1166, 2
      %v1168 = vadd.f32 %v1166, %v1167
      %v1169 = vrot.slane %v1168, 1
      %v1170 = vadd.f32 %v1168, %v1169
      %v1171 = vmul.f32 %v1170, %v1140
      %v1172 = vadd.f32 %v1124, %v1171
      %v1173 = vmul.f32 %v1142, %v232
      %v1174 = vsel %vm242, %v1173, 0.0
      %v1175 = vrot.slane %v1174, 4
      %v1176 = vadd.f32 %v1174, %v1175
      %v1177 = vrot.slane %v1176, 2
      %v1178 = vadd.f32 %v1176, %v1177
      %v1179 = vrot.slane %v1178, 1
      %v1180 = vadd.f32 %v1178, %v1179
      %v1181 = vmul.f32 %v1180, %v1140
      %v1182 = vadd.f32 %v1134, %v1181
      %v1183 = vmul.f32 %v1140, 0.125
      %v1184 = vadd.f32 %v1183, 0.0
      %s1185 = sadd.s32 %s1089, 2
      %s1186 = smul.u32 %s1185, 8
      %s1187 = scalar_lea.vmem %s206, %s1186
      %v1188 = vld [vmem:[%s1187] sm:$0x1f]
      %v1189 = vadd.f32 %v1188, %v337
      %v1190 = vsub.f32 %v1189, %v1139
      %v1191 = vadd.f32 %v1189, %v1139
      %v1192 = vmul.f32 %v1191, 0.5
      %v1193 = vmul.f32 %v1192, %v223
      %v1194 = vsel %vm242, %v1193, 0.0
      %v1195 = vrot.slane %v1194, 4
      %v1196 = vadd.f32 %v1194, %v1195
      %v1197 = vrot.slane %v1196, 2
      %v1198 = vadd.f32 %v1196, %v1197
      %v1199 = vrot.slane %v1198, 1
      %v1200 = vadd.f32 %v1198, %v1199
      %v1201 = vmul.f32 %v1200, %v1190
      %v1202 = vadd.f32 %v1152, %v1201
      %v1203 = vmul.f32 %v1192, %v226
      %v1204 = vsel %vm242, %v1203, 0.0
      %v1205 = vrot.slane %v1204, 4
      %v1206 = vadd.f32 %v1204, %v1205
      %v1207 = vrot.slane %v1206, 2
      %v1208 = vadd.f32 %v1206, %v1207
      %v1209 = vrot.slane %v1208, 1
      %v1210 = vadd.f32 %v1208, %v1209
      %v1211 = vmul.f32 %v1210, %v1190
      %v1212 = vadd.f32 %v1162, %v1211
      %v1213 = vmul.f32 %v1192, %v229
      %v1214 = vsel %vm242, %v1213, 0.0
      %v1215 = vrot.slane %v1214, 4
      %v1216 = vadd.f32 %v1214, %v1215
      %v1217 = vrot.slane %v1216, 2
      %v1218 = vadd.f32 %v1216, %v1217
      %v1219 = vrot.slane %v1218, 1
      %v1220 = vadd.f32 %v1218, %v1219
      %v1221 = vmul.f32 %v1220, %v1190
      %v1222 = vadd.f32 %v1172, %v1221
      %v1223 = vmul.f32 %v1192, %v232
      %v1224 = vsel %vm242, %v1223, 0.0
      %v1225 = vrot.slane %v1224, 4
      %v1226 = vadd.f32 %v1224, %v1225
      %v1227 = vrot.slane %v1226, 2
      %v1228 = vadd.f32 %v1226, %v1227
      %v1229 = vrot.slane %v1228, 1
      %v1230 = vadd.f32 %v1228, %v1229
      %v1231 = vmul.f32 %v1230, %v1190
      %v1232 = vadd.f32 %v1182, %v1231
      %v1233 = vmul.f32 %v1190, 0.375
      %v1234 = vadd.f32 %v1184, %v1233
      %s1235 = sadd.s32 %s1089, 3
      %s1236 = smul.u32 %s1235, 8
      %s1237 = scalar_lea.vmem %s206, %s1236
      %v1238 = vld [vmem:[%s1237] sm:$0x1f]
      %v1239 = vadd.f32 %v1238, %v388
      %v1240 = vsub.f32 %v1239, %v1189
      %v1241 = vadd.f32 %v1239, %v1189
      %v1242 = vmul.f32 %v1241, 0.5
      %v1243 = vmul.f32 %v1242, %v223
      %v1244 = vsel %vm242, %v1243, 0.0
      %v1245 = vrot.slane %v1244, 4
      %v1246 = vadd.f32 %v1244, %v1245
      %v1247 = vrot.slane %v1246, 2
      %v1248 = vadd.f32 %v1246, %v1247
      %v1249 = vrot.slane %v1248, 1
      %v1250 = vadd.f32 %v1248, %v1249
      %v1251 = vmul.f32 %v1250, %v1240
      %v1252 = vadd.f32 %v1202, %v1251
      %v1253 = vmul.f32 %v1242, %v226
      %v1254 = vsel %vm242, %v1253, 0.0
      %v1255 = vrot.slane %v1254, 4
      %v1256 = vadd.f32 %v1254, %v1255
      %v1257 = vrot.slane %v1256, 2
      %v1258 = vadd.f32 %v1256, %v1257
      %v1259 = vrot.slane %v1258, 1
      %v1260 = vadd.f32 %v1258, %v1259
      %v1261 = vmul.f32 %v1260, %v1240
      %v1262 = vadd.f32 %v1212, %v1261
      %v1263 = vmul.f32 %v1242, %v229
      %v1264 = vsel %vm242, %v1263, 0.0
      %v1265 = vrot.slane %v1264, 4
      %v1266 = vadd.f32 %v1264, %v1265
      %v1267 = vrot.slane %v1266, 2
      %v1268 = vadd.f32 %v1266, %v1267
      %v1269 = vrot.slane %v1268, 1
      %v1270 = vadd.f32 %v1268, %v1269
      %v1271 = vmul.f32 %v1270, %v1240
      %v1272 = vadd.f32 %v1222, %v1271
      %v1273 = vmul.f32 %v1242, %v232
      %v1274 = vsel %vm242, %v1273, 0.0
      %v1275 = vrot.slane %v1274, 4
      %v1276 = vadd.f32 %v1274, %v1275
      %v1277 = vrot.slane %v1276, 2
      %v1278 = vadd.f32 %v1276, %v1277
      %v1279 = vrot.slane %v1278, 1
      %v1280 = vadd.f32 %v1278, %v1279
      %v1281 = vmul.f32 %v1280, %v1240
      %v1282 = vadd.f32 %v1232, %v1281
      %v1283 = vmul.f32 %v1240, 0.625
      %v1284 = vadd.f32 %v1234, %v1283
      %s1285 = sadd.s32 %s1089, 4
      %s1286 = smul.u32 %s1285, 8
      %s1287 = scalar_lea.vmem %s206, %s1286
      %v1288 = vld [vmem:[%s1287] sm:$0x1f]
      %v1289 = vadd.f32 %v1288, %v220
      %v1290 = vsub.f32 %v1289, %v1239
      %v1291 = vadd.f32 %v1289, %v1239
      %v1292 = vmul.f32 %v1291, 0.5
      %v1293 = vmul.f32 %v1292, %v223
      %v1294 = vsel %vm242, %v1293, 0.0
      %v1295 = vrot.slane %v1294, 4
      %v1296 = vadd.f32 %v1294, %v1295
      %v1297 = vrot.slane %v1296, 2
      %v1298 = vadd.f32 %v1296, %v1297
      %v1299 = vrot.slane %v1298, 1
      %v1300 = vadd.f32 %v1298, %v1299
      %v1301 = vmul.f32 %v1300, %v1290
      %v1302 = vadd.f32 %v1252, %v1301
      %v1303 = vmul.f32 %v1292, %v226
      %v1304 = vsel %vm242, %v1303, 0.0
      %v1305 = vrot.slane %v1304, 4
      %v1306 = vadd.f32 %v1304, %v1305
      %v1307 = vrot.slane %v1306, 2
      %v1308 = vadd.f32 %v1306, %v1307
      %v1309 = vrot.slane %v1308, 1
      %v1310 = vadd.f32 %v1308, %v1309
      %v1311 = vmul.f32 %v1310, %v1290
      %v1312 = vadd.f32 %v1262, %v1311
      %v1313 = vmul.f32 %v1292, %v229
      %v1314 = vsel %vm242, %v1313, 0.0
      %v1315 = vrot.slane %v1314, 4
      %v1316 = vadd.f32 %v1314, %v1315
      %v1317 = vrot.slane %v1316, 2
      %v1318 = vadd.f32 %v1316, %v1317
      %v1319 = vrot.slane %v1318, 1
      %v1320 = vadd.f32 %v1318, %v1319
      %v1321 = vmul.f32 %v1320, %v1290
      %v1322 = vadd.f32 %v1272, %v1321
      %v1323 = vmul.f32 %v1292, %v232
      %v1324 = vsel %vm242, %v1323, 0.0
      %v1325 = vrot.slane %v1324, 4
      %v1326 = vadd.f32 %v1324, %v1325
      %v1327 = vrot.slane %v1326, 2
      %v1328 = vadd.f32 %v1326, %v1327
      %v1329 = vrot.slane %v1328, 1
      %v1330 = vadd.f32 %v1328, %v1329
      %v1331 = vmul.f32 %v1330, %v1290
      %v1332 = vadd.f32 %v1282, %v1331
      %v1333 = vmul.f32 %v1290, 0.875
      %v1334 = vadd.f32 %v1284, %v1333
      %v1335 = vld [vmem:[%s1] sm:$0xff]
      %v1336 = vld [vmem:[%s2] sm:$0xff]
      %v1338 = vsel %vm487, %v1336, 0
      %v1341 = vsel %vm242, %v1302, 0
      %1343 = vmatpush.msra.mxu0 0.0
      %1344 = vmatpush.msra.mxu0 0.0
      %1345 = vmatpush.msra.mxu0 0.0
      %1346 = vmatpush.msra.mxu0 0.0
      %1347 = vmatpush.msra.mxu0 0.0
      %1348 = vmatpush.msra.mxu0 0.0
      %1349 = vmatpush.msra.mxu0 0.0
      %1350 = vmatpush.msra.mxu0 0.0
      %1351 = vmatpush.msra.mxu0 0.0
      %1352 = vmatpush.msra.mxu0 0.0
      %1353 = vmatpush.msra.mxu0 0.0
      %1354 = vmatpush.msra.mxu0 0.0
      %1355 = vmatpush.msra.mxu0 0.0
      %1356 = vmatpush.msra.mxu0 0.0
      %1357 = vmatpush.msra.mxu0 0.0
      %1358 = vmatpush.msra.mxu0 %v1341
      %1359 = vmatmul.f32.gmra.mxu0 %v1338
      %v1360 = vpop.f32.mrf.mxu0
      %v1361 = vadd.f32 0.0, %v1360
      %1362 = vdwg.mxu0
      %v1364 = vsel %vm487, %v1335, 0
      %v1367 = vsel %vm242, %v1289, 0
      %1369 = vmatpush.msra.mxu0 0.0
      %1370 = vmatpush.msra.mxu0 0.0
      %1371 = vmatpush.msra.mxu0 0.0
      %1372 = vmatpush.msra.mxu0 0.0
      %1373 = vmatpush.msra.mxu0 0.0
      %1374 = vmatpush.msra.mxu0 0.0
      %1375 = vmatpush.msra.mxu0 0.0
      %1376 = vmatpush.msra.mxu0 0.0
      %1377 = vmatpush.msra.mxu0 0.0
      %1378 = vmatpush.msra.mxu0 0.0
      %1379 = vmatpush.msra.mxu0 0.0
      %1380 = vmatpush.msra.mxu0 0.0
      %1381 = vmatpush.msra.mxu0 0.0
      %1382 = vmatpush.msra.mxu0 0.0
      %1383 = vmatpush.msra.mxu0 0.0
      %1384 = vmatpush.msra.mxu0 %v1367
      %1385 = vmatmul.f32.gmra.mxu0 %v1364
      %v1386 = vpop.f32.mrf.mxu0
      %v1387 = vadd.f32 %v1361, %v1386
      %1388 = vdwg.mxu0
      %v1389 = vld [vmem:[%s540] sm:$0xff]
      %v1391 = vsel %vm487, %v1389, 0
      %v1394 = vsel %vm242, %v1312, 0
      %1396 = vmatpush.msra.mxu0 0.0
      %1397 = vmatpush.msra.mxu0 0.0
      %1398 = vmatpush.msra.mxu0 0.0
      %1399 = vmatpush.msra.mxu0 0.0
      %1400 = vmatpush.msra.mxu0 0.0
      %1401 = vmatpush.msra.mxu0 0.0
      %1402 = vmatpush.msra.mxu0 0.0
      %1403 = vmatpush.msra.mxu0 0.0
      %1404 = vmatpush.msra.mxu0 0.0
      %1405 = vmatpush.msra.mxu0 0.0
      %1406 = vmatpush.msra.mxu0 0.0
      %1407 = vmatpush.msra.mxu0 0.0
      %1408 = vmatpush.msra.mxu0 0.0
      %1409 = vmatpush.msra.mxu0 0.0
      %1410 = vmatpush.msra.mxu0 0.0
      %1411 = vmatpush.msra.mxu0 %v1394
      %1412 = vmatmul.f32.gmra.mxu0 %v1391
      %v1413 = vpop.f32.mrf.mxu0
      %v1414 = vadd.f32 0.0, %v1413
      %1415 = vdwg.mxu0
      %v1416 = vadd.f32 %v1387, %v1414
      %v1417 = vld [vmem:[%s569] sm:$0xff]
      %v1419 = vsel %vm487, %v1417, 0
      %v1422 = vsel %vm242, %v1322, 0
      %1424 = vmatpush.msra.mxu0 0.0
      %1425 = vmatpush.msra.mxu0 0.0
      %1426 = vmatpush.msra.mxu0 0.0
      %1427 = vmatpush.msra.mxu0 0.0
      %1428 = vmatpush.msra.mxu0 0.0
      %1429 = vmatpush.msra.mxu0 0.0
      %1430 = vmatpush.msra.mxu0 0.0
      %1431 = vmatpush.msra.mxu0 0.0
      %1432 = vmatpush.msra.mxu0 0.0
      %1433 = vmatpush.msra.mxu0 0.0
      %1434 = vmatpush.msra.mxu0 0.0
      %1435 = vmatpush.msra.mxu0 0.0
      %1436 = vmatpush.msra.mxu0 0.0
      %1437 = vmatpush.msra.mxu0 0.0
      %1438 = vmatpush.msra.mxu0 0.0
      %1439 = vmatpush.msra.mxu0 %v1422
      %1440 = vmatmul.f32.gmra.mxu0 %v1419
      %v1441 = vpop.f32.mrf.mxu0
      %v1442 = vadd.f32 0.0, %v1441
      %1443 = vdwg.mxu0
      %v1444 = vadd.f32 %v1416, %v1442
      %v1445 = vld [vmem:[%s598] sm:$0xff]
      %v1447 = vsel %vm487, %v1445, 0
      %v1450 = vsel %vm242, %v1332, 0
      %1452 = vmatpush.msra.mxu0 0.0
      %1453 = vmatpush.msra.mxu0 0.0
      %1454 = vmatpush.msra.mxu0 0.0
      %1455 = vmatpush.msra.mxu0 0.0
      %1456 = vmatpush.msra.mxu0 0.0
      %1457 = vmatpush.msra.mxu0 0.0
      %1458 = vmatpush.msra.mxu0 0.0
      %1459 = vmatpush.msra.mxu0 0.0
      %1460 = vmatpush.msra.mxu0 0.0
      %1461 = vmatpush.msra.mxu0 0.0
      %1462 = vmatpush.msra.mxu0 0.0
      %1463 = vmatpush.msra.mxu0 0.0
      %1464 = vmatpush.msra.mxu0 0.0
      %1465 = vmatpush.msra.mxu0 0.0
      %1466 = vmatpush.msra.mxu0 0.0
      %1467 = vmatpush.msra.mxu0 %v1450
      %1468 = vmatmul.f32.gmra.mxu0 %v1447
      %v1469 = vpop.f32.mrf.mxu0
      %v1470 = vadd.f32 0.0, %v1469
      %1471 = vdwg.mxu0
      %v1472 = vadd.f32 %v1444, %v1470
      %v1473 = vld [vmem:[%s627] sm:$0xff]
      %v1475 = vsel %vm487, %v1473, 0
      %v1478 = vsel %vm242, %v1334, 0
      %1480 = vmatpush.msra.mxu0 0.0
      %1481 = vmatpush.msra.mxu0 0.0
      %1482 = vmatpush.msra.mxu0 0.0
      %1483 = vmatpush.msra.mxu0 0.0
      %1484 = vmatpush.msra.mxu0 0.0
      %1485 = vmatpush.msra.mxu0 0.0
      %1486 = vmatpush.msra.mxu0 0.0
      %1487 = vmatpush.msra.mxu0 0.0
      %1488 = vmatpush.msra.mxu0 0.0
      %1489 = vmatpush.msra.mxu0 0.0
      %1490 = vmatpush.msra.mxu0 0.0
      %1491 = vmatpush.msra.mxu0 0.0
      %1492 = vmatpush.msra.mxu0 0.0
      %1493 = vmatpush.msra.mxu0 0.0
      %1494 = vmatpush.msra.mxu0 0.0
      %1495 = vmatpush.msra.mxu0 %v1478
      %1496 = vmatmul.f32.gmra.mxu0 %v1475
      %v1497 = vpop.f32.mrf.mxu0
      %v1498 = vadd.f32 0.0, %v1497
      %1499 = vdwg.mxu0
      %v1500 = vadd.f32 %v1472, %v1498
      %v1501 = vld [vmem:[%s3] sm:$0xff]
      %1503 = vset.pattern.permute.xlu0 0
      %1504 = vperm.xlu0 %1503, %v1501
      %v1505 = vpop.permute.xlu0 %1504
      %v1507 = vadd.f32 %v1500, %v1505
      %s1508 = scalar_lea.vmem %s214, 16
      %1509 = vst [vmem:[%s1508] sm:$0xff] %v1507
      %s1510 = sadd.s32 %s233, 3
      %p1511 = scmp.lt.s32.totalorder %s1510, 7
      %s1512 = scalar_select %p1511, %s1510, 7
      %s1513 = smul.u32 %s1512, 8
      %s1514 = scalar_lea.vmem %s206, %s1513
      %v1515 = vld [vmem:[%s1514] sm:$0x1f]
      %v1516 = vadd.f32 %v1515, 0.0
      %v1517 = vmul.f32 %v1516, 0.5
      %v1518 = vmul.f32 %v1517, %v223
      %v1519 = vsel %vm242, %v1518, 0.0
      %v1520 = vrot.slane %v1519, 4
      %v1521 = vadd.f32 %v1519, %v1520
      %v1522 = vrot.slane %v1521, 2
      %v1523 = vadd.f32 %v1521, %v1522
      %v1524 = vrot.slane %v1523, 1
      %v1525 = vadd.f32 %v1523, %v1524
      %v1526 = vmul.f32 %v1525, %v1515
      %v1527 = vadd.f32 %v1526, 0.0
      %v1528 = vmul.f32 %v1517, %v226
      %v1529 = vsel %vm242, %v1528, 0.0
      %v1530 = vrot.slane %v1529, 4
      %v1531 = vadd.f32 %v1529, %v1530
      %v1532 = vrot.slane %v1531, 2
      %v1533 = vadd.f32 %v1531, %v1532
      %v1534 = vrot.slane %v1533, 1
      %v1535 = vadd.f32 %v1533, %v1534
      %v1536 = vmul.f32 %v1535, %v1515
      %v1537 = vadd.f32 %v1536, 0.0
      %v1538 = vmul.f32 %v1517, %v229
      %v1539 = vsel %vm242, %v1538, 0.0
      %v1540 = vrot.slane %v1539, 4
      %v1541 = vadd.f32 %v1539, %v1540
      %v1542 = vrot.slane %v1541, 2
      %v1543 = vadd.f32 %v1541, %v1542
      %v1544 = vrot.slane %v1543, 1
      %v1545 = vadd.f32 %v1543, %v1544
      %v1546 = vmul.f32 %v1545, %v1515
      %v1547 = vadd.f32 %v1546, 0.0
      %v1548 = vmul.f32 %v1517, %v232
      %v1549 = vsel %vm242, %v1548, 0.0
      %v1550 = vrot.slane %v1549, 4
      %v1551 = vadd.f32 %v1549, %v1550
      %v1552 = vrot.slane %v1551, 2
      %v1553 = vadd.f32 %v1551, %v1552
      %v1554 = vrot.slane %v1553, 1
      %v1555 = vadd.f32 %v1553, %v1554
      %v1556 = vmul.f32 %v1555, %v1515
      %v1557 = vadd.f32 %v1556, 0.0
      %s1558 = sadd.s32 %s1512, 1
      %s1559 = smul.u32 %s1558, 8
      %s1560 = scalar_lea.vmem %s206, %s1559
      %v1561 = vld [vmem:[%s1560] sm:$0x1f]
      %v1562 = vadd.f32 %v1561, %v286
      %v1563 = vsub.f32 %v1562, %v1515
      %v1564 = vadd.f32 %v1562, %v1515
      %v1565 = vmul.f32 %v1564, 0.5
      %v1566 = vmul.f32 %v1565, %v223
      %v1567 = vsel %vm242, %v1566, 0.0
      %v1568 = vrot.slane %v1567, 4
      %v1569 = vadd.f32 %v1567, %v1568
      %v1570 = vrot.slane %v1569, 2
      %v1571 = vadd.f32 %v1569, %v1570
      %v1572 = vrot.slane %v1571, 1
      %v1573 = vadd.f32 %v1571, %v1572
      %v1574 = vmul.f32 %v1573, %v1563
      %v1575 = vadd.f32 %v1527, %v1574
      %v1576 = vmul.f32 %v1565, %v226
      %v1577 = vsel %vm242, %v1576, 0.0
      %v1578 = vrot.slane %v1577, 4
      %v1579 = vadd.f32 %v1577, %v1578
      %v1580 = vrot.slane %v1579, 2
      %v1581 = vadd.f32 %v1579, %v1580
      %v1582 = vrot.slane %v1581, 1
      %v1583 = vadd.f32 %v1581, %v1582
      %v1584 = vmul.f32 %v1583, %v1563
      %v1585 = vadd.f32 %v1537, %v1584
      %v1586 = vmul.f32 %v1565, %v229
      %v1587 = vsel %vm242, %v1586, 0.0
      %v1588 = vrot.slane %v1587, 4
      %v1589 = vadd.f32 %v1587, %v1588
      %v1590 = vrot.slane %v1589, 2
      %v1591 = vadd.f32 %v1589, %v1590
      %v1592 = vrot.slane %v1591, 1
      %v1593 = vadd.f32 %v1591, %v1592
      %v1594 = vmul.f32 %v1593, %v1563
      %v1595 = vadd.f32 %v1547, %v1594
      %v1596 = vmul.f32 %v1565, %v232
      %v1597 = vsel %vm242, %v1596, 0.0
      %v1598 = vrot.slane %v1597, 4
      %v1599 = vadd.f32 %v1597, %v1598
      %v1600 = vrot.slane %v1599, 2
      %v1601 = vadd.f32 %v1599, %v1600
      %v1602 = vrot.slane %v1601, 1
      %v1603 = vadd.f32 %v1601, %v1602
      %v1604 = vmul.f32 %v1603, %v1563
      %v1605 = vadd.f32 %v1557, %v1604
      %v1606 = vmul.f32 %v1563, 0.125
      %v1607 = vadd.f32 %v1606, 0.0
      %s1608 = sadd.s32 %s1512, 2
      %s1609 = smul.u32 %s1608, 8
      %s1610 = scalar_lea.vmem %s206, %s1609
      %v1611 = vld [vmem:[%s1610] sm:$0x1f]
      %v1612 = vadd.f32 %v1611, %v337
      %v1613 = vsub.f32 %v1612, %v1562
      %v1614 = vadd.f32 %v1612, %v1562
      %v1615 = vmul.f32 %v1614, 0.5
      %v1616 = vmul.f32 %v1615, %v223
      %v1617 = vsel %vm242, %v1616, 0.0
      %v1618 = vrot.slane %v1617, 4
      %v1619 = vadd.f32 %v1617, %v1618
      %v1620 = vrot.slane %v1619, 2
      %v1621 = vadd.f32 %v1619, %v1620
      %v1622 = vrot.slane %v1621, 1
      %v1623 = vadd.f32 %v1621, %v1622
      %v1624 = vmul.f32 %v1623, %v1613
      %v1625 = vadd.f32 %v1575, %v1624
      %v1626 = vmul.f32 %v1615, %v226
      %v1627 = vsel %vm242, %v1626, 0.0
      %v1628 = vrot.slane %v1627, 4
      %v1629 = vadd.f32 %v1627, %v1628
      %v1630 = vrot.slane %v1629, 2
      %v1631 = vadd.f32 %v1629, %v1630
      %v1632 = vrot.slane %v1631, 1
      %v1633 = vadd.f32 %v1631, %v1632
      %v1634 = vmul.f32 %v1633, %v1613
      %v1635 = vadd.f32 %v1585, %v1634
      %v1636 = vmul.f32 %v1615, %v229
      %v1637 = vsel %vm242, %v1636, 0.0
      %v1638 = vrot.slane %v1637, 4
      %v1639 = vadd.f32 %v1637, %v1638
      %v1640 = vrot.slane %v1639, 2
      %v1641 = vadd.f32 %v1639, %v1640
      %v1642 = vrot.slane %v1641, 1
      %v1643 = vadd.f32 %v1641, %v1642
      %v1644 = vmul.f32 %v1643, %v1613
      %v1645 = vadd.f32 %v1595, %v1644
      %v1646 = vmul.f32 %v1615, %v232
      %v1647 = vsel %vm242, %v1646, 0.0
      %v1648 = vrot.slane %v1647, 4
      %v1649 = vadd.f32 %v1647, %v1648
      %v1650 = vrot.slane %v1649, 2
      %v1651 = vadd.f32 %v1649, %v1650
      %v1652 = vrot.slane %v1651, 1
      %v1653 = vadd.f32 %v1651, %v1652
      %v1654 = vmul.f32 %v1653, %v1613
      %v1655 = vadd.f32 %v1605, %v1654
      %v1656 = vmul.f32 %v1613, 0.375
      %v1657 = vadd.f32 %v1607, %v1656
      %s1658 = sadd.s32 %s1512, 3
      %s1659 = smul.u32 %s1658, 8
      %s1660 = scalar_lea.vmem %s206, %s1659
      %v1661 = vld [vmem:[%s1660] sm:$0x1f]
      %v1662 = vadd.f32 %v1661, %v388
      %v1663 = vsub.f32 %v1662, %v1612
      %v1664 = vadd.f32 %v1662, %v1612
      %v1665 = vmul.f32 %v1664, 0.5
      %v1666 = vmul.f32 %v1665, %v223
      %v1667 = vsel %vm242, %v1666, 0.0
      %v1668 = vrot.slane %v1667, 4
      %v1669 = vadd.f32 %v1667, %v1668
      %v1670 = vrot.slane %v1669, 2
      %v1671 = vadd.f32 %v1669, %v1670
      %v1672 = vrot.slane %v1671, 1
      %v1673 = vadd.f32 %v1671, %v1672
      %v1674 = vmul.f32 %v1673, %v1663
      %v1675 = vadd.f32 %v1625, %v1674
      %v1676 = vmul.f32 %v1665, %v226
      %v1677 = vsel %vm242, %v1676, 0.0
      %v1678 = vrot.slane %v1677, 4
      %v1679 = vadd.f32 %v1677, %v1678
      %v1680 = vrot.slane %v1679, 2
      %v1681 = vadd.f32 %v1679, %v1680
      %v1682 = vrot.slane %v1681, 1
      %v1683 = vadd.f32 %v1681, %v1682
      %v1684 = vmul.f32 %v1683, %v1663
      %v1685 = vadd.f32 %v1635, %v1684
      %v1686 = vmul.f32 %v1665, %v229
      %v1687 = vsel %vm242, %v1686, 0.0
      %v1688 = vrot.slane %v1687, 4
      %v1689 = vadd.f32 %v1687, %v1688
      %v1690 = vrot.slane %v1689, 2
      %v1691 = vadd.f32 %v1689, %v1690
      %v1692 = vrot.slane %v1691, 1
      %v1693 = vadd.f32 %v1691, %v1692
      %v1694 = vmul.f32 %v1693, %v1663
      %v1695 = vadd.f32 %v1645, %v1694
      %v1696 = vmul.f32 %v1665, %v232
      %v1697 = vsel %vm242, %v1696, 0.0
      %v1698 = vrot.slane %v1697, 4
      %v1699 = vadd.f32 %v1697, %v1698
      %v1700 = vrot.slane %v1699, 2
      %v1701 = vadd.f32 %v1699, %v1700
      %v1702 = vrot.slane %v1701, 1
      %v1703 = vadd.f32 %v1701, %v1702
      %v1704 = vmul.f32 %v1703, %v1663
      %v1705 = vadd.f32 %v1655, %v1704
      %v1706 = vmul.f32 %v1663, 0.625
      %v1707 = vadd.f32 %v1657, %v1706
      %s1708 = sadd.s32 %s1512, 4
      %s1709 = smul.u32 %s1708, 8
      %s1710 = scalar_lea.vmem %s206, %s1709
      %v1711 = vld [vmem:[%s1710] sm:$0x1f]
      %v1712 = vadd.f32 %v1711, %v220
      %v1713 = vsub.f32 %v1712, %v1662
      %v1714 = vadd.f32 %v1712, %v1662
      %v1715 = vmul.f32 %v1714, 0.5
      %v1716 = vmul.f32 %v1715, %v223
      %v1717 = vsel %vm242, %v1716, 0.0
      %v1718 = vrot.slane %v1717, 4
      %v1719 = vadd.f32 %v1717, %v1718
      %v1720 = vrot.slane %v1719, 2
      %v1721 = vadd.f32 %v1719, %v1720
      %v1722 = vrot.slane %v1721, 1
      %v1723 = vadd.f32 %v1721, %v1722
      %v1724 = vmul.f32 %v1723, %v1713
      %v1725 = vadd.f32 %v1675, %v1724
      %v1726 = vmul.f32 %v1715, %v226
      %v1727 = vsel %vm242, %v1726, 0.0
      %v1728 = vrot.slane %v1727, 4
      %v1729 = vadd.f32 %v1727, %v1728
      %v1730 = vrot.slane %v1729, 2
      %v1731 = vadd.f32 %v1729, %v1730
      %v1732 = vrot.slane %v1731, 1
      %v1733 = vadd.f32 %v1731, %v1732
      %v1734 = vmul.f32 %v1733, %v1713
      %v1735 = vadd.f32 %v1685, %v1734
      %v1736 = vmul.f32 %v1715, %v229
      %v1737 = vsel %vm242, %v1736, 0.0
      %v1738 = vrot.slane %v1737, 4
      %v1739 = vadd.f32 %v1737, %v1738
      %v1740 = vrot.slane %v1739, 2
      %v1741 = vadd.f32 %v1739, %v1740
      %v1742 = vrot.slane %v1741, 1
      %v1743 = vadd.f32 %v1741, %v1742
      %v1744 = vmul.f32 %v1743, %v1713
      %v1745 = vadd.f32 %v1695, %v1744
      %v1746 = vmul.f32 %v1715, %v232
      %v1747 = vsel %vm242, %v1746, 0.0
      %v1748 = vrot.slane %v1747, 4
      %v1749 = vadd.f32 %v1747, %v1748
      %v1750 = vrot.slane %v1749, 2
      %v1751 = vadd.f32 %v1749, %v1750
      %v1752 = vrot.slane %v1751, 1
      %v1753 = vadd.f32 %v1751, %v1752
      %v1754 = vmul.f32 %v1753, %v1713
      %v1755 = vadd.f32 %v1705, %v1754
      %v1756 = vmul.f32 %v1713, 0.875
      %v1757 = vadd.f32 %v1707, %v1756
      %v1758 = vld [vmem:[%s1] sm:$0xff]
      %v1759 = vld [vmem:[%s2] sm:$0xff]
      %v1761 = vsel %vm487, %v1759, 0
      %v1764 = vsel %vm242, %v1725, 0
      %1766 = vmatpush.msra.mxu0 0.0
      %1767 = vmatpush.msra.mxu0 0.0
      %1768 = vmatpush.msra.mxu0 0.0
      %1769 = vmatpush.msra.mxu0 0.0
      %1770 = vmatpush.msra.mxu0 0.0
      %1771 = vmatpush.msra.mxu0 0.0
      %1772 = vmatpush.msra.mxu0 0.0
      %1773 = vmatpush.msra.mxu0 0.0
      %1774 = vmatpush.msra.mxu0 0.0
      %1775 = vmatpush.msra.mxu0 0.0
      %1776 = vmatpush.msra.mxu0 0.0
      %1777 = vmatpush.msra.mxu0 0.0
      %1778 = vmatpush.msra.mxu0 0.0
      %1779 = vmatpush.msra.mxu0 0.0
      %1780 = vmatpush.msra.mxu0 0.0
      %1781 = vmatpush.msra.mxu0 %v1764
      %1782 = vmatmul.f32.gmra.mxu0 %v1761
      %v1783 = vpop.f32.mrf.mxu0
      %v1784 = vadd.f32 0.0, %v1783
      %1785 = vdwg.mxu0
      %v1787 = vsel %vm487, %v1758, 0
      %v1790 = vsel %vm242, %v1712, 0
      %1792 = vmatpush.msra.mxu0 0.0
      %1793 = vmatpush.msra.mxu0 0.0
      %1794 = vmatpush.msra.mxu0 0.0
      %1795 = vmatpush.msra.mxu0 0.0
      %1796 = vmatpush.msra.mxu0 0.0
      %1797 = vmatpush.msra.mxu0 0.0
      %1798 = vmatpush.msra.mxu0 0.0
      %1799 = vmatpush.msra.mxu0 0.0
      %1800 = vmatpush.msra.mxu0 0.0
      %1801 = vmatpush.msra.mxu0 0.0
      %1802 = vmatpush.msra.mxu0 0.0
      %1803 = vmatpush.msra.mxu0 0.0
      %1804 = vmatpush.msra.mxu0 0.0
      %1805 = vmatpush.msra.mxu0 0.0
      %1806 = vmatpush.msra.mxu0 0.0
      %1807 = vmatpush.msra.mxu0 %v1790
      %1808 = vmatmul.f32.gmra.mxu0 %v1787
      %v1809 = vpop.f32.mrf.mxu0
      %v1810 = vadd.f32 %v1784, %v1809
      %1811 = vdwg.mxu0
      %v1812 = vld [vmem:[%s540] sm:$0xff]
      %v1814 = vsel %vm487, %v1812, 0
      %v1817 = vsel %vm242, %v1735, 0
      %1819 = vmatpush.msra.mxu0 0.0
      %1820 = vmatpush.msra.mxu0 0.0
      %1821 = vmatpush.msra.mxu0 0.0
      %1822 = vmatpush.msra.mxu0 0.0
      %1823 = vmatpush.msra.mxu0 0.0
      %1824 = vmatpush.msra.mxu0 0.0
      %1825 = vmatpush.msra.mxu0 0.0
      %1826 = vmatpush.msra.mxu0 0.0
      %1827 = vmatpush.msra.mxu0 0.0
      %1828 = vmatpush.msra.mxu0 0.0
      %1829 = vmatpush.msra.mxu0 0.0
      %1830 = vmatpush.msra.mxu0 0.0
      %1831 = vmatpush.msra.mxu0 0.0
      %1832 = vmatpush.msra.mxu0 0.0
      %1833 = vmatpush.msra.mxu0 0.0
      %1834 = vmatpush.msra.mxu0 %v1817
      %1835 = vmatmul.f32.gmra.mxu0 %v1814
      %v1836 = vpop.f32.mrf.mxu0
      %v1837 = vadd.f32 0.0, %v1836
      %1838 = vdwg.mxu0
      %v1839 = vadd.f32 %v1810, %v1837
      %v1840 = vld [vmem:[%s569] sm:$0xff]
      %v1842 = vsel %vm487, %v1840, 0
      %v1845 = vsel %vm242, %v1745, 0
      %1847 = vmatpush.msra.mxu0 0.0
      %1848 = vmatpush.msra.mxu0 0.0
      %1849 = vmatpush.msra.mxu0 0.0
      %1850 = vmatpush.msra.mxu0 0.0
      %1851 = vmatpush.msra.mxu0 0.0
      %1852 = vmatpush.msra.mxu0 0.0
      %1853 = vmatpush.msra.mxu0 0.0
      %1854 = vmatpush.msra.mxu0 0.0
      %1855 = vmatpush.msra.mxu0 0.0
      %1856 = vmatpush.msra.mxu0 0.0
      %1857 = vmatpush.msra.mxu0 0.0
      %1858 = vmatpush.msra.mxu0 0.0
      %1859 = vmatpush.msra.mxu0 0.0
      %1860 = vmatpush.msra.mxu0 0.0
      %1861 = vmatpush.msra.mxu0 0.0
      %1862 = vmatpush.msra.mxu0 %v1845
      %1863 = vmatmul.f32.gmra.mxu0 %v1842
      %v1864 = vpop.f32.mrf.mxu0
      %v1865 = vadd.f32 0.0, %v1864
      %1866 = vdwg.mxu0
      %v1867 = vadd.f32 %v1839, %v1865
      %v1868 = vld [vmem:[%s598] sm:$0xff]
      %v1870 = vsel %vm487, %v1868, 0
      %v1873 = vsel %vm242, %v1755, 0
      %1875 = vmatpush.msra.mxu0 0.0
      %1876 = vmatpush.msra.mxu0 0.0
      %1877 = vmatpush.msra.mxu0 0.0
      %1878 = vmatpush.msra.mxu0 0.0
      %1879 = vmatpush.msra.mxu0 0.0
      %1880 = vmatpush.msra.mxu0 0.0
      %1881 = vmatpush.msra.mxu0 0.0
      %1882 = vmatpush.msra.mxu0 0.0
      %1883 = vmatpush.msra.mxu0 0.0
      %1884 = vmatpush.msra.mxu0 0.0
      %1885 = vmatpush.msra.mxu0 0.0
      %1886 = vmatpush.msra.mxu0 0.0
      %1887 = vmatpush.msra.mxu0 0.0
      %1888 = vmatpush.msra.mxu0 0.0
      %1889 = vmatpush.msra.mxu0 0.0
      %1890 = vmatpush.msra.mxu0 %v1873
      %1891 = vmatmul.f32.gmra.mxu0 %v1870
      %v1892 = vpop.f32.mrf.mxu0
      %v1893 = vadd.f32 0.0, %v1892
      %1894 = vdwg.mxu0
      %v1895 = vadd.f32 %v1867, %v1893
      %v1896 = vld [vmem:[%s627] sm:$0xff]
      %v1898 = vsel %vm487, %v1896, 0
      %v1901 = vsel %vm242, %v1757, 0
      %1903 = vmatpush.msra.mxu0 0.0
      %1904 = vmatpush.msra.mxu0 0.0
      %1905 = vmatpush.msra.mxu0 0.0
      %1906 = vmatpush.msra.mxu0 0.0
      %1907 = vmatpush.msra.mxu0 0.0
      %1908 = vmatpush.msra.mxu0 0.0
      %1909 = vmatpush.msra.mxu0 0.0
      %1910 = vmatpush.msra.mxu0 0.0
      %1911 = vmatpush.msra.mxu0 0.0
      %1912 = vmatpush.msra.mxu0 0.0
      %1913 = vmatpush.msra.mxu0 0.0
      %1914 = vmatpush.msra.mxu0 0.0
      %1915 = vmatpush.msra.mxu0 0.0
      %1916 = vmatpush.msra.mxu0 0.0
      %1917 = vmatpush.msra.mxu0 0.0
      %1918 = vmatpush.msra.mxu0 %v1901
      %1919 = vmatmul.f32.gmra.mxu0 %v1898
      %v1920 = vpop.f32.mrf.mxu0
      %v1921 = vadd.f32 0.0, %v1920
      %1922 = vdwg.mxu0
      %v1923 = vadd.f32 %v1895, %v1921
      %v1924 = vld [vmem:[%s3] sm:$0xff]
      %1926 = vset.pattern.permute.xlu0 0
      %1927 = vperm.xlu0 %1926, %v1924
      %v1928 = vpop.permute.xlu0 %1927
      %v1930 = vadd.f32 %v1923, %v1928
      %s1931 = scalar_lea.vmem %s214, 24
      %1932 = vst [vmem:[%s1931] sm:$0xff] %v1930
      %s1933 = smul.u32 4, %s20
      %p1934 = scmp.lt.s32.totalorder %s1933, 7
      %s1935 = scalar_select %p1934, %s1933, 7
      %p1936 = scmp.lt.s32.totalorder %s19, 0
      %s1937 = scalar_select %p1936, %s19, 0
      %s1938 = sadd.s32 %s1937, %s1935
      %s1939 = smul.addr %s1938, 8
      %s1940 = scalar_lea.vmem %s4, %s1939
      // Predicated region
      $region37: #{sig_module_forward.1} parent=35 // pred_check
        %p1941 = pneg %p136
      $region38: #{sig_module_forward.1} parent=35 // pred_check_branch
        %1943 = sbr.rel (%p1941) target = $region40
      $region39: #{sig_module_forward.1} parent=35 // pred_region
        %s1944 = smul.u32 4, %s20
      $region40: #{sig_module_forward.1} parent=35 // pred_fallthru
        _
    $region36: #{sig_module_forward.1} parent=5 // pred_fallthru
      _
    %p1945 = scmp.le.s32.totalorder 2, %s10
    // Predicated region
    $region41: #{sig_module_forward.1} parent=5 // pred_check
      %p1946 = pneg %p1945
    $region42: #{sig_module_forward.1} parent=5 // pred_check_branch
      %1948 = sbr.rel (%p1946) target = $region44
    $region43: #{sig_module_forward.1} parent=5 // pred_region
      %s1949 = ssub.s32 %s10, 2
      // Predicated region
      $region45: #{sig_module_forward.1} parent=43 // pred_check
        %p1950 = pneg %p142
      $region46: #{sig_module_forward.1} parent=43 // pred_check_branch
        %1952 = sbr.rel (%p1950) target = $region48
      $region47: #{sig_module_forward.1} parent=43 // pred_region
        %s1953 = smul.u32 4, %s22
        %p1954 = scmp.lt.s32.totalorder %s1953, 7
        %s1955 = scalar_select %p1954, %s1953, 7
        %p1956 = scmp.lt.s32.totalorder %s21, 0
        %s1957 = scalar_select %p1956, %s21, 0
        %s1958 = sadd.s32 %s1957, %s1955
        %s1959 = smul.addr %s1958, 8
        %s1960 = scalar_lea.vmem %s4, %s1959
      $region48: #{sig_module_forward.1} parent=43 // pred_fallthru
        _
    $region44: #{sig_module_forward.1} parent=5 // pred_fallthru
      _
  $region6: #{sig_module_forward.1} parent=0 // loop_footer
    %s14 = sadd.s32 1, %s10
  $region7: #{sig_module_forward.1} parent=0 // loop_footer_branch
    %9 = sbr.rel target = $region3
  $region8: #{sig_module_forward.1} parent=0 // loop_exit
    _

</llo_original>
